<compile_context>
chip_gen: v7x
topology: tpu7x:2x2x1
jax: 0.10.0
libtpu: 0.0.40
codegen_flags: <defaults>
</compile_context>

<pallas_src>
import functools

import jax
import jax.numpy as jnp
from jax.experimental import pallas as pl
from jax.experimental.pallas import tpu as pltpu


# --------------------------- hardware-derived knobs ---------------------------

def _detect_vmem_capacity_bytes():
    try:
        info = pltpu.get_tpu_info()
        cap = getattr(info, "vmem_capacity_bytes", None)
        if cap:
            return int(cap)
    except Exception:
        pass
    return 64 * 1024 * 1024          # conservative fallback (v7x per-core VMEM)


_VMEM_CAP = _detect_vmem_capacity_bytes()
# ~96 MiB scoped limit on 128-MiB parts (v5e/v6e), ~48 MiB on 64-MiB v7x.
VMEM_LIMIT = int(min((_VMEM_CAP * 3) // 4, 100 * 1024 * 1024))
# Bigger row tiles amortize the ~0.35us/grid-step overhead on 128-MiB parts.
ROW_TILE = 512 if _VMEM_CAP >= 100 * 1024 * 1024 else 256

_WEIGHT_PIPELINE_MODE = None          # set by _init_weight_pipeline_mode()


def _init_weight_pipeline_mode():
    """Probe once whether single-buffered weight blocks (pl.Buffered(1)) work."""
    global _WEIGHT_PIPELINE_MODE
    try:
        mode = pl.Buffered(1)

        def _probe_kernel(x_ref, w_ref, o_ref):
            o_ref[...] = x_ref[...] + w_ref[...]

        f = pl.pallas_call(
            _probe_kernel,
            out_shape=jax.ShapeDtypeStruct((8, 128), jnp.float32),
            grid=(1,),
            in_specs=[
                pl.BlockSpec((8, 128), lambda i: (0, 0)),
                pl.BlockSpec((8, 128), lambda i: (0, 0), pipeline_mode=mode),
            ],
            out_specs=pl.BlockSpec((8, 128), lambda i: (0, 0)),
        )
        jax.block_until_ready(f(jnp.zeros((8, 128), jnp.float32),
                                jnp.ones((8, 128), jnp.float32)))
        _WEIGHT_PIPELINE_MODE = mode
    except Exception:
        _WEIGHT_PIPELINE_MODE = None


def _const_spec(shape):
    """BlockSpec for a grid-constant 2-D operand (weights/bias/LN params/gamma)."""
    if _WEIGHT_PIPELINE_MODE is not None:
        return pl.BlockSpec(shape, lambda i: (0, 0),
                            pipeline_mode=_WEIGHT_PIPELINE_MODE)
    return pl.BlockSpec(shape, lambda i: (0, 0))


def _compiler_params(n_parallel_axes):
    return pltpu.CompilerParams(
        dimension_semantics=("parallel",) * n_parallel_axes,
        vmem_limit_bytes=VMEM_LIMIT)


def _row_tile(M):
    # Full slab when it already fits; otherwise a multiple-of-8 tile
    # (Pallas masks the partial last block).
    return M if M <= ROW_TILE else ROW_TILE


# ----------------------------- patch-embed linear ----------------------------

def _linear_kernel(x_ref, w_ref, b_ref, o_ref):
    y = jnp.dot(x_ref[...].astype(jnp.bfloat16), w_ref[...],
                preferred_element_type=jnp.float32) + b_ref[...]
    o_ref[...] = y.astype(o_ref.dtype)


def pallas_linear(x2d, w, b):
    """x2d: [M, K] f32, w: [K, N] bf16, b: [1, N] f32 -> [M, N] f32."""
    M, K = x2d.shape
    N = w.shape[1]
    tm = _row_tile(M)
    return pl.pallas_call(
        _linear_kernel,
        out_shape=jax.ShapeDtypeStruct((M, N), jnp.float32),
        grid=(pl.cdiv(M, tm),),
        in_specs=[
            pl.BlockSpec((tm, K), lambda i: (i, 0)),
            _const_spec((K, N)),
            _const_spec((1, N)),
        ],
        out_specs=pl.BlockSpec((tm, N), lambda i: (i, 0)),
        compiler_params=_compiler_params(1),
        cost_estimate=pl.CostEstimate(
            flops=int(2 * M * K * N), transcendentals=0,
            bytes_accessed=int(4 * (M * K + M * N) + 2 * K * N)),
    )(x2d, w, b)


# --------------------------------- LayerNorm ----------------------------------

def _layernorm_kernel(x_ref, g_ref, b_ref, o_ref, *, eps):
    x = x_ref[...].astype(jnp.float32)
    mu = jnp.mean(x, axis=-1, keepdims=True)
    xc = x - mu
    var = jnp.mean(xc * xc, axis=-1, keepdims=True)
    o_ref[...] = ((xc * jax.lax.rsqrt(var + eps)) * g_ref[...] + b_ref[...]
                  ).astype(o_ref.dtype)


def pallas_layernorm(x2d, gamma2d, beta2d, eps=1e-12):
    """Row LayerNorm (any input dtype) -> f32 out."""
    M, D = x2d.shape
    tm = _row_tile(M)
    return pl.pallas_call(
        functools.partial(_layernorm_kernel, eps=eps),
        out_shape=jax.ShapeDtypeStruct((M, D), jnp.float32),
        grid=(pl.cdiv(M, tm),),
        in_specs=[
            pl.BlockSpec((tm, D), lambda i: (i, 0)),
            _const_spec((1, D)),
            _const_spec((1, D)),
        ],
        out_specs=pl.BlockSpec((tm, D), lambda i: (i, 0)),
        compiler_params=_compiler_params(1),
    )(x2d, gamma2d, beta2d)


# --------------------- fused attention sub-block kernel -----------------------

def _attn_block_kernel(xt_ref, xi_ref, bias_ref, g_ref, b_ref, qkvw_ref,
                       qkvb_ref, projw_ref, projb_ref, gamma_ref,
                       ot_ref, oi_ref, attn_ref, *, st, nh, dh, scale, eps):
    # residual (bf16 in HBM) upcast to f32; text rows then image rows
    x = jnp.concatenate([xt_ref[...].astype(jnp.float32),
                         xi_ref[...].astype(jnp.float32)], axis=0)      # (S, D)
    # ---- LayerNorm1 (f32) ----
    mu = jnp.mean(x, axis=-1, keepdims=True)
    xc = x - mu
    var = jnp.mean(xc * xc, axis=-1, keepdims=True)
    xn = (xc * jax.lax.rsqrt(var + eps)) * g_ref[...] + b_ref[...]
    # ---- fused QKV projection (bf16 MXU, f32 accum), single bf16 cast ----
    qkv = jnp.dot(xn.astype(jnp.bfloat16), qkvw_ref[...],
                  preferred_element_type=jnp.float32) + qkvb_ref[...]   # (S, 3D)
    qkv = qkv.astype(jnp.bfloat16)
    D = nh * dh
    bias = bias_ref[...]                                                # (1, S)
    # Per-head scores/softmax/PV; each head's context goes straight into the
    # bf16 scratch slab (no list concat, no per-head re-cast, short live ranges).
    for h in range(nh):                                                 # static unroll
        qh = qkv[:, h * dh:(h + 1) * dh]
        kh = qkv[:, D + h * dh:D + (h + 1) * dh]
        vh = qkv[:, 2 * D + h * dh:2 * D + (h + 1) * dh]
        s = jax.lax.dot_general(qh, kh, (((1,), (1,)), ((), ())),
                                preferred_element_type=jnp.float32) * scale
        s = s + bias                                                    # (S, S)
        s = s - jnp.max(s, axis=-1, keepdims=True)                      # f32 softmax
        p = jnp.exp(s)
        p = p * pl.reciprocal(jnp.sum(p, axis=-1, keepdims=True), approx=True)
        ctx = jnp.dot(p.astype(jnp.bfloat16), vh,
                      preferred_element_type=jnp.float32)               # (S, dh)
        attn_ref[:, h * dh:(h + 1) * dh] = ctx.astype(jnp.bfloat16)
    # ---- output projection + gamma_1 layer-scale + residual (fused) ----
    y = jnp.dot(attn_ref[...], projw_ref[...],
                preferred_element_type=jnp.float32) + projb_ref[...]
    out = x + gamma_ref[...] * y
    ot_ref[...] = out[:st].astype(ot_ref.dtype)
    oi_ref[...] = out[st:].astype(oi_ref.dtype)


def pallas_attention_block(x_txt, x_img, attn_bias, blk, nh, eps=1e-12):
    """Fused LN1 + QKV + MHA + proj + gamma_1 + residual; one grid step per batch.

    x_txt: [B, St, D] bf16, x_img: [B, Si, D] bf16, attn_bias: [B, 1, St+Si] f32.
    Returns the updated (text, image) residual streams in bf16.
    """
    B, St, D = x_txt.shape
    Si = x_img.shape[1]
    S = St + Si
    dh = D // nh
    flops = B * (2 * S * D * 3 * D + 4 * S * S * D + 2 * S * D * D)
    return pl.pallas_call(
        functools.partial(_attn_block_kernel, st=St, nh=nh, dh=dh,
                          scale=dh ** -0.5, eps=eps),
        out_shape=(jax.ShapeDtypeStruct((B, St, D), jnp.bfloat16),
                   jax.ShapeDtypeStruct((B, Si, D), jnp.bfloat16)),
        grid=(B,),
        in_specs=[
            pl.BlockSpec((None, St, D), lambda b: (b, 0, 0)),   # text residual rows
            pl.BlockSpec((None, Si, D), lambda b: (b, 0, 0)),   # image residual rows
            pl.BlockSpec((None, 1, S), lambda b: (b, 0, 0)),    # additive key bias
            _const_spec((1, D)),                                # ln1 gamma
            _const_spec((1, D)),                                # ln1 beta
            _const_spec((D, 3 * D)),                            # qkv_w (bf16)
            _const_spec((1, 3 * D)),                            # qkv_b
            _const_spec((D, D)),                                # proj_w (bf16)
            _const_spec((1, D)),                                # proj_b
            _const_spec((1, D)),                                # gamma_1
        ],
        out_specs=(pl.BlockSpec((None, St, D), lambda b: (b, 0, 0)),
                   pl.BlockSpec((None, Si, D), lambda b: (b, 0, 0))),
        scratch_shapes=[pltpu.VMEM((S, D), jnp.bfloat16)],
        compiler_params=_compiler_params(1),
        cost_estimate=pl.CostEstimate(
            flops=int(flops),
            transcendentals=int(B * nh * S * S),
            bytes_accessed=int(2 * 2 * B * S * D + 2 * 4 * D * D + 4 * B * S)),
    )(x_txt, x_img, attn_bias, blk["norm1_g"], blk["norm1_b"],
      blk["qkv_w"], blk["qkv_b"], blk["proj_w"], blk["proj_b"], blk["gamma_1"])


# ------------------------ fused MLP sub-block kernel --------------------------

def _mlp_block_kernel(x_ref, g_ref, b_ref, w1_ref, b1_ref, w2_ref, b2_ref,
                      gamma_ref, o_ref, *, eps):
    x = x_ref[...].astype(jnp.float32)                        # (tm, D) residual
    mu = jnp.mean(x, axis=-1, keepdims=True)
    xc = x - mu
    var = jnp.mean(xc * xc, axis=-1, keepdims=True)
    xn = (xc * jax.lax.rsqrt(var + eps)) * g_ref[...] + b_ref[...]
    h = jnp.dot(xn.astype(jnp.bfloat16), w1_ref[...],
                preferred_element_type=jnp.float32) + b1_ref[...]
    # TODO(synk): PyTorch nn.GELU default is exact erf-GELU; tanh approx used.
    h = jax.nn.gelu(h, approximate=True)
    y = jnp.dot(h.astype(jnp.bfloat16), w2_ref[...],
                preferred_element_type=jnp.float32) + b2_ref[...]
    o_ref[...] = (x + gamma_ref[...] * y).astype(o_ref.dtype)


def pallas_mlp_block(x2d, ln_g, ln_b, mp, gamma2, eps=1e-12):
    """Fused LN2 + fc1 + GELU + fc2 + gamma_2 + residual on bf16 [M, D] rows."""
    M, D = x2d.shape
    Hm = mp["fc1_w"].shape[1]
    tm = _row_tile(M)
    return pl.pallas_call(
        functools.partial(_mlp_block_kernel, eps=eps),
        out_shape=jax.ShapeDtypeStruct((M, D), jnp.bfloat16),
        grid=(pl.cdiv(M, tm),),
        in_specs=[
            pl.BlockSpec((tm, D), lambda i: (i, 0)),           # residual rows (bf16)
            _const_spec((1, D)),                               # ln2 gamma
            _const_spec((1, D)),                               # ln2 beta
            _const_spec((D, Hm)),                              # fc1_w (bf16)
            _const_spec((1, Hm)),                              # fc1_b
            _const_spec((Hm, D)),                              # fc2_w (bf16)
            _const_spec((1, D)),                               # fc2_b
            _const_spec((1, D)),                               # gamma_2
        ],
        out_specs=pl.BlockSpec((tm, D), lambda i: (i, 0)),
        compiler_params=_compiler_params(1),
        cost_estimate=pl.CostEstimate(
            flops=int(4 * M * D * Hm),
            transcendentals=int(M * Hm),
            bytes_accessed=int(2 * 2 * M * D + 2 * 2 * D * Hm)),
    )(x2d, ln_g, ln_b, mp["fc1_w"], mp["fc1_b"], mp["fc2_w"], mp["fc2_b"], gamma2)


# ---------------------- fused final-LN + pooler kernel ------------------------

def _pooler_kernel(x_ref, g_ref, b_ref, w_ref, pb_ref, o_ref, *, eps):
    x = x_ref[...].astype(jnp.float32)                        # (tb, D) pre-LN cls rows
    mu = jnp.mean(x, axis=-1, keepdims=True)
    xc = x - mu
    var = jnp.mean(xc * xc, axis=-1, keepdims=True)
    xn = (xc * jax.lax.rsqrt(var + eps)) * g_ref[...] + b_ref[...]
    y = jnp.dot(xn.astype(jnp.bfloat16), w_ref[...],
                preferred_element_type=jnp.float32) + pb_ref[...]
    o_ref[...] = jnp.tanh(y)


def pallas_pooler(x_cls, ln_g, ln_b, w, b, eps=1e-12):
    """Fused final-LayerNorm + pooler (Linear + tanh) on the pre-LN cls rows."""
    B, D = x_cls.shape
    tb = _row_tile(B)
    return pl.pallas_call(
        functools.partial(_pooler_kernel, eps=eps),
        out_shape=jax.ShapeDtypeStruct((B, D), jnp.float32),
        grid=(pl.cdiv(B, tb),),
        in_specs=[
            pl.BlockSpec((tb, D), lambda i: (i, 0)),
            _const_spec((1, D)),
            _const_spec((1, D)),
            _const_spec((D, D)),
            _const_spec((1, D)),
        ],
        out_specs=pl.BlockSpec((tb, D), lambda i: (i, 0)),
        compiler_params=_compiler_params(1),
    )(x_cls, ln_g, ln_b, w, b)


# -------------------------------- model config --------------------------------

class Cfg:
    img_size = 16
    patch_size = 8
    in_chans = 3
    embed_dim = 32
    depth = 2
    num_heads = 4
    mlp_ratio = 4
    max_text_len = 8
    vocab_size = 64
    fusion_layer = 1       # blocks[:fusion_layer] use separate v/l MLPs, rest use vl
    init_values = 0.1


# -------------------------------- param init ----------------------------------

def init_params(key, cfg):
    D = cfg.embed_dim
    Hm = int(D * cfg.mlp_ratio)
    p = cfg.patch_size
    C = cfg.in_chans
    n_patch = (cfg.img_size // p) ** 2
    keys = iter(jax.random.split(key, 256))

    def nrm(shape, std=0.02, dtype=jnp.float32):
        return (std * jax.random.normal(next(keys), shape)).astype(dtype)

    def w_mat(shape):                      # matmul weights stored bf16 ONCE at init
        return nrm(shape, dtype=jnp.bfloat16)

    def zeros(shape):
        return jnp.zeros(shape, jnp.float32)

    def ones(shape):
        return jnp.ones(shape, jnp.float32)

    def mlp_params():
        return {"fc1_w": w_mat((D, Hm)), "fc1_b": zeros((1, Hm)),
                "fc2_w": w_mat((Hm, D)), "fc2_b": zeros((1, D))}

    params = {
        "patch_w": w_mat((C * p * p, D)), "patch_b": zeros((1, D)),
        "cls_token": nrm((1, 1, D)),
        "pos_embed": nrm((1, n_patch + 1, D)),
        "token_type": nrm((2, D)),                    # 0 = text, 1 = image
        "word_emb": nrm((cfg.vocab_size, D)),
        "txt_pos_emb": nrm((cfg.max_text_len, D)),
        "txt_ln_g": ones((1, D)), "txt_ln_b": zeros((1, D)),
        "norm_g": ones((1, D)), "norm_b": zeros((1, D)),
        "pool_w": w_mat((D, D)), "pool_b": zeros((1, D)),
        "blocks": [],
    }
    for li in range(cfg.depth):
        blk = {
            "norm1_g": ones((1, D)), "norm1_b": zeros((1, D)),
            "qkv_w": w_mat((D, 3 * D)), "qkv_b": zeros((1, 3 * D)),
            "proj_w": w_mat((D, D)), "proj_b": zeros((1, D)),
            "norm2_g": ones((1, D)), "norm2_b": zeros((1, D)),
            "gamma_1": cfg.init_values * ones((1, D)),
            "gamma_2": cfg.init_values * ones((1, D)),
            "mlp_v": mlp_params(),
            "mlp_l": mlp_params(),
        }
        if li >= cfg.fusion_layer:
            blk["mlp_vl"] = mlp_params()
        params["blocks"].append(blk)
    return params


# ---------------------------------- forward -----------------------------------

def vlmo_forward(params, img, txt_ids, txt_mask, cfg):
    """VlmoModule.infer(img-txt) forward: returns txt/img/co/cls features."""
    B = img.shape[0]
    D = cfg.embed_dim
    p = cfg.patch_size
    C = cfg.in_chans
    Hp = Wp = cfg.img_size // p
    n_patch = Hp * Wp
    St = cfg.max_text_len
    Si = n_patch + 1
    S = St + Si
    nh = cfg.num_heads

    # ---- image path: Conv2d(patch stride) == patchify + fused linear kernel ----
    patches = img.reshape(B, C, Hp, p, Wp, p).transpose(0, 2, 4, 1, 3, 5)
    patches = patches.reshape(B * n_patch, C * p * p)
    x_patch = pallas_linear(patches, params["patch_w"], params["patch_b"])
    x_patch = x_patch.reshape(B, n_patch, D)
    cls = jnp.broadcast_to(params["cls_token"], (B, 1, D))
    img_tok = jnp.concatenate([cls, x_patch], axis=1) + params["pos_embed"]
    img_tok = img_tok + params["token_type"][1][None, None, :]

    # ---- text path: word + position embeddings, LayerNorm, token type ---------
    txt_tok = jnp.take(params["word_emb"], txt_ids, axis=0)
    txt_tok = txt_tok + params["txt_pos_emb"][None]
    txt_tok = pallas_layernorm(txt_tok.reshape(B * St, D),
                               params["txt_ln_g"], params["txt_ln_b"])
    txt_tok = txt_tok.reshape(B, St, D) + params["token_type"][0][None, None, :]

    # ---- bf16 residual streams, kept split (text rows / image rows) -----------
    x_txt = txt_tok.astype(jnp.bfloat16)          # [B, St, D]
    x_img = img_tok.astype(jnp.bfloat16)          # [B, Si, D]

    # additive attention bias, computed once per forward (text mask ++ ones)
    img_attn_mask = jnp.ones((B, Si), jnp.float32)        # def_attn_masks in infer()
    co_mask = jnp.concatenate([txt_mask.astype(jnp.float32), img_attn_mask], axis=1)
    attn_bias = ((1.0 - co_mask) * (-1e9)).reshape(B, 1, S)

    for li, blk in enumerate(params["blocks"]):
        # fused: LN1 + QKV + MHA + proj + gamma_1 + residual (one call, grid over B)
        x_txt, x_img = pallas_attention_block(x_txt, x_img, attn_bias, blk, nh)
        # fused multiway MLP: LN2 + fc1 + GELU + fc2 + gamma_2 + residual;
        # split residual streams -> no XLA-side slice/concat for expert routing.
        if li < cfg.fusion_layer:
            mlp_txt, mlp_img = blk["mlp_l"], blk["mlp_v"]
        else:
            mlp_txt = mlp_img = blk["mlp_vl"]
        x_txt = pallas_mlp_block(x_txt.reshape(B * St, D), blk["norm2_g"],
                                 blk["norm2_b"], mlp_txt, blk["gamma_2"]
                                 ).reshape(B, St, D)
        x_img = pallas_mlp_block(x_img.reshape(B * Si, D), blk["norm2_g"],
                                 blk["norm2_b"], mlp_img, blk["gamma_2"]
                                 ).reshape(B, Si, D)

    # final LayerNorm (f32 out) + single concat to build co_feats
    co_txt = pallas_layernorm(x_txt.reshape(B * St, D),
                              params["norm_g"], params["norm_b"]).reshape(B, St, D)
    co_img = pallas_layernorm(x_img.reshape(B * Si, D),
                              params["norm_g"], params["norm_b"]).reshape(B, Si, D)
    co = jnp.concatenate([co_txt, co_img], axis=1)

    # pooler: fused final-LN + Linear + tanh on the pre-LN first text token
    cls_feats = pallas_pooler(x_txt[:, 0], params["norm_g"], params["norm_b"],
                              params["pool_w"], params["pool_b"])
    return {
        "txt_feats": co_txt,
        "img_feats": co_img,
        "co_feats": co,
        "cls_feats": cls_feats,
    }


# ------------------------------------ main -------------------------------------

if __name__ == "__main__":
    _init_weight_pipeline_mode()      # probe single-buffered weight-block support

    cfg = Cfg()
    key = jax.random.PRNGKey(0)
    kp, ki, kt = jax.random.split(key, 3)
    params = init_params(kp, cfg)

    B = 2
    img = jax.random.normal(ki, (B, cfg.in_chans, cfg.img_size, cfg.img_size),
                            jnp.float32)                              # NCHW
    txt_ids = jax.random.randint(kt, (B, cfg.max_text_len), 0, cfg.vocab_size)
    txt_mask = jnp.ones((B, cfg.max_text_len), jnp.int32).at[1, 6:].set(0)

    fwd = jax.jit(functools.partial(vlmo_forward, cfg=cfg))
    out = fwd(params, img, txt_ids, txt_mask)
    jax.block_until_ready(out)
    print("KERNEL_OK")
</pallas_src>

<mosaic_0001>
module attributes {stable_mosaic.version = 11 : i64} {
  func.func @_probe_kernel(%arg0: i32, %arg1: memref<8x128xf32, #tpu.memory_space<vmem>>, %arg2: memref<8x128xf32, #tpu.memory_space<vmem>>, %arg3: memref<8x128xf32, #tpu.memory_space<vmem>>) attributes {dimension_semantics = [#tpu.dimension_semantics<arbitrary>], iteration_bounds = array<i64: 1>, scalar_prefetch = 0 : i64, scratch_operands = 0 : i64, tpu.core_type = #tpu.core_type<tc>, window_params = [{pipeline_mode = #tpu.pipeline_mode<synchronous>, transform_indices = @transform_0, window_bounds = array<i64: 8, 128>}, {pipeline_mode = #tpu.pipeline_mode<synchronous>, transform_indices = @transform_1, window_bounds = array<i64: 8, 128>}, {pipeline_mode = #tpu.pipeline_mode<synchronous>, transform_indices = @transform_2, window_bounds = array<i64: 8, 128>}]} {
    %c0 = arith.constant 0 : index
    %c0_0 = arith.constant 0 : index
    %0 = vector.load %arg1[%c0, %c0_0] : memref<8x128xf32, #tpu.memory_space<vmem>>, vector<8x128xf32>
    %c0_1 = arith.constant 0 : index
    %c0_2 = arith.constant 0 : index
    %1 = vector.load %arg2[%c0_1, %c0_2] : memref<8x128xf32, #tpu.memory_space<vmem>>, vector<8x128xf32>
    %2 = arith.addf %0, %1 : vector<8x128xf32>
    %c0_3 = arith.constant 0 : index
    %c0_4 = arith.constant 0 : index
    %3 = vector.load %arg3[%c0_3, %c0_4] : memref<8x128xf32, #tpu.memory_space<vmem>>, vector<8x128xf32>
    tpu.vector_store %arg3[%c0_3, %c0_4], %2 {strides = array<i32>} : memref<8x128xf32, #tpu.memory_space<vmem>>, vector<8x128xf32>,
    return
  }
  func.func @transform_0(%arg0: i32) -> (i32, i32) {
    %c0_i32 = arith.constant 0 : i32
    %c0_i32_0 = arith.constant 0 : i32
    %c0_i32_1 = arith.constant 0 : i32
    return %c0_i32, %c0_i32_0 : i32, i32
  }
  func.func @transform_1(%arg0: i32) -> (i32, i32) {
    %c0_i32 = arith.constant 0 : i32
    %c0_i32_0 = arith.constant 0 : i32
    %c0_i32_1 = arith.constant 0 : i32
    return %c0_i32, %c0_i32_0 : i32, i32
  }
  func.func @transform_2(%arg0: i32) -> (i32, i32) {
    %c0_i32 = arith.constant 0 : i32
    %c0_i32_0 = arith.constant 0 : i32
    %c0_i32_1 = arith.constant 0 : i32
    return %c0_i32, %c0_i32_0 : i32, i32
  }
}

module attributes {stable_mosaic.version = 11 : i64} {
  func.func @_linear_kernel(%arg0: i32, %arg1: memref<8x192xf32, #tpu.memory_space<vmem>>, %arg2: memref<192x32xbf16, #tpu.memory_space<vmem>>, %arg3: memref<1x32xf32, #tpu.memory_space<vmem>>, %arg4: memref<8x32xf32, #tpu.memory_space<vmem>>) attributes {dimension_semantics = [#tpu.dimension_semantics<parallel>], iteration_bounds = array<i64: 1>, scalar_prefetch = 0 : i64, scratch_operands = 0 : i64, tpu.core_type = #tpu.core_type<tc>, window_params = [{transform_indices = @transform_0, window_bounds = array<i64: 8, 192>}, {pipeline_mode = #tpu.pipeline_mode<synchronous>, transform_indices = @transform_1, window_bounds = array<i64: 192, 32>}, {pipeline_mode = #tpu.pipeline_mode<synchronous>, transform_indices = @transform_2, window_bounds = array<i64: 1, 32>}, {transform_indices = @transform_3, window_bounds = array<i64: 8, 32>}]} {
    %c0 = arith.constant 0 : index
    %c0_0 = arith.constant 0 : index
    %0 = vector.load %arg1[%c0, %c0_0] : memref<8x192xf32, #tpu.memory_space<vmem>>, vector<8x192xf32>
    %1 = arith.truncf %0 : vector<8x192xf32> to vector<8x192xbf16>
    %c0_1 = arith.constant 0 : index
    %c0_2 = arith.constant 0 : index
    %2 = vector.load %arg2[%c0_1, %c0_2] : memref<192x32xbf16, #tpu.memory_space<vmem>>, vector<192x32xbf16>
    %cst = arith.constant dense<0.000000e+00> : vector<8x32xf32>
    %3 = tpu.matmul %1, %2, %cst {dimension_numbers = #tpu.dot_dimension_numbers<[1], [0], [0], [1], [0, 0, 1, 1], [], []>} : vector<8x192xbf16>, vector<192x32xbf16>, vector<8x32xf32> -> vector<8x32xf32>
    %c0_3 = arith.constant 0 : index
    %c0_4 = arith.constant 0 : index
    %4 = vector.load %arg3[%c0_3, %c0_4] : memref<1x32xf32, #tpu.memory_space<vmem>>, vector<1x32xf32>
    %5 = vector.broadcast %4 : vector<1x32xf32> to vector<8x32xf32>
    %6 = arith.addf %3, %5 : vector<8x32xf32>
    %c0_5 = arith.constant 0 : index
    %c0_6 = arith.constant 0 : index
    %7 = vector.load %arg4[%c0_5, %c0_6] : memref<8x32xf32, #tpu.memory_space<vmem>>, vector<8x32xf32>
    tpu.vector_store %arg4[%c0_5, %c0_6], %6 {strides = array<i32>} : memref<8x32xf32, #tpu.memory_space<vmem>>, vector<8x32xf32>,
    return
  }
  func.func @transform_0(%arg0: i32) -> (i32, i32) {
    %c0_i32 = arith.constant 0 : i32
    %c0_i32_0 = arith.constant 0 : i32
    return %arg0, %c0_i32 : i32, i32
  }
  func.func @transform_1(%arg0: i32) -> (i32, i32) {
    %c0_i32 = arith.constant 0 : i32
    %c0_i32_0 = arith.constant 0 : i32
    %c0_i32_1 = arith.constant 0 : i32
    return %c0_i32, %c0_i32_0 : i32, i32
  }
  func.func @transform_2(%arg0: i32) -> (i32, i32) {
    %c0_i32 = arith.constant 0 : i32
    %c0_i32_0 = arith.constant 0 : i32
    %c0_i32_1 = arith.constant 0 : i32
    return %c0_i32, %c0_i32_0 : i32, i32
  }
  func.func @transform_3(%arg0: i32) -> (i32, i32) {
    %c0_i32 = arith.constant 0 : i32
    %c0_i32_0 = arith.constant 0 : i32
    return %arg0, %c0_i32 : i32, i32
  }
}

module attributes {stable_mosaic.version = 11 : i64} {
  func.func @_attn_block_kernel(%arg0: i32, %arg1: memref<1x8x32xbf16, #tpu.memory_space<vmem>>, %arg2: memref<1x5x32xbf16, #tpu.memory_space<vmem>>, %arg3: memref<1x1x13xf32, #tpu.memory_space<vmem>>, %arg4: memref<1x32xf32, #tpu.memory_space<vmem>>, %arg5: memref<1x32xf32, #tpu.memory_space<vmem>>, %arg6: memref<32x96xbf16, #tpu.memory_space<vmem>>, %arg7: memref<1x96xf32, #tpu.memory_space<vmem>>, %arg8: memref<32x32xbf16, #tpu.memory_space<vmem>>, %arg9: memref<1x32xf32, #tpu.memory_space<vmem>>, %arg10: memref<1x32xf32, #tpu.memory_space<vmem>>, %arg11: memref<1x8x32xbf16, #tpu.memory_space<vmem>>, %arg12: memref<1x5x32xbf16, #tpu.memory_space<vmem>>, %arg13: memref<13x32xbf16, #tpu.memory_space<vmem>>) attributes {dimension_semantics = [#tpu.dimension_semantics<parallel>], iteration_bounds = array<i64: 2>, scalar_prefetch = 0 : i64, scratch_operands = 1 : i64, tpu.core_type = #tpu.core_type<tc>, window_params = [{transform_indices = @transform_0, window_bounds = array<i64: 1, 8, 32>}, {transform_indices = @transform_1, window_bounds = array<i64: 1, 5, 32>}, {transform_indices = @transform_2, window_bounds = array<i64: 1, 1, 13>}, {pipeline_mode = #tpu.pipeline_mode<synchronous>, transform_indices = @transform_3, window_bounds = array<i64: 1, 32>}, {pipeline_mode = #tpu.pipeline_mode<synchronous>, transform_indices = @transform_4, window_bounds = array<i64: 1, 32>}, {pipeline_mode = #tpu.pipeline_mode<synchronous>, transform_indices = @transform_5, window_bounds = array<i64: 32, 96>}, {pipeline_mode = #tpu.pipeline_mode<synchronous>, transform_indices = @transform_6, window_bounds = array<i64: 1, 96>}, {pipeline_mode = #tpu.pipeline_mode<synchronous>, transform_indices = @transform_7, window_bounds = array<i64: 32, 32>}, {pipeline_mode = #tpu.pipeline_mode<synchronous>, transform_indices = @transform_8, window_bounds = array<i64: 1, 32>}, {pipeline_mode = #tpu.pipeline_mode<synchronous>, transform_indices = @transform_9, window_bounds = array<i64: 1, 32>}, {transform_indices = @transform_10, window_bounds = array<i64: 1, 8, 32>}, {transform_indices = @transform_11, window_bounds = array<i64: 1, 5, 32>}]} {
    %c0 = arith.constant 0 : index
    %c0_0 = arith.constant 0 : index
    %c0_1 = arith.constant 0 : index
    %0 = vector.load %arg1[%c0, %c0_0, %c0_1] : memref<1x8x32xbf16, #tpu.memory_space<vmem>>, vector<1x8x32xbf16>
    %1 = vector.shape_cast %0 : vector<1x8x32xbf16> to vector<8x32xbf16>
    %2 = arith.extf %1 : vector<8x32xbf16> to vector<8x32xf32>
    %c0_2 = arith.constant 0 : index
    %c0_3 = arith.constant 0 : index
    %c0_4 = arith.constant 0 : index
    %3 = vector.load %arg2[%c0_2, %c0_3, %c0_4] : memref<1x5x32xbf16, #tpu.memory_space<vmem>>, vector<1x5x32xbf16>
    %4 = vector.shape_cast %3 : vector<1x5x32xbf16> to vector<5x32xbf16>
    %5 = arith.extf %4 : vector<5x32xbf16> to vector<5x32xf32>
    %6 = tpu.concatenate %2, %5 in 0 : vector<8x32xf32>, vector<5x32xf32> -> vector<13x32xf32>
    %cst = arith.constant dense<0.000000e+00> : vector<13xf32>
    %7 = vector.multi_reduction <add>, %6, %cst [1] : vector<13x32xf32> to vector<13xf32>
    %8 = vector.shape_cast %7 : vector<13xf32> to vector<13x1xf32>
    %cst_5 = arith.constant 3.200000e+01 : f32
    %9 = vector.broadcast %cst_5 : f32 to vector<13x1xf32>
    %10 = arith.divf %8, %9 : vector<13x1xf32>
    %11 = vector.broadcast %10 : vector<13x1xf32> to vector<13x32xf32>
    %12 = arith.subf %6, %11 : vector<13x32xf32>
    %13 = arith.mulf %12, %12 : vector<13x32xf32>
    %cst_6 = arith.constant dense<0.000000e+00> : vector<13xf32>
    %14 = vector.multi_reduction <add>, %13, %cst_6 [1] : vector<13x32xf32> to vector<13xf32>
    %15 = vector.shape_cast %14 : vector<13xf32> to vector<13x1xf32>
    %cst_7 = arith.constant 3.200000e+01 : f32
    %16 = vector.broadcast %cst_7 : f32 to vector<13x1xf32>
    %17 = arith.divf %15, %16 : vector<13x1xf32>
    %cst_8 = arith.constant 9.99999996E-13 : f32
    %18 = vector.broadcast %cst_8 : f32 to vector<13x1xf32>
    %19 = arith.addf %17, %18 : vector<13x1xf32>
    %20 = math.rsqrt %19 : vector<13x1xf32>
    %21 = vector.broadcast %20 : vector<13x1xf32> to vector<13x32xf32>
    %22 = arith.mulf %12, %21 : vector<13x32xf32>
    %c0_9 = arith.constant 0 : index
    %c0_10 = arith.constant 0 : index
    %23 = vector.load %arg4[%c0_9, %c0_10] : memref<1x32xf32, #tpu.memory_space<vmem>>, vector<1x32xf32>
    %24 = vector.broadcast %23 : vector<1x32xf32> to vector<13x32xf32>
    %25 = arith.mulf %22, %24 : vector<13x32xf32>
    %c0_11 = arith.constant 0 : index
    %c0_12 = arith.constant 0 : index
    %26 = vector.load %arg5[%c0_11, %c0_12] : memref<1x32xf32, #tpu.memory_space<vmem>>, vector<1x32xf32>
    %27 = vector.broadcast %26 : vector<1x32xf32> to vector<13x32xf32>
    %28 = arith.addf %25, %27 : vector<13x32xf32>
    %29 = arith.truncf %28 : vector<13x32xf32> to vector<13x32xbf16>
    %c0_13 = arith.constant 0 : index
    %c0_14 = arith.constant 0 : index
    %30 = vector.load %arg6[%c0_13, %c0_14] : memref<32x96xbf16, #tpu.memory_space<vmem>>, vector<32x96xbf16>
    %cst_15 = arith.constant dense<0.000000e+00> : vector<13x96xf32>
    %31 = tpu.matmul %29, %30, %cst_15 {dimension_numbers = #tpu.dot_dimension_numbers<[1], [0], [0], [1], [0, 0, 1, 1], [], []>} : vector<13x32xbf16>, vector<32x96xbf16>, vector<13x96xf32> -> vector<13x96xf32>
    %c0_16 = arith.constant 0 : index
    %c0_17 = arith.constant 0 : index
    %32 = vector.load %arg7[%c0_16, %c0_17] : memref<1x96xf32, #tpu.memory_space<vmem>>, vector<1x96xf32>
    %33 = vector.broadcast %32 : vector<1x96xf32> to vector<13x96xf32>
    %34 = arith.addf %31, %33 : vector<13x96xf32>
    %35 = arith.truncf %34 : vector<13x96xf32> to vector<13x96xbf16>
    %c0_18 = arith.constant 0 : index
    %c0_19 = arith.constant 0 : index
    %c0_20 = arith.constant 0 : index
    %36 = vector.load %arg3[%c0_18, %c0_19, %c0_20] : memref<1x1x13xf32, #tpu.memory_space<vmem>>, vector<1x1x13xf32>
    %37 = vector.shape_cast %36 : vector<1x1x13xf32> to vector<1x13xf32>
    %38 = vector.extract_strided_slice %35 {offsets = [0, 0], sizes = [13, 8], strides = [1, 1]} : vector<13x96xbf16> to vector<13x8xbf16>
    %39 = vector.extract_strided_slice %35 {offsets = [0, 32], sizes = [13, 8], strides = [1, 1]} : vector<13x96xbf16> to vector<13x8xbf16>
    %40 = vector.extract_strided_slice %35 {offsets = [0, 64], sizes = [13, 8], strides = [1, 1]} : vector<13x96xbf16> to vector<13x8xbf16>
    %cst_21 = arith.constant dense<0.000000e+00> : vector<13x13xf32>
    %41 = tpu.matmul %38, %39, %cst_21 {dimension_numbers = #tpu.dot_dimension_numbers<[1], [1], [0], [0], [0, 0, 1, 0], [], []>} : vector<13x8xbf16>, vector<13x8xbf16>, vector<13x13xf32> -> vector<13x13xf32>
    %cst_22 = arith.constant 0.353553385 : f32
    %42 = vector.broadcast %cst_22 : f32 to vector<13x13xf32>
    %43 = arith.mulf %41, %42 : vector<13x13xf32>
    %44 = vector.broadcast %37 : vector<1x13xf32> to vector<13x13xf32>
    %45 = arith.addf %43, %44 : vector<13x13xf32>
    %cst_23 = arith.constant dense<0xFF800000> : vector<13xf32>
    %46 = vector.multi_reduction <maximumf>, %45, %cst_23 [1] : vector<13x13xf32> to vector<13xf32>
    %47 = vector.shape_cast %46 : vector<13xf32> to vector<13x1xf32>
    %48 = vector.broadcast %47 : vector<13x1xf32> to vector<13x13xf32>
    %49 = arith.subf %45, %48 : vector<13x13xf32>
    %50 = math.exp %49 : vector<13x13xf32>
    %cst_24 = arith.constant dense<0.000000e+00> : vector<13xf32>
    %51 = vector.multi_reduction <add>, %50, %cst_24 [1] : vector<13x13xf32> to vector<13xf32>
    %52 = vector.shape_cast %51 : vector<13xf32> to vector<13x1xf32>
    %53 = tpu.reciprocal %52 {approx = true} : vector<13x1xf32> -> vector<13x1xf32>
    %54 = vector.broadcast %53 : vector<13x1xf32> to vector<13x13xf32>
    %55 = arith.mulf %50, %54 : vector<13x13xf32>
    %56 = arith.truncf %55 : vector<13x13xf32> to vector<13x13xbf16>
    %cst_25 = arith.constant dense<0.000000e+00> : vector<13x8xf32>
    %57 = tpu.matmul %56, %40, %cst_25 {dimension_numbers = #tpu.dot_dimension_numbers<[1], [0], [0], [1], [0, 0, 1, 1], [], []>} : vector<13x13xbf16>, vector<13x8xbf16>, vector<13x8xf32> -> vector<13x8xf32>
    %58 = arith.truncf %57 : vector<13x8xf32> to vector<13x8xbf16>
    %c0_26 = arith.constant 0 : index
    %c0_27 = arith.constant 0 : index
    %59 = vector.load %arg13[%c0_26, %c0_27] : memref<13x32xbf16, #tpu.memory_space<vmem>>, vector<13x8xbf16>
    tpu.vector_store %arg13[%c0_26, %c0_27], %58 {strides = array<i32>} : memref<13x32xbf16, #tpu.memory_space<vmem>>, vector<13x8xbf16>,
    %60 = vector.extract_strided_slice %35 {offsets = [0, 8], sizes = [13, 8], strides = [1, 1]} : vector<13x96xbf16> to vector<13x8xbf16>
    %61 = vector.extract_strided_slice %35 {offsets = [0, 40], sizes = [13, 8], strides = [1, 1]} : vector<13x96xbf16> to vector<13x8xbf16>
    %62 = vector.extract_strided_slice %35 {offsets = [0, 72], sizes = [13, 8], strides = [1, 1]} : vector<13x96xbf16> to vector<13x8xbf16>
    %cst_28 = arith.constant dense<0.000000e+00> : vector<13x13xf32>
    %63 = tpu.matmul %60, %61, %cst_28 {dimension_numbers = #tpu.dot_dimension_numbers<[1], [1], [0], [0], [0, 0, 1, 0], [], []>} : vector<13x8xbf16>, vector<13x8xbf16>, vector<13x13xf32> -> vector<13x13xf32>
    %cst_29 = arith.constant 0.353553385 : f32
    %64 = vector.broadcast %cst_29 : f32 to vector<13x13xf32>
    %65 = arith.mulf %63, %64 : vector<13x13xf32>
    %66 = vector.broadcast %37 : vector<1x13xf32> to vector<13x13xf32>
    %67 = arith.addf %65, %66 : vector<13x13xf32>
    %cst_30 = arith.constant dense<0xFF800000> : vector<13xf32>
    %68 = vector.multi_reduction <maximumf>, %67, %cst_30 [1] : vector<13x13xf32> to vector<13xf32>
    %69 = vector.shape_cast %68 : vector<13xf32> to vector<13x1xf32>
    %70 = vector.broadcast %69 : vector<13x1xf32> to vector<13x13xf32>
    %71 = arith.subf %67, %70 : vector<13x13xf32>
    %72 = math.exp %71 : vector<13x13xf32>
    %cst_31 = arith.constant dense<0.000000e+00> : vector<13xf32>
    %73 = vector.multi_reduction <add>, %72, %cst_31 [1] : vector<13x13xf32> to vector<13xf32>
    %74 = vector.shape_cast %73 : vector<13xf32> to vector<13x1xf32>
    %75 = tpu.reciprocal %74 {approx = true} : vector<13x1xf32> -> vector<13x1xf32>
    %76 = vector.broadcast %75 : vector<13x1xf32> to vector<13x13xf32>
    %77 = arith.mulf %72, %76 : vector<13x13xf32>
    %78 = arith.truncf %77 : vector<13x13xf32> to vector<13x13xbf16>
    %cst_32 = arith.constant dense<0.000000e+00> : vector<13x8xf32>
    %79 = tpu.matmul %78, %62, %cst_32 {dimension_numbers = #tpu.dot_dimension_numbers<[1], [0], [0], [1], [0, 0, 1, 1], [], []>} : vector<13x13xbf16>, vector<13x8xbf16>, vector<13x8xf32> -> vector<13x8xf32>
    %80 = arith.truncf %79 : vector<13x8xf32> to vector<13x8xbf16>
    %c0_33 = arith.constant 0 : index
    %c8 = arith.constant 8 : index
    %81 = vector.load %arg13[%c0_33, %c8] : memref<13x32xbf16, #tpu.memory_space<vmem>>, vector<13x8xbf16>
    tpu.vector_store %arg13[%c0_33, %c8], %80 {strides = array<i32>} : memref<13x32xbf16, #tpu.memory_space<vmem>>, vector<13x8xbf16>,
    %82 = vector.extract_strided_slice %35 {offsets = [0, 16], sizes = [13, 8], strides = [1, 1]} : vector<13x96xbf16> to vector<13x8xbf16>
    %83 = vector.extract_strided_slice %35 {offsets = [0, 48], sizes = [13, 8], strides = [1, 1]} : vector<13x96xbf16> to vector<13x8xbf16>
    %84 = vector.extract_strided_slice %35 {offsets = [0, 80], sizes = [13, 8], strides = [1, 1]} : vector<13x96xbf16> to vector<13x8xbf16>
    %cst_34 = arith.constant dense<0.000000e+00> : vector<13x13xf32>
    %85 = tpu.matmul %82, %83, %cst_34 {dimension_numbers = #tpu.dot_dimension_numbers<[1], [1], [0], [0], [0, 0, 1, 0], [], []>} : vector<13x8xbf16>, vector<13x8xbf16>, vector<13x13xf32> -> vector<13x13xf32>
    %cst_35 = arith.constant 0.353553385 : f32
    %86 = vector.broadcast %cst_35 : f32 to vector<13x13xf32>
    %87 = arith.mulf %85, %86 : vector<13x13xf32>
    %88 = vector.broadcast %37 : vector<1x13xf32> to vector<13x13xf32>
    %89 = arith.addf %87, %88 : vector<13x13xf32>
    %cst_36 = arith.constant dense<0xFF800000> : vector<13xf32>
    %90 = vector.multi_reduction <maximumf>, %89, %cst_36 [1] : vector<13x13xf32> to vector<13xf32>
    %91 = vector.shape_cast %90 : vector<13xf32> to vector<13x1xf32>
    %92 = vector.broadcast %91 : vector<13x1xf32> to vector<13x13xf32>
    %93 = arith.subf %89, %92 : vector<13x13xf32>
    %94 = math.exp %93 : vector<13x13xf32>
    %cst_37 = arith.constant dense<0.000000e+00> : vector<13xf32>
    %95 = vector.multi_reduction <add>, %94, %cst_37 [1] : vector<13x13xf32> to vector<13xf32>
    %96 = vector.shape_cast %95 : vector<13xf32> to vector<13x1xf32>
    %97 = tpu.reciprocal %96 {approx = true} : vector<13x1xf32> -> vector<13x1xf32>
    %98 = vector.broadcast %97 : vector<13x1xf32> to vector<13x13xf32>
    %99 = arith.mulf %94, %98 : vector<13x13xf32>
    %100 = arith.truncf %99 : vector<13x13xf32> to vector<13x13xbf16>
    %cst_38 = arith.constant dense<0.000000e+00> : vector<13x8xf32>
    %101 = tpu.matmul %100, %84, %cst_38 {dimension_numbers = #tpu.dot_dimension_numbers<[1], [0], [0], [1], [0, 0, 1, 1], [], []>} : vector<13x13xbf16>, vector<13x8xbf16>, vector<13x8xf32> -> vector<13x8xf32>
    %102 = arith.truncf %101 : vector<13x8xf32> to vector<13x8xbf16>
    %c0_39 = arith.constant 0 : index
    %c16 = arith.constant 16 : index
    %103 = vector.load %arg13[%c0_39, %c16] : memref<13x32xbf16, #tpu.memory_space<vmem>>, vector<13x8xbf16>
    tpu.vector_store %arg13[%c0_39, %c16], %102 {strides = array<i32>} : memref<13x32xbf16, #tpu.memory_space<vmem>>, vector<13x8xbf16>,
    %104 = vector.extract_strided_slice %35 {offsets = [0, 24], sizes = [13, 8], strides = [1, 1]} : vector<13x96xbf16> to vector<13x8xbf16>
    %105 = vector.extract_strided_slice %35 {offsets = [0, 56], sizes = [13, 8], strides = [1, 1]} : vector<13x96xbf16> to vector<13x8xbf16>
    %106 = vector.extract_strided_slice %35 {offsets = [0, 88], sizes = [13, 8], strides = [1, 1]} : vector<13x96xbf16> to vector<13x8xbf16>
    %cst_40 = arith.constant dense<0.000000e+00> : vector<13x13xf32>
    %107 = tpu.matmul %104, %105, %cst_40 {dimension_numbers = #tpu.dot_dimension_numbers<[1], [1], [0], [0], [0, 0, 1, 0], [], []>} : vector<13x8xbf16>, vector<13x8xbf16>, vector<13x13xf32> -> vector<13x13xf32>
    %cst_41 = arith.constant 0.353553385 : f32
    %108 = vector.broadcast %cst_41 : f32 to vector<13x13xf32>
    %109 = arith.mulf %107, %108 : vector<13x13xf32>
    %110 = vector.broadcast %37 : vector<1x13xf32> to vector<13x13xf32>
    %111 = arith.addf %109, %110 : vector<13x13xf32>
    %cst_42 = arith.constant dense<0xFF800000> : vector<13xf32>
    %112 = vector.multi_reduction <maximumf>, %111, %cst_42 [1] : vector<13x13xf32> to vector<13xf32>
    %113 = vector.shape_cast %112 : vector<13xf32> to vector<13x1xf32>
    %114 = vector.broadcast %113 : vector<13x1xf32> to vector<13x13xf32>
    %115 = arith.subf %111, %114 : vector<13x13xf32>
    %116 = math.exp %115 : vector<13x13xf32>
    %cst_43 = arith.constant dense<0.000000e+00> : vector<13xf32>
    %117 = vector.multi_reduction <add>, %116, %cst_43 [1] : vector<13x13xf32> to vector<13xf32>
    %118 = vector.shape_cast %117 : vector<13xf32> to vector<13x1xf32>
    %119 = tpu.reciprocal %118 {approx = true} : vector<13x1xf32> -> vector<13x1xf32>
    %120 = vector.broadcast %119 : vector<13x1xf32> to vector<13x13xf32>
    %121 = arith.mulf %116, %120 : vector<13x13xf32>
    %122 = arith.truncf %121 : vector<13x13xf32> to vector<13x13xbf16>
    %cst_44 = arith.constant dense<0.000000e+00> : vector<13x8xf32>
    %123 = tpu.matmul %122, %106, %cst_44 {dimension_numbers = #tpu.dot_dimension_numbers<[1], [0], [0], [1], [0, 0, 1, 1], [], []>} : vector<13x13xbf16>, vector<13x8xbf16>, vector<13x8xf32> -> vector<13x8xf32>
    %124 = arith.truncf %123 : vector<13x8xf32> to vector<13x8xbf16>
    %c0_45 = arith.constant 0 : index
    %c24 = arith.constant 24 : index
    %125 = vector.load %arg13[%c0_45, %c24] : memref<13x32xbf16, #tpu.memory_space<vmem>>, vector<13x8xbf16>
    tpu.vector_store %arg13[%c0_45, %c24], %124 {strides = array<i32>} : memref<13x32xbf16, #tpu.memory_space<vmem>>, vector<13x8xbf16>,
    %c0_46 = arith.constant 0 : index
    %c0_47 = arith.constant 0 : index
    %126 = vector.load %arg13[%c0_46, %c0_47] : memref<13x32xbf16, #tpu.memory_space<vmem>>, vector<13x32xbf16>
    %c0_48 = arith.constant 0 : index
    %c0_49 = arith.constant 0 : index
    %127 = vector.load %arg8[%c0_48, %c0_49] : memref<32x32xbf16, #tpu.memory_space<vmem>>, vector<32x32xbf16>
    %cst_50 = arith.constant dense<0.000000e+00> : vector<13x32xf32>
    %128 = tpu.matmul %126, %127, %cst_50 {dimension_numbers = #tpu.dot_dimension_numbers<[1], [0], [0], [1], [0, 0, 1, 1], [], []>} : vector<13x32xbf16>, vector<32x32xbf16>, vector<13x32xf32> -> vector<13x32xf32>
    %c0_51 = arith.constant 0 : index
    %c0_52 = arith.constant 0 : index
    %129 = vector.load %arg9[%c0_51, %c0_52] : memref<1x32xf32, #tpu.memory_space<vmem>>, vector<1x32xf32>
    %130 = vector.broadcast %129 : vector<1x32xf32> to vector<13x32xf32>
    %131 = arith.addf %128, %130 : vector<13x32xf32>
    %c0_53 = arith.constant 0 : index
    %c0_54 = arith.constant 0 : index
    %132 = vector.load %arg10[%c0_53, %c0_54] : memref<1x32xf32, #tpu.memory_space<vmem>>, vector<1x32xf32>
    %133 = vector.broadcast %132 : vector<1x32xf32> to vector<13x32xf32>
    %134 = arith.mulf %133, %131 : vector<13x32xf32>
    %135 = arith.addf %6, %134 : vector<13x32xf32>
    %136 = vector.extract_strided_slice %135 {offsets = [0, 0], sizes = [8, 32], strides = [1, 1]} : vector<13x32xf32> to vector<8x32xf32>
    %137 = arith.truncf %136 : vector<8x32xf32> to vector<8x32xbf16>
    %c0_55 = arith.constant 0 : index
    %c0_56 = arith.constant 0 : index
    %c0_57 = arith.constant 0 : index
    %138 = vector.load %arg11[%c0_55, %c0_56, %c0_57] : memref<1x8x32xbf16, #tpu.memory_space<vmem>>, vector<1x8x32xbf16>
    %139 = vector.shape_cast %138 : vector<1x8x32xbf16> to vector<8x32xbf16>
    %140 = vector.shape_cast %137 : vector<8x32xbf16> to vector<1x8x32xbf16>
    tpu.vector_store %arg11[%c0_55, %c0_56, %c0_57], %140 {strides = array<i32>} : memref<1x8x32xbf16, #tpu.memory_space<vmem>>, vector<1x8x32xbf16>,
    %141 = vector.extract_strided_slice %135 {offsets = [8, 0], sizes = [5, 32], strides = [1, 1]} : vector<13x32xf32> to vector<5x32xf32>
    %142 = arith.truncf %141 : vector<5x32xf32> to vector<5x32xbf16>
    %c0_58 = arith.constant 0 : index
    %c0_59 = arith.constant 0 : index
    %c0_60 = arith.constant 0 : index
    %143 = vector.load %arg12[%c0_58, %c0_59, %c0_60] : memref<1x5x32xbf16, #tpu.memory_space<vmem>>, vector<1x5x32xbf16>
    %144 = vector.shape_cast %143 : vector<1x5x32xbf16> to vector<5x32xbf16>
    %145 = vector.shape_cast %142 : vector<5x32xbf16> to vector<1x5x32xbf16>
    tpu.vector_store %arg12[%c0_58, %c0_59, %c0_60], %145 {strides = array<i32>} : memref<1x5x32xbf16, #tpu.memory_space<vmem>>, vector<1x5x32xbf16>,
    return
  }
  func.func @transform_0(%arg0: i32) -> (i32, i32, i32) {
    %c0_i32 = arith.constant 0 : i32
    %c0_i32_0 = arith.constant 0 : i32
    %c0_i32_1 = arith.constant 0 : i32
    return %arg0, %c0_i32, %c0_i32_0 : i32, i32, i32
  }
  func.func @transform_1(%arg0: i32) -> (i32, i32, i32) {
    %c0_i32 = arith.constant 0 : i32
    %c0_i32_0 = arith.constant 0 : i32
    %c0_i32_1 = arith.constant 0 : i32
    return %arg0, %c0_i32, %c0_i32_0 : i32, i32, i32
  }
  func.func @transform_2(%arg0: i32) -> (i32, i32, i32) {
    %c0_i32 = arith.constant 0 : i32
    %c0_i32_0 = arith.constant 0 : i32
    %c0_i32_1 = arith.constant 0 : i32
    return %arg0, %c0_i32, %c0_i32_0 : i32, i32, i32
  }
  func.func @transform_3(%arg0: i32) -> (i32, i32) {
    %c0_i32 = arith.constant 0 : i32
    %c0_i32_0 = arith.constant 0 : i32
    %c0_i32_1 = arith.constant 0 : i32
    return %c0_i32, %c0_i32_0 : i32, i32
  }
  func.func @transform_4(%arg0: i32) -> (i32, i32) {
    %c0_i32 = arith.constant 0 : i32
    %c0_i32_0 = arith.constant 0 : i32
    %c0_i32_1 = arith.constant 0 : i32
    return %c0_i32, %c0_i32_0 : i32, i32
  }
  func.func @transform_5(%arg0: i32) -> (i32, i32) {
    %c0_i32 = arith.constant 0 : i32
    %c0_i32_0 = arith.constant 0 : i32
    %c0_i32_1 = arith.constant 0 : i32
    return %c0_i32, %c0_i32_0 : i32, i32
  }
  func.func @transform_6(%arg0: i32) -> (i32, i32) {
    %c0_i32 = arith.constant 0 : i32
    %c0_i32_0 = arith.constant 0 : i32
    %c0_i32_1 = arith.constant 0 : i32
    return %c0_i32, %c0_i32_0 : i32, i32
  }
  func.func @transform_7(%arg0: i32) -> (i32, i32) {
    %c0_i32 = arith.constant 0 : i32
    %c0_i32_0 = arith.constant 0 : i32
    %c0_i32_1 = arith.constant 0 : i32
    return %c0_i32, %c0_i32_0 : i32, i32
  }
  func.func @transform_8(%arg0: i32) -> (i32, i32) {
    %c0_i32 = arith.constant 0 : i32
    %c0_i32_0 = arith.constant 0 : i32
    %c0_i32_1 = arith.constant 0 : i32
    return %c0_i32, %c0_i32_0 : i32, i32
  }
  func.func @transform_9(%arg0: i32) -> (i32, i32) {
    %c0_i32 = arith.constant 0 : i32
    %c0_i32_0 = arith.constant 0 : i32
    %c0_i32_1 = arith.constant 0 : i32
    return %c0_i32, %c0_i32_0 : i32, i32
  }
  func.func @transform_10(%arg0: i32) -> (i32, i32, i32) {
    %c0_i32 = arith.constant 0 : i32
    %c0_i32_0 = arith.constant 0 : i32
    %c0_i32_1 = arith.constant 0 : i32
    return %arg0, %c0_i32, %c0_i32_0 : i32, i32, i32
  }
  func.func @transform_11(%arg0: i32) -> (i32, i32, i32) {
    %c0_i32 = arith.constant 0 : i32
    %c0_i32_0 = arith.constant 0 : i32
    %c0_i32_1 = arith.constant 0 : i32
    return %arg0, %c0_i32, %c0_i32_0 : i32, i32, i32
  }
}

module attributes {stable_mosaic.version = 11 : i64} {
  func.func @_layernorm_kernel(%arg0: i32, %arg1: memref<16x32xf32, #tpu.memory_space<vmem>>, %arg2: memref<1x32xf32, #tpu.memory_space<vmem>>, %arg3: memref<1x32xf32, #tpu.memory_space<vmem>>, %arg4: memref<16x32xf32, #tpu.memory_space<vmem>>) attributes {dimension_semantics = [#tpu.dimension_semantics<parallel>], iteration_bounds = array<i64: 1>, scalar_prefetch = 0 : i64, scratch_operands = 0 : i64, tpu.core_type = #tpu.core_type<tc>, window_params = [{transform_indices = @transform_0, window_bounds = array<i64: 16, 32>}, {pipeline_mode = #tpu.pipeline_mode<synchronous>, transform_indices = @transform_1, window_bounds = array<i64: 1, 32>}, {pipeline_mode = #tpu.pipeline_mode<synchronous>, transform_indices = @transform_2, window_bounds = array<i64: 1, 32>}, {transform_indices = @transform_3, window_bounds = array<i64: 16, 32>}]} {
    %c0 = arith.constant 0 : index
    %c0_0 = arith.constant 0 : index
    %0 = vector.load %arg1[%c0, %c0_0] : memref<16x32xf32, #tpu.memory_space<vmem>>, vector<16x32xf32>
    %cst = arith.constant dense<0.000000e+00> : vector<16xf32>
    %1 = vector.multi_reduction <add>, %0, %cst [1] : vector<16x32xf32> to vector<16xf32>
    %2 = vector.shape_cast %1 : vector<16xf32> to vector<16x1xf32>
    %cst_1 = arith.constant 3.200000e+01 : f32
    %3 = vector.broadcast %cst_1 : f32 to vector<16x1xf32>
    %4 = arith.divf %2, %3 : vector<16x1xf32>
    %5 = vector.broadcast %4 : vector<16x1xf32> to vector<16x32xf32>
    %6 = arith.subf %0, %5 : vector<16x32xf32>
    %7 = arith.mulf %6, %6 : vector<16x32xf32>
    %cst_2 = arith.constant dense<0.000000e+00> : vector<16xf32>
    %8 = vector.multi_reduction <add>, %7, %cst_2 [1] : vector<16x32xf32> to vector<16xf32>
    %9 = vector.shape_cast %8 : vector<16xf32> to vector<16x1xf32>
    %cst_3 = arith.constant 3.200000e+01 : f32
    %10 = vector.broadcast %cst_3 : f32 to vector<16x1xf32>
    %11 = arith.divf %9, %10 : vector<16x1xf32>
    %cst_4 = arith.constant 9.99999996E-13 : f32
    %12 = vector.broadcast %cst_4 : f32 to vector<16x1xf32>
    %13 = arith.addf %11, %12 : vector<16x1xf32>
    %14 = math.rsqrt %13 : vector<16x1xf32>
    %15 = vector.broadcast %14 : vector<16x1xf32> to vector<16x32xf32>
    %16 = arith.mulf %6, %15 : vector<16x32xf32>
    %c0_5 = arith.constant 0 : index
    %c0_6 = arith.constant 0 : index
    %17 = vector.load %arg2[%c0_5, %c0_6] : memref<1x32xf32, #tpu.memory_space<vmem>>, vector<1x32xf32>
    %18 = vector.broadcast %17 : vector<1x32xf32> to vector<16x32xf32>
    %19 = arith.mulf %16, %18 : vector<16x32xf32>
    %c0_7 = arith.constant 0 : index
    %c0_8 = arith.constant 0 : index
    %20 = vector.load %arg3[%c0_7, %c0_8] : memref<1x32xf32, #tpu.memory_space<vmem>>, vector<1x32xf32>
    %21 = vector.broadcast %20 : vector<1x32xf32> to vector<16x32xf32>
    %22 = arith.addf %19, %21 : vector<16x32xf32>
    %c0_9 = arith.constant 0 : index
    %c0_10 = arith.constant 0 : index
    %23 = vector.load %arg4[%c0_9, %c0_10] : memref<16x32xf32, #tpu.memory_space<vmem>>, vector<16x32xf32>
    tpu.vector_store %arg4[%c0_9, %c0_10], %22 {strides = array<i32>} : memref<16x32xf32, #tpu.memory_space<vmem>>, vector<16x32xf32>,
    return
  }
  func.func @transform_0(%arg0: i32) -> (i32, i32) {
    %c0_i32 = arith.constant 0 : i32
    %c0_i32_0 = arith.constant 0 : i32
    return %arg0, %c0_i32 : i32, i32
  }
  func.func @transform_1(%arg0: i32) -> (i32, i32) {
    %c0_i32 = arith.constant 0 : i32
    %c0_i32_0 = arith.constant 0 : i32
    %c0_i32_1 = arith.constant 0 : i32
    return %c0_i32, %c0_i32_0 : i32, i32
  }
  func.func @transform_2(%arg0: i32) -> (i32, i32) {
    %c0_i32 = arith.constant 0 : i32
    %c0_i32_0 = arith.constant 0 : i32
    %c0_i32_1 = arith.constant 0 : i32
    return %c0_i32, %c0_i32_0 : i32, i32
  }
  func.func @transform_3(%arg0: i32) -> (i32, i32) {
    %c0_i32 = arith.constant 0 : i32
    %c0_i32_0 = arith.constant 0 : i32
    return %arg0, %c0_i32 : i32, i32
  }
}

module attributes {stable_mosaic.version = 11 : i64} {
  func.func @_mlp_block_kernel(%arg0: i32, %arg1: memref<10x32xbf16, #tpu.memory_space<vmem>>, %arg2: memref<1x32xf32, #tpu.memory_space<vmem>>, %arg3: memref<1x32xf32, #tpu.memory_space<vmem>>, %arg4: memref<32x128xbf16, #tpu.memory_space<vmem>>, %arg5: memref<1x128xf32, #tpu.memory_space<vmem>>, %arg6: memref<128x32xbf16, #tpu.memory_space<vmem>>, %arg7: memref<1x32xf32, #tpu.memory_space<vmem>>, %arg8: memref<1x32xf32, #tpu.memory_space<vmem>>, %arg9: memref<10x32xbf16, #tpu.memory_space<vmem>>) attributes {dimension_semantics = [#tpu.dimension_semantics<parallel>], iteration_bounds = array<i64: 1>, scalar_prefetch = 0 : i64, scratch_operands = 0 : i64, tpu.core_type = #tpu.core_type<tc>, window_params = [{transform_indices = @transform_0, window_bounds = array<i64: 10, 32>}, {pipeline_mode = #tpu.pipeline_mode<synchronous>, transform_indices = @transform_1, window_bounds = array<i64: 1, 32>}, {pipeline_mode = #tpu.pipeline_mode<synchronous>, transform_indices = @transform_2, window_bounds = array<i64: 1, 32>}, {pipeline_mode = #tpu.pipeline_mode<synchronous>, transform_indices = @transform_3, window_bounds = array<i64: 32, 128>}, {pipeline_mode = #tpu.pipeline_mode<synchronous>, transform_indices = @transform_4, window_bounds = array<i64: 1, 128>}, {pipeline_mode = #tpu.pipeline_mode<synchronous>, transform_indices = @transform_5, window_bounds = array<i64: 128, 32>}, {pipeline_mode = #tpu.pipeline_mode<synchronous>, transform_indices = @transform_6, window_bounds = array<i64: 1, 32>}, {pipeline_mode = #tpu.pipeline_mode<synchronous>, transform_indices = @transform_7, window_bounds = array<i64: 1, 32>}, {transform_indices = @transform_8, window_bounds = array<i64: 10, 32>}]} {
    %c0 = arith.constant 0 : index
    %c0_0 = arith.constant 0 : index
    %0 = vector.load %arg1[%c0, %c0_0] : memref<10x32xbf16, #tpu.memory_space<vmem>>, vector<10x32xbf16>
    %1 = arith.extf %0 : vector<10x32xbf16> to vector<10x32xf32>
    %cst = arith.constant dense<0.000000e+00> : vector<10xf32>
    %2 = vector.multi_reduction <add>, %1, %cst [1] : vector<10x32xf32> to vector<10xf32>
    %3 = vector.shape_cast %2 : vector<10xf32> to vector<10x1xf32>
    %cst_1 = arith.constant 3.200000e+01 : f32
    %4 = vector.broadcast %cst_1 : f32 to vector<10x1xf32>
    %5 = arith.divf %3, %4 : vector<10x1xf32>
    %6 = vector.broadcast %5 : vector<10x1xf32> to vector<10x32xf32>
    %7 = arith.subf %1, %6 : vector<10x32xf32>
    %8 = arith.mulf %7, %7 : vector<10x32xf32>
    %cst_2 = arith.constant dense<0.000000e+00> : vector<10xf32>
    %9 = vector.multi_reduction <add>, %8, %cst_2 [1] : vector<10x32xf32> to vector<10xf32>
    %10 = vector.shape_cast %9 : vector<10xf32> to vector<10x1xf32>
    %cst_3 = arith.constant 3.200000e+01 : f32
    %11 = vector.broadcast %cst_3 : f32 to vector<10x1xf32>
    %12 = arith.divf %10, %11 : vector<10x1xf32>
    %cst_4 = arith.constant 9.99999996E-13 : f32
    %13 = vector.broadcast %cst_4 : f32 to vector<10x1xf32>
    %14 = arith.addf %12, %13 : vector<10x1xf32>
    %15 = math.rsqrt %14 : vector<10x1xf32>
    %16 = vector.broadcast %15 : vector<10x1xf32> to vector<10x32xf32>
    %17 = arith.mulf %7, %16 : vector<10x32xf32>
    %c0_5 = arith.constant 0 : index
    %c0_6 = arith.constant 0 : index
    %18 = vector.load %arg2[%c0_5, %c0_6] : memref<1x32xf32, #tpu.memory_space<vmem>>, vector<1x32xf32>
    %19 = vector.broadcast %18 : vector<1x32xf32> to vector<10x32xf32>
    %20 = arith.mulf %17, %19 : vector<10x32xf32>
    %c0_7 = arith.constant 0 : index
    %c0_8 = arith.constant 0 : index
    %21 = vector.load %arg3[%c0_7, %c0_8] : memref<1x32xf32, #tpu.memory_space<vmem>>, vector<1x32xf32>
    %22 = vector.broadcast %21 : vector<1x32xf32> to vector<10x32xf32>
    %23 = arith.addf %20, %22 : vector<10x32xf32>
    %24 = arith.truncf %23 : vector<10x32xf32> to vector<10x32xbf16>
    %c0_9 = arith.constant 0 : index
    %c0_10 = arith.constant 0 : index
    %25 = vector.load %arg4[%c0_9, %c0_10] : memref<32x128xbf16, #tpu.memory_space<vmem>>, vector<32x128xbf16>
    %cst_11 = arith.constant dense<0.000000e+00> : vector<10x128xf32>
    %26 = tpu.matmul %24, %25, %cst_11 {dimension_numbers = #tpu.dot_dimension_numbers<[1], [0], [0], [1], [0, 0, 1, 1], [], []>} : vector<10x32xbf16>, vector<32x128xbf16>, vector<10x128xf32> -> vector<10x128xf32>
    %c0_12 = arith.constant 0 : index
    %c0_13 = arith.constant 0 : index
    %27 = vector.load %arg5[%c0_12, %c0_13] : memref<1x128xf32, #tpu.memory_space<vmem>>, vector<1x128xf32>
    %28 = vector.broadcast %27 : vector<1x128xf32> to vector<10x128xf32>
    %29 = arith.addf %26, %28 : vector<10x128xf32>
    %30 = arith.mulf %29, %29 : vector<10x128xf32>
    %31 = arith.mulf %29, %30 : vector<10x128xf32>
    %cst_14 = arith.constant 4.471500e-02 : f32
    %32 = vector.broadcast %cst_14 : f32 to vector<10x128xf32>
    %33 = arith.mulf %32, %31 : vector<10x128xf32>
    %34 = arith.addf %29, %33 : vector<10x128xf32>
    %cst_15 = arith.constant 0.797884583 : f32
    %35 = vector.broadcast %cst_15 : f32 to vector<10x128xf32>
    %36 = arith.mulf %35, %34 : vector<10x128xf32>
    %37 = math.tanh %36 : vector<10x128xf32>
    %cst_16 = arith.constant 1.000000e+00 : f32
    %38 = vector.broadcast %cst_16 : f32 to vector<10x128xf32>
    %39 = arith.addf %38, %37 : vector<10x128xf32>
    %cst_17 = arith.constant 5.000000e-01 : f32
    %40 = vector.broadcast %cst_17 : f32 to vector<10x128xf32>
    %41 = arith.mulf %40, %39 : vector<10x128xf32>
    %42 = arith.mulf %29, %41 : vector<10x128xf32>
    %43 = arith.truncf %42 : vector<10x128xf32> to vector<10x128xbf16>
    %c0_18 = arith.constant 0 : index
    %c0_19 = arith.constant 0 : index
    %44 = vector.load %arg6[%c0_18, %c0_19] : memref<128x32xbf16, #tpu.memory_space<vmem>>, vector<128x32xbf16>
    %cst_20 = arith.constant dense<0.000000e+00> : vector<10x32xf32>
    %45 = tpu.matmul %43, %44, %cst_20 {dimension_numbers = #tpu.dot_dimension_numbers<[1], [0], [0], [1], [0, 0, 1, 1], [], []>} : vector<10x128xbf16>, vector<128x32xbf16>, vector<10x32xf32> -> vector<10x32xf32>
    %c0_21 = arith.constant 0 : index
    %c0_22 = arith.constant 0 : index
    %46 = vector.load %arg7[%c0_21, %c0_22] : memref<1x32xf32, #tpu.memory_space<vmem>>, vector<1x32xf32>
    %47 = vector.broadcast %46 : vector<1x32xf32> to vector<10x32xf32>
    %48 = arith.addf %45, %47 : vector<10x32xf32>
    %c0_23 = arith.constant 0 : index
    %c0_24 = arith.constant 0 : index
    %49 = vector.load %arg8[%c0_23, %c0_24] : memref<1x32xf32, #tpu.memory_space<vmem>>, vector<1x32xf32>
    %50 = vector.broadcast %49 : vector<1x32xf32> to vector<10x32xf32>
    %51 = arith.mulf %50, %48 : vector<10x32xf32>
    %52 = arith.addf %1, %51 : vector<10x32xf32>
    %53 = arith.truncf %52 : vector<10x32xf32> to vector<10x32xbf16>
    %c0_25 = arith.constant 0 : index
    %c0_26 = arith.constant 0 : index
    %54 = vector.load %arg9[%c0_25, %c0_26] : memref<10x32xbf16, #tpu.memory_space<vmem>>, vector<10x32xbf16>
    tpu.vector_store %arg9[%c0_25, %c0_26], %53 {strides = array<i32>} : memref<10x32xbf16, #tpu.memory_space<vmem>>, vector<10x32xbf16>,
    return
  }
  func.func @transform_0(%arg0: i32) -> (i32, i32) {
    %c0_i32 = arith.constant 0 : i32
    %c0_i32_0 = arith.constant 0 : i32
    return %arg0, %c0_i32 : i32, i32
  }
  func.func @transform_1(%arg0: i32) -> (i32, i32) {
    %c0_i32 = arith.constant 0 : i32
    %c0_i32_0 = arith.constant 0 : i32
    %c0_i32_1 = arith.constant 0 : i32
    return %c0_i32, %c0_i32_0 : i32, i32
  }
  func.func @transform_2(%arg0: i32) -> (i32, i32) {
    %c0_i32 = arith.constant 0 : i32
    %c0_i32_0 = arith.constant 0 : i32
    %c0_i32_1 = arith.constant 0 : i32
    return %c0_i32, %c0_i32_0 : i32, i32
  }
  func.func @transform_3(%arg0: i32) -> (i32, i32) {
    %c0_i32 = arith.constant 0 : i32
    %c0_i32_0 = arith.constant 0 : i32
    %c0_i32_1 = arith.constant 0 : i32
    return %c0_i32, %c0_i32_0 : i32, i32
  }
  func.func @transform_4(%arg0: i32) -> (i32, i32) {
    %c0_i32 = arith.constant 0 : i32
    %c0_i32_0 = arith.constant 0 : i32
    %c0_i32_1 = arith.constant 0 : i32
    return %c0_i32, %c0_i32_0 : i32, i32
  }
  func.func @transform_5(%arg0: i32) -> (i32, i32) {
    %c0_i32 = arith.constant 0 : i32
    %c0_i32_0 = arith.constant 0 : i32
    %c0_i32_1 = arith.constant 0 : i32
    return %c0_i32, %c0_i32_0 : i32, i32
  }
  func.func @transform_6(%arg0: i32) -> (i32, i32) {
    %c0_i32 = arith.constant 0 : i32
    %c0_i32_0 = arith.constant 0 : i32
    %c0_i32_1 = arith.constant 0 : i32
    return %c0_i32, %c0_i32_0 : i32, i32
  }
  func.func @transform_7(%arg0: i32) -> (i32, i32) {
    %c0_i32 = arith.constant 0 : i32
    %c0_i32_0 = arith.constant 0 : i32
    %c0_i32_1 = arith.constant 0 : i32
    return %c0_i32, %c0_i32_0 : i32, i32
  }
  func.func @transform_8(%arg0: i32) -> (i32, i32) {
    %c0_i32 = arith.constant 0 : i32
    %c0_i32_0 = arith.constant 0 : i32
    return %arg0, %c0_i32 : i32, i32
  }
}

module attributes {stable_mosaic.version = 11 : i64} {
  func.func @_mlp_block_kernel(%arg0: i32, %arg1: memref<16x32xbf16, #tpu.memory_space<vmem>>, %arg2: memref<1x32xf32, #tpu.memory_space<vmem>>, %arg3: memref<1x32xf32, #tpu.memory_space<vmem>>, %arg4: memref<32x128xbf16, #tpu.memory_space<vmem>>, %arg5: memref<1x128xf32, #tpu.memory_space<vmem>>, %arg6: memref<128x32xbf16, #tpu.memory_space<vmem>>, %arg7: memref<1x32xf32, #tpu.memory_space<vmem>>, %arg8: memref<1x32xf32, #tpu.memory_space<vmem>>, %arg9: memref<16x32xbf16, #tpu.memory_space<vmem>>) attributes {dimension_semantics = [#tpu.dimension_semantics<parallel>], iteration_bounds = array<i64: 1>, scalar_prefetch = 0 : i64, scratch_operands = 0 : i64, tpu.core_type = #tpu.core_type<tc>, window_params = [{transform_indices = @transform_0, window_bounds = array<i64: 16, 32>}, {pipeline_mode = #tpu.pipeline_mode<synchronous>, transform_indices = @transform_1, window_bounds = array<i64: 1, 32>}, {pipeline_mode = #tpu.pipeline_mode<synchronous>, transform_indices = @transform_2, window_bounds = array<i64: 1, 32>}, {pipeline_mode = #tpu.pipeline_mode<synchronous>, transform_indices = @transform_3, window_bounds = array<i64: 32, 128>}, {pipeline_mode = #tpu.pipeline_mode<synchronous>, transform_indices = @transform_4, window_bounds = array<i64: 1, 128>}, {pipeline_mode = #tpu.pipeline_mode<synchronous>, transform_indices = @transform_5, window_bounds = array<i64: 128, 32>}, {pipeline_mode = #tpu.pipeline_mode<synchronous>, transform_indices = @transform_6, window_bounds = array<i64: 1, 32>}, {pipeline_mode = #tpu.pipeline_mode<synchronous>, transform_indices = @transform_7, window_bounds = array<i64: 1, 32>}, {transform_indices = @transform_8, window_bounds = array<i64: 16, 32>}]} {
    %c0 = arith.constant 0 : index
    %c0_0 = arith.constant 0 : index
    %0 = vector.load %arg1[%c0, %c0_0] : memref<16x32xbf16, #tpu.memory_space<vmem>>, vector<16x32xbf16>
    %1 = arith.extf %0 : vector<16x32xbf16> to vector<16x32xf32>
    %cst = arith.constant dense<0.000000e+00> : vector<16xf32>
    %2 = vector.multi_reduction <add>, %1, %cst [1] : vector<16x32xf32> to vector<16xf32>
    %3 = vector.shape_cast %2 : vector<16xf32> to vector<16x1xf32>
    %cst_1 = arith.constant 3.200000e+01 : f32
    %4 = vector.broadcast %cst_1 : f32 to vector<16x1xf32>
    %5 = arith.divf %3, %4 : vector<16x1xf32>
    %6 = vector.broadcast %5 : vector<16x1xf32> to vector<16x32xf32>
    %7 = arith.subf %1, %6 : vector<16x32xf32>
    %8 = arith.mulf %7, %7 : vector<16x32xf32>
    %cst_2 = arith.constant dense<0.000000e+00> : vector<16xf32>
    %9 = vector.multi_reduction <add>, %8, %cst_2 [1] : vector<16x32xf32> to vector<16xf32>
    %10 = vector.shape_cast %9 : vector<16xf32> to vector<16x1xf32>
    %cst_3 = arith.constant 3.200000e+01 : f32
    %11 = vector.broadcast %cst_3 : f32 to vector<16x1xf32>
    %12 = arith.divf %10, %11 : vector<16x1xf32>
    %cst_4 = arith.constant 9.99999996E-13 : f32
    %13 = vector.broadcast %cst_4 : f32 to vector<16x1xf32>
    %14 = arith.addf %12, %13 : vector<16x1xf32>
    %15 = math.rsqrt %14 : vector<16x1xf32>
    %16 = vector.broadcast %15 : vector<16x1xf32> to vector<16x32xf32>
    %17 = arith.mulf %7, %16 : vector<16x32xf32>
    %c0_5 = arith.constant 0 : index
    %c0_6 = arith.constant 0 : index
    %18 = vector.load %arg2[%c0_5, %c0_6] : memref<1x32xf32, #tpu.memory_space<vmem>>, vector<1x32xf32>
    %19 = vector.broadcast %18 : vector<1x32xf32> to vector<16x32xf32>
    %20 = arith.mulf %17, %19 : vector<16x32xf32>
    %c0_7 = arith.constant 0 : index
    %c0_8 = arith.constant 0 : index
    %21 = vector.load %arg3[%c0_7, %c0_8] : memref<1x32xf32, #tpu.memory_space<vmem>>, vector<1x32xf32>
    %22 = vector.broadcast %21 : vector<1x32xf32> to vector<16x32xf32>
    %23 = arith.addf %20, %22 : vector<16x32xf32>
    %24 = arith.truncf %23 : vector<16x32xf32> to vector<16x32xbf16>
    %c0_9 = arith.constant 0 : index
    %c0_10 = arith.constant 0 : index
    %25 = vector.load %arg4[%c0_9, %c0_10] : memref<32x128xbf16, #tpu.memory_space<vmem>>, vector<32x128xbf16>
    %cst_11 = arith.constant dense<0.000000e+00> : vector<16x128xf32>
    %26 = tpu.matmul %24, %25, %cst_11 {dimension_numbers = #tpu.dot_dimension_numbers<[1], [0], [0], [1], [0, 0, 1, 1], [], []>} : vector<16x32xbf16>, vector<32x128xbf16>, vector<16x128xf32> -> vector<16x128xf32>
    %c0_12 = arith.constant 0 : index
    %c0_13 = arith.constant 0 : index
    %27 = vector.load %arg5[%c0_12, %c0_13] : memref<1x128xf32, #tpu.memory_space<vmem>>, vector<1x128xf32>
    %28 = vector.broadcast %27 : vector<1x128xf32> to vector<16x128xf32>
    %29 = arith.addf %26, %28 : vector<16x128xf32>
    %30 = arith.mulf %29, %29 : vector<16x128xf32>
    %31 = arith.mulf %29, %30 : vector<16x128xf32>
    %cst_14 = arith.constant 4.471500e-02 : f32
    %32 = vector.broadcast %cst_14 : f32 to vector<16x128xf32>
    %33 = arith.mulf %32, %31 : vector<16x128xf32>
    %34 = arith.addf %29, %33 : vector<16x128xf32>
    %cst_15 = arith.constant 0.797884583 : f32
    %35 = vector.broadcast %cst_15 : f32 to vector<16x128xf32>
    %36 = arith.mulf %35, %34 : vector<16x128xf32>
    %37 = math.tanh %36 : vector<16x128xf32>
    %cst_16 = arith.constant 1.000000e+00 : f32
    %38 = vector.broadcast %cst_16 : f32 to vector<16x128xf32>
    %39 = arith.addf %38, %37 : vector<16x128xf32>
    %cst_17 = arith.constant 5.000000e-01 : f32
    %40 = vector.broadcast %cst_17 : f32 to vector<16x128xf32>
    %41 = arith.mulf %40, %39 : vector<16x128xf32>
    %42 = arith.mulf %29, %41 : vector<16x128xf32>
    %43 = arith.truncf %42 : vector<16x128xf32> to vector<16x128xbf16>
    %c0_18 = arith.constant 0 : index
    %c0_19 = arith.constant 0 : index
    %44 = vector.load %arg6[%c0_18, %c0_19] : memref<128x32xbf16, #tpu.memory_space<vmem>>, vector<128x32xbf16>
    %cst_20 = arith.constant dense<0.000000e+00> : vector<16x32xf32>
    %45 = tpu.matmul %43, %44, %cst_20 {dimension_numbers = #tpu.dot_dimension_numbers<[1], [0], [0], [1], [0, 0, 1, 1], [], []>} : vector<16x128xbf16>, vector<128x32xbf16>, vector<16x32xf32> -> vector<16x32xf32>
    %c0_21 = arith.constant 0 : index
    %c0_22 = arith.constant 0 : index
    %46 = vector.load %arg7[%c0_21, %c0_22] : memref<1x32xf32, #tpu.memory_space<vmem>>, vector<1x32xf32>
    %47 = vector.broadcast %46 : vector<1x32xf32> to vector<16x32xf32>
    %48 = arith.addf %45, %47 : vector<16x32xf32>
    %c0_23 = arith.constant 0 : index
    %c0_24 = arith.constant 0 : index
    %49 = vector.load %arg8[%c0_23, %c0_24] : memref<1x32xf32, #tpu.memory_space<vmem>>, vector<1x32xf32>
    %50 = vector.broadcast %49 : vector<1x32xf32> to vector<16x32xf32>
    %51 = arith.mulf %50, %48 : vector<16x32xf32>
    %52 = arith.addf %1, %51 : vector<16x32xf32>
    %53 = arith.truncf %52 : vector<16x32xf32> to vector<16x32xbf16>
    %c0_25 = arith.constant 0 : index
    %c0_26 = arith.constant 0 : index
    %54 = vector.load %arg9[%c0_25, %c0_26] : memref<16x32xbf16, #tpu.memory_space<vmem>>, vector<16x32xbf16>
    tpu.vector_store %arg9[%c0_25, %c0_26], %53 {strides = array<i32>} : memref<16x32xbf16, #tpu.memory_space<vmem>>, vector<16x32xbf16>,
    return
  }
  func.func @transform_0(%arg0: i32) -> (i32, i32) {
    %c0_i32 = arith.constant 0 : i32
    %c0_i32_0 = arith.constant 0 : i32
    return %arg0, %c0_i32 : i32, i32
  }
  func.func @transform_1(%arg0: i32) -> (i32, i32) {
    %c0_i32 = arith.constant 0 : i32
    %c0_i32_0 = arith.constant 0 : i32
    %c0_i32_1 = arith.constant 0 : i32
    return %c0_i32, %c0_i32_0 : i32, i32
  }
  func.func @transform_2(%arg0: i32) -> (i32, i32) {
    %c0_i32 = arith.constant 0 : i32
    %c0_i32_0 = arith.constant 0 : i32
    %c0_i32_1 = arith.constant 0 : i32
    return %c0_i32, %c0_i32_0 : i32, i32
  }
  func.func @transform_3(%arg0: i32) -> (i32, i32) {
    %c0_i32 = arith.constant 0 : i32
    %c0_i32_0 = arith.constant 0 : i32
    %c0_i32_1 = arith.constant 0 : i32
    return %c0_i32, %c0_i32_0 : i32, i32
  }
  func.func @transform_4(%arg0: i32) -> (i32, i32) {
    %c0_i32 = arith.constant 0 : i32
    %c0_i32_0 = arith.constant 0 : i32
    %c0_i32_1 = arith.constant 0 : i32
    return %c0_i32, %c0_i32_0 : i32, i32
  }
  func.func @transform_5(%arg0: i32) -> (i32, i32) {
    %c0_i32 = arith.constant 0 : i32
    %c0_i32_0 = arith.constant 0 : i32
    %c0_i32_1 = arith.constant 0 : i32
    return %c0_i32, %c0_i32_0 : i32, i32
  }
  func.func @transform_6(%arg0: i32) -> (i32, i32) {
    %c0_i32 = arith.constant 0 : i32
    %c0_i32_0 = arith.constant 0 : i32
    %c0_i32_1 = arith.constant 0 : i32
    return %c0_i32, %c0_i32_0 : i32, i32
  }
  func.func @transform_7(%arg0: i32) -> (i32, i32) {
    %c0_i32 = arith.constant 0 : i32
    %c0_i32_0 = arith.constant 0 : i32
    %c0_i32_1 = arith.constant 0 : i32
    return %c0_i32, %c0_i32_0 : i32, i32
  }
  func.func @transform_8(%arg0: i32) -> (i32, i32) {
    %c0_i32 = arith.constant 0 : i32
    %c0_i32_0 = arith.constant 0 : i32
    return %arg0, %c0_i32 : i32, i32
  }
}

module attributes {stable_mosaic.version = 11 : i64} {
  func.func @_layernorm_kernel(%arg0: i32, %arg1: memref<16x32xbf16, #tpu.memory_space<vmem>>, %arg2: memref<1x32xf32, #tpu.memory_space<vmem>>, %arg3: memref<1x32xf32, #tpu.memory_space<vmem>>, %arg4: memref<16x32xf32, #tpu.memory_space<vmem>>) attributes {dimension_semantics = [#tpu.dimension_semantics<parallel>], iteration_bounds = array<i64: 1>, scalar_prefetch = 0 : i64, scratch_operands = 0 : i64, tpu.core_type = #tpu.core_type<tc>, window_params = [{transform_indices = @transform_0, window_bounds = array<i64: 16, 32>}, {pipeline_mode = #tpu.pipeline_mode<synchronous>, transform_indices = @transform_1, window_bounds = array<i64: 1, 32>}, {pipeline_mode = #tpu.pipeline_mode<synchronous>, transform_indices = @transform_2, window_bounds = array<i64: 1, 32>}, {transform_indices = @transform_3, window_bounds = array<i64: 16, 32>}]} {
    %c0 = arith.constant 0 : index
    %c0_0 = arith.constant 0 : index
    %0 = vector.load %arg1[%c0, %c0_0] : memref<16x32xbf16, #tpu.memory_space<vmem>>, vector<16x32xbf16>
    %1 = arith.extf %0 : vector<16x32xbf16> to vector<16x32xf32>
    %cst = arith.constant dense<0.000000e+00> : vector<16xf32>
    %2 = vector.multi_reduction <add>, %1, %cst [1] : vector<16x32xf32> to vector<16xf32>
    %3 = vector.shape_cast %2 : vector<16xf32> to vector<16x1xf32>
    %cst_1 = arith.constant 3.200000e+01 : f32
    %4 = vector.broadcast %cst_1 : f32 to vector<16x1xf32>
    %5 = arith.divf %3, %4 : vector<16x1xf32>
    %6 = vector.broadcast %5 : vector<16x1xf32> to vector<16x32xf32>
    %7 = arith.subf %1, %6 : vector<16x32xf32>
    %8 = arith.mulf %7, %7 : vector<16x32xf32>
    %cst_2 = arith.constant dense<0.000000e+00> : vector<16xf32>
    %9 = vector.multi_reduction <add>, %8, %cst_2 [1] : vector<16x32xf32> to vector<16xf32>
    %10 = vector.shape_cast %9 : vector<16xf32> to vector<16x1xf32>
    %cst_3 = arith.constant 3.200000e+01 : f32
    %11 = vector.broadcast %cst_3 : f32 to vector<16x1xf32>
    %12 = arith.divf %10, %11 : vector<16x1xf32>
    %cst_4 = arith.constant 9.99999996E-13 : f32
    %13 = vector.broadcast %cst_4 : f32 to vector<16x1xf32>
    %14 = arith.addf %12, %13 : vector<16x1xf32>
    %15 = math.rsqrt %14 : vector<16x1xf32>
    %16 = vector.broadcast %15 : vector<16x1xf32> to vector<16x32xf32>
    %17 = arith.mulf %7, %16 : vector<16x32xf32>
    %c0_5 = arith.constant 0 : index
    %c0_6 = arith.constant 0 : index
    %18 = vector.load %arg2[%c0_5, %c0_6] : memref<1x32xf32, #tpu.memory_space<vmem>>, vector<1x32xf32>
    %19 = vector.broadcast %18 : vector<1x32xf32> to vector<16x32xf32>
    %20 = arith.mulf %17, %19 : vector<16x32xf32>
    %c0_7 = arith.constant 0 : index
    %c0_8 = arith.constant 0 : index
    %21 = vector.load %arg3[%c0_7, %c0_8] : memref<1x32xf32, #tpu.memory_space<vmem>>, vector<1x32xf32>
    %22 = vector.broadcast %21 : vector<1x32xf32> to vector<16x32xf32>
    %23 = arith.addf %20, %22 : vector<16x32xf32>
    %c0_9 = arith.constant 0 : index
    %c0_10 = arith.constant 0 : index
    %24 = vector.load %arg4[%c0_9, %c0_10] : memref<16x32xf32, #tpu.memory_space<vmem>>, vector<16x32xf32>
    tpu.vector_store %arg4[%c0_9, %c0_10], %23 {strides = array<i32>} : memref<16x32xf32, #tpu.memory_space<vmem>>, vector<16x32xf32>,
    return
  }
  func.func @transform_0(%arg0: i32) -> (i32, i32) {
    %c0_i32 = arith.constant 0 : i32
    %c0_i32_0 = arith.constant 0 : i32
    return %arg0, %c0_i32 : i32, i32
  }
  func.func @transform_1(%arg0: i32) -> (i32, i32) {
    %c0_i32 = arith.constant 0 : i32
    %c0_i32_0 = arith.constant 0 : i32
    %c0_i32_1 = arith.constant 0 : i32
    return %c0_i32, %c0_i32_0 : i32, i32
  }
  func.func @transform_2(%arg0: i32) -> (i32, i32) {
    %c0_i32 = arith.constant 0 : i32
    %c0_i32_0 = arith.constant 0 : i32
    %c0_i32_1 = arith.constant 0 : i32
    return %c0_i32, %c0_i32_0 : i32, i32
  }
  func.func @transform_3(%arg0: i32) -> (i32, i32) {
    %c0_i32 = arith.constant 0 : i32
    %c0_i32_0 = arith.constant 0 : i32
    return %arg0, %c0_i32 : i32, i32
  }
}

module attributes {stable_mosaic.version = 11 : i64} {
  func.func @_layernorm_kernel(%arg0: i32, %arg1: memref<10x32xbf16, #tpu.memory_space<vmem>>, %arg2: memref<1x32xf32, #tpu.memory_space<vmem>>, %arg3: memref<1x32xf32, #tpu.memory_space<vmem>>, %arg4: memref<10x32xf32, #tpu.memory_space<vmem>>) attributes {dimension_semantics = [#tpu.dimension_semantics<parallel>], iteration_bounds = array<i64: 1>, scalar_prefetch = 0 : i64, scratch_operands = 0 : i64, tpu.core_type = #tpu.core_type<tc>, window_params = [{transform_indices = @transform_0, window_bounds = array<i64: 10, 32>}, {pipeline_mode = #tpu.pipeline_mode<synchronous>, transform_indices = @transform_1, window_bounds = array<i64: 1, 32>}, {pipeline_mode = #tpu.pipeline_mode<synchronous>, transform_indices = @transform_2, window_bounds = array<i64: 1, 32>}, {transform_indices = @transform_3, window_bounds = array<i64: 10, 32>}]} {
    %c0 = arith.constant 0 : index
    %c0_0 = arith.constant 0 : index
    %0 = vector.load %arg1[%c0, %c0_0] : memref<10x32xbf16, #tpu.memory_space<vmem>>, vector<10x32xbf16>
    %1 = arith.extf %0 : vector<10x32xbf16> to vector<10x32xf32>
    %cst = arith.constant dense<0.000000e+00> : vector<10xf32>
    %2 = vector.multi_reduction <add>, %1, %cst [1] : vector<10x32xf32> to vector<10xf32>
    %3 = vector.shape_cast %2 : vector<10xf32> to vector<10x1xf32>
    %cst_1 = arith.constant 3.200000e+01 : f32
    %4 = vector.broadcast %cst_1 : f32 to vector<10x1xf32>
    %5 = arith.divf %3, %4 : vector<10x1xf32>
    %6 = vector.broadcast %5 : vector<10x1xf32> to vector<10x32xf32>
    %7 = arith.subf %1, %6 : vector<10x32xf32>
    %8 = arith.mulf %7, %7 : vector<10x32xf32>
    %cst_2 = arith.constant dense<0.000000e+00> : vector<10xf32>
    %9 = vector.multi_reduction <add>, %8, %cst_2 [1] : vector<10x32xf32> to vector<10xf32>
    %10 = vector.shape_cast %9 : vector<10xf32> to vector<10x1xf32>
    %cst_3 = arith.constant 3.200000e+01 : f32
    %11 = vector.broadcast %cst_3 : f32 to vector<10x1xf32>
    %12 = arith.divf %10, %11 : vector<10x1xf32>
    %cst_4 = arith.constant 9.99999996E-13 : f32
    %13 = vector.broadcast %cst_4 : f32 to vector<10x1xf32>
    %14 = arith.addf %12, %13 : vector<10x1xf32>
    %15 = math.rsqrt %14 : vector<10x1xf32>
    %16 = vector.broadcast %15 : vector<10x1xf32> to vector<10x32xf32>
    %17 = arith.mulf %7, %16 : vector<10x32xf32>
    %c0_5 = arith.constant 0 : index
    %c0_6 = arith.constant 0 : index
    %18 = vector.load %arg2[%c0_5, %c0_6] : memref<1x32xf32, #tpu.memory_space<vmem>>, vector<1x32xf32>
    %19 = vector.broadcast %18 : vector<1x32xf32> to vector<10x32xf32>
    %20 = arith.mulf %17, %19 : vector<10x32xf32>
    %c0_7 = arith.constant 0 : index
    %c0_8 = arith.constant 0 : index
    %21 = vector.load %arg3[%c0_7, %c0_8] : memref<1x32xf32, #tpu.memory_space<vmem>>, vector<1x32xf32>
    %22 = vector.broadcast %21 : vector<1x32xf32> to vector<10x32xf32>
    %23 = arith.addf %20, %22 : vector<10x32xf32>
    %c0_9 = arith.constant 0 : index
    %c0_10 = arith.constant 0 : index
    %24 = vector.load %arg4[%c0_9, %c0_10] : memref<10x32xf32, #tpu.memory_space<vmem>>, vector<10x32xf32>
    tpu.vector_store %arg4[%c0_9, %c0_10], %23 {strides = array<i32>} : memref<10x32xf32, #tpu.memory_space<vmem>>, vector<10x32xf32>,
    return
  }
  func.func @transform_0(%arg0: i32) -> (i32, i32) {
    %c0_i32 = arith.constant 0 : i32
    %c0_i32_0 = arith.constant 0 : i32
    return %arg0, %c0_i32 : i32, i32
  }
  func.func @transform_1(%arg0: i32) -> (i32, i32) {
    %c0_i32 = arith.constant 0 : i32
    %c0_i32_0 = arith.constant 0 : i32
    %c0_i32_1 = arith.constant 0 : i32
    return %c0_i32, %c0_i32_0 : i32, i32
  }
  func.func @transform_2(%arg0: i32) -> (i32, i32) {
    %c0_i32 = arith.constant 0 : i32
    %c0_i32_0 = arith.constant 0 : i32
    %c0_i32_1 = arith.constant 0 : i32
    return %c0_i32, %c0_i32_0 : i32, i32
  }
  func.func @transform_3(%arg0: i32) -> (i32, i32) {
    %c0_i32 = arith.constant 0 : i32
    %c0_i32_0 = arith.constant 0 : i32
    return %arg0, %c0_i32 : i32, i32
  }
}

module attributes {stable_mosaic.version = 11 : i64} {
  func.func @_pooler_kernel(%arg0: i32, %arg1: memref<2x32xbf16, #tpu.memory_space<vmem>>, %arg2: memref<1x32xf32, #tpu.memory_space<vmem>>, %arg3: memref<1x32xf32, #tpu.memory_space<vmem>>, %arg4: memref<32x32xbf16, #tpu.memory_space<vmem>>, %arg5: memref<1x32xf32, #tpu.memory_space<vmem>>, %arg6: memref<2x32xf32, #tpu.memory_space<vmem>>) attributes {dimension_semantics = [#tpu.dimension_semantics<parallel>], iteration_bounds = array<i64: 1>, scalar_prefetch = 0 : i64, scratch_operands = 0 : i64, tpu.core_type = #tpu.core_type<tc>, window_params = [{transform_indices = @transform_0, window_bounds = array<i64: 2, 32>}, {pipeline_mode = #tpu.pipeline_mode<synchronous>, transform_indices = @transform_1, window_bounds = array<i64: 1, 32>}, {pipeline_mode = #tpu.pipeline_mode<synchronous>, transform_indices = @transform_2, window_bounds = array<i64: 1, 32>}, {pipeline_mode = #tpu.pipeline_mode<synchronous>, transform_indices = @transform_3, window_bounds = array<i64: 32, 32>}, {pipeline_mode = #tpu.pipeline_mode<synchronous>, transform_indices = @transform_4, window_bounds = array<i64: 1, 32>}, {transform_indices = @transform_5, window_bounds = array<i64: 2, 32>}]} {
    %c0 = arith.constant 0 : index
    %c0_0 = arith.constant 0 : index
    %0 = vector.load %arg1[%c0, %c0_0] : memref<2x32xbf16, #tpu.memory_space<vmem>>, vector<2x32xbf16>
    %1 = arith.extf %0 : vector<2x32xbf16> to vector<2x32xf32>
    %cst = arith.constant dense<0.000000e+00> : vector<2xf32>
    %2 = vector.multi_reduction <add>, %1, %cst [1] : vector<2x32xf32> to vector<2xf32>
    %3 = vector.shape_cast %2 : vector<2xf32> to vector<2x1xf32>
    %cst_1 = arith.constant 3.200000e+01 : f32
    %4 = vector.broadcast %cst_1 : f32 to vector<2x1xf32>
    %5 = arith.divf %3, %4 : vector<2x1xf32>
    %6 = vector.broadcast %5 : vector<2x1xf32> to vector<2x32xf32>
    %7 = arith.subf %1, %6 : vector<2x32xf32>
    %8 = arith.mulf %7, %7 : vector<2x32xf32>
    %cst_2 = arith.constant dense<0.000000e+00> : vector<2xf32>
    %9 = vector.multi_reduction <add>, %8, %cst_2 [1] : vector<2x32xf32> to vector<2xf32>
    %10 = vector.shape_cast %9 : vector<2xf32> to vector<2x1xf32>
    %cst_3 = arith.constant 3.200000e+01 : f32
    %11 = vector.broadcast %cst_3 : f32 to vector<2x1xf32>
    %12 = arith.divf %10, %11 : vector<2x1xf32>
    %cst_4 = arith.constant 9.99999996E-13 : f32
    %13 = vector.broadcast %cst_4 : f32 to vector<2x1xf32>
    %14 = arith.addf %12, %13 : vector<2x1xf32>
    %15 = math.rsqrt %14 : vector<2x1xf32>
    %16 = vector.broadcast %15 : vector<2x1xf32> to vector<2x32xf32>
    %17 = arith.mulf %7, %16 : vector<2x32xf32>
    %c0_5 = arith.constant 0 : index
    %c0_6 = arith.constant 0 : index
    %18 = vector.load %arg2[%c0_5, %c0_6] : memref<1x32xf32, #tpu.memory_space<vmem>>, vector<1x32xf32>
    %19 = vector.broadcast %18 : vector<1x32xf32> to vector<2x32xf32>
    %20 = arith.mulf %17, %19 : vector<2x32xf32>
    %c0_7 = arith.constant 0 : index
    %c0_8 = arith.constant 0 : index
    %21 = vector.load %arg3[%c0_7, %c0_8] : memref<1x32xf32, #tpu.memory_space<vmem>>, vector<1x32xf32>
    %22 = vector.broadcast %21 : vector<1x32xf32> to vector<2x32xf32>
    %23 = arith.addf %20, %22 : vector<2x32xf32>
    %24 = arith.truncf %23 : vector<2x32xf32> to vector<2x32xbf16>
    %c0_9 = arith.constant 0 : index
    %c0_10 = arith.constant 0 : index
    %25 = vector.load %arg4[%c0_9, %c0_10] : memref<32x32xbf16, #tpu.memory_space<vmem>>, vector<32x32xbf16>
    %cst_11 = arith.constant dense<0.000000e+00> : vector<2x32xf32>
    %26 = tpu.matmul %24, %25, %cst_11 {dimension_numbers = #tpu.dot_dimension_numbers<[1], [0], [0], [1], [0, 0, 1, 1], [], []>} : vector<2x32xbf16>, vector<32x32xbf16>, vector<2x32xf32> -> vector<2x32xf32>
    %c0_12 = arith.constant 0 : index
    %c0_13 = arith.constant 0 : index
    %27 = vector.load %arg5[%c0_12, %c0_13] : memref<1x32xf32, #tpu.memory_space<vmem>>, vector<1x32xf32>
    %28 = vector.broadcast %27 : vector<1x32xf32> to vector<2x32xf32>
    %29 = arith.addf %26, %28 : vector<2x32xf32>
    %30 = math.tanh %29 : vector<2x32xf32>
    %c0_14 = arith.constant 0 : index
    %c0_15 = arith.constant 0 : index
    %31 = vector.load %arg6[%c0_14, %c0_15] : memref<2x32xf32, #tpu.memory_space<vmem>>, vector<2x32xf32>
    tpu.vector_store %arg6[%c0_14, %c0_15], %30 {strides = array<i32>} : memref<2x32xf32, #tpu.memory_space<vmem>>, vector<2x32xf32>,
    return
  }
  func.func @transform_0(%arg0: i32) -> (i32, i32) {
    %c0_i32 = arith.constant 0 : i32
    %c0_i32_0 = arith.constant 0 : i32
    return %arg0, %c0_i32 : i32, i32
  }
  func.func @transform_1(%arg0: i32) -> (i32, i32) {
    %c0_i32 = arith.constant 0 : i32
    %c0_i32_0 = arith.constant 0 : i32
    %c0_i32_1 = arith.constant 0 : i32
    return %c0_i32, %c0_i32_0 : i32, i32
  }
  func.func @transform_2(%arg0: i32) -> (i32, i32) {
    %c0_i32 = arith.constant 0 : i32
    %c0_i32_0 = arith.constant 0 : i32
    %c0_i32_1 = arith.constant 0 : i32
    return %c0_i32, %c0_i32_0 : i32, i32
  }
  func.func @transform_3(%arg0: i32) -> (i32, i32) {
    %c0_i32 = arith.constant 0 : i32
    %c0_i32_0 = arith.constant 0 : i32
    %c0_i32_1 = arith.constant 0 : i32
    return %c0_i32, %c0_i32_0 : i32, i32
  }
  func.func @transform_4(%arg0: i32) -> (i32, i32) {
    %c0_i32 = arith.constant 0 : i32
    %c0_i32_0 = arith.constant 0 : i32
    %c0_i32_1 = arith.constant 0 : i32
    return %c0_i32, %c0_i32_0 : i32, i32
  }
  func.func @transform_5(%arg0: i32) -> (i32, i32) {
    %c0_i32 = arith.constant 0 : i32
    %c0_i32_0 = arith.constant 0 : i32
    return %arg0, %c0_i32 : i32, i32
  }
}

</mosaic_0001>

<llo_original>
// kernel: tpu_custom_call.1
$region0: #{tpu_custom_call.1}
  #allocation0 [shape = 'u32[]', space=smem, size = 0x4, offset = 0x4, fixed_abs, tag = 'smem constant byte address 0x4 - core index']
  #allocation1 [shape = 'u32[144,128]{1,0:T(1,128)}', space=vmem, size = 0x12000, scoped, tag = 'internal scratch']
  %s0 = inlined_call_operand.hbm [shape: f32[8,128], index: 0, kind: input, shape index: {}]
  %s1 = inlined_call_operand.hbm [shape: f32[8,128], index: 1, kind: input, shape index: {}]
  %s2 = inlined_call_operand.hbm [shape: f32[8,128], index: 2, kind: output, shape index: {}]
  %s3 = sld [smem:[#allocation0]]
  $region26: #{tpu_custom_call.1} parent=0
    _
  %s5 = ssub.s32 1, %s3
  %s6 = scalar_select 0, %s5, %s3
  $region1: #{tpu_custom_call.1} parent=0
    #allocation2 [shape = 'u8[4096]{0}', space=vmem, size = 0x1000, scoped, tag = 'input window, operand 0, single buffered']
    #allocation3 [shape = 's32[1]{0}', space=sflag, size = 0x4, scoped, tag = 'scoped memory for tpu_custom_call.1']
    #allocation4 [shape = 's32[1]{0}', space=sflag, size = 0x4, scoped, tag = 'scoped memory for tpu_custom_call.1']
    #allocation5 [shape = 'u8[4096]{0}', space=vmem, size = 0x1000, scoped, tag = 'input window, operand 1, single buffered']
    #allocation6 [shape = 's32[1]{0}', space=sflag, size = 0x4, scoped, tag = 'scoped memory for tpu_custom_call.1']
    #allocation7 [shape = 'u8[4096]{0}', space=vmem, size = 0x1000, scoped, tag = 'output window, operand 0, single buffered']
    %7 = vsyncpa [#allocation3], 0
    %8 = vsyncpa [#allocation6], 0
    %9 = vsyncpa [#allocation4], 0
    // Predicated region
    $region2: #{tpu_custom_call.1} parent=1 // pred_check
      _
    $region3: #{tpu_custom_call.1} parent=1 // pred_check_branch
      %11 = sbr.rel (0) target = $region5
    $region4: #{tpu_custom_call.1} parent=1 // pred_region
      %s13 = ssub.s32 128, 128
      %14 = vsyncadd [#allocation3], %s13
      %s16 = sshll.u32 [#allocation2], 4
      %s17 = int_to_ptr.vmem [resolvable:$true] %s16
      %19 = dma.hbm_to_vmem [thread:$0]  %s0, 128, %s17, [#allocation3]
    $region5: #{tpu_custom_call.1} parent=1 // pred_fallthru
      _
    // Predicated region
    $region6: #{tpu_custom_call.1} parent=1 // pred_check
      _
    $region7: #{tpu_custom_call.1} parent=1 // pred_check_branch
      %21 = sbr.rel (0) target = $region9
    $region8: #{tpu_custom_call.1} parent=1 // pred_region
      %s23 = ssub.s32 128, 128
      %24 = vsyncadd [#allocation6], %s23
      %s26 = sshll.u32 [#allocation5], 4
      %s27 = int_to_ptr.vmem [resolvable:$true] %s26
      %29 = dma.hbm_to_vmem [thread:$0]  %s1, 128, %s27, [#allocation6]
    $region9: #{tpu_custom_call.1} parent=1 // pred_fallthru
      _
    // Predicated region
    $region10: #{tpu_custom_call.1} parent=1 // pred_check
      _
    $region11: #{tpu_custom_call.1} parent=1 // pred_check_branch
      %31 = sbr.rel (0) target = $region13
    $region12: #{tpu_custom_call.1} parent=1 // pred_region
      %32 = dma.done [#allocation3], 128
    $region13: #{tpu_custom_call.1} parent=1 // pred_fallthru
      _
    // Predicated region
    $region14: #{tpu_custom_call.1} parent=1 // pred_check
      _
    $region15: #{tpu_custom_call.1} parent=1 // pred_check_branch
      %34 = sbr.rel (0) target = $region17
    $region16: #{tpu_custom_call.1} parent=1 // pred_region
      %35 = dma.done [#allocation6], 128
    $region17: #{tpu_custom_call.1} parent=1 // pred_fallthru
      _
    %v36 = vld [vmem:[#allocation2] sm:$0xff]
    %v37 = vld [vmem:[#allocation5] sm:$0xff]
    %v38 = vadd.f32 %v36, %v37
    %39 = vst [vmem:[#allocation7] sm:$0xff] %v38
    // Predicated region
    $region18: #{tpu_custom_call.1} parent=1 // pred_check
      _
    $region19: #{tpu_custom_call.1} parent=1 // pred_check_branch
      %41 = sbr.rel (0) target = $region21
    $region20: #{tpu_custom_call.1} parent=1 // pred_region
      %s43 = ssub.s32 128, 128
      %44 = vsyncadd [#allocation4], %s43
      %s46 = sshll.u32 [#allocation7], 4
      %s47 = int_to_ptr.vmem [resolvable:$true] %s46
      %49 = dma.vmem_to_hbm [thread:$0]  %s47, 128, %s2, [#allocation4]
    $region21: #{tpu_custom_call.1} parent=1 // pred_fallthru
      _
    // Predicated region
    $region22: #{tpu_custom_call.1} parent=1 // pred_check
      _
    $region23: #{tpu_custom_call.1} parent=1 // pred_check_branch
      %51 = sbr.rel (0) target = $region25
    $region24: #{tpu_custom_call.1} parent=1 // pred_region
      %52 = dma.done [#allocation4], 128
    $region25: #{tpu_custom_call.1} parent=1 // pred_fallthru
      _
    %53 = vsyncpa [#allocation3], 1
    %54 = vsyncpa [#allocation6], 1
    %55 = vsyncpa [#allocation4], 1

// kernel: vlmo_forward.11
$region0: #{vlmo_forward.11}
  #allocation0 [shape = 'u32[]', space=smem, size = 0x4, offset = 0x4, fixed_abs, tag = 'smem constant byte address 0x4 - core index']
  #allocation1 [shape = 'u32[144,128]{1,0:T(1,128)}', space=vmem, size = 0x12000, scoped, tag = 'internal scratch']
  %s0 = inlined_call_operand.vmem [shape: f32[8,192], index: 0, kind: input, shape index: {}]
  %s1 = inlined_call_operand.vmem [shape: bf16[192,32], index: 1, kind: input, shape index: {}]
  %s2 = inlined_call_operand.vmem [shape: f32[1,32], index: 2, kind: input, shape index: {}]
  %s3 = inlined_call_operand.vmem [shape: f32[8,32], index: 3, kind: output, shape index: {}]
  %s4 = sld [smem:[#allocation0]]
  $region22: #{vlmo_forward.11} parent=0
    _
  %s6 = ssub.s32 1, %s4
  %s7 = scalar_select 0, %s6, %s4
  // Predicated region
  $region2: #{vlmo_forward.11} parent=0 // pred_check
    _
  $region3: #{vlmo_forward.11} parent=0 // pred_check_branch
    %9 = sbr.rel (0) target = $region5
  $region4: #{vlmo_forward.11} parent=0 // pred_region
    _
  $region5: #{vlmo_forward.11} parent=0 // pred_fallthru
    _
  // Predicated region
  $region6: #{vlmo_forward.11} parent=0 // pred_check
    _
  $region7: #{vlmo_forward.11} parent=0 // pred_check_branch
    %11 = sbr.rel (0) target = $region9
  $region8: #{vlmo_forward.11} parent=0 // pred_region
    _
  $region9: #{vlmo_forward.11} parent=0 // pred_fallthru
    _
  // Predicated region
  $region10: #{vlmo_forward.11} parent=0 // pred_check
    _
  $region11: #{vlmo_forward.11} parent=0 // pred_check_branch
    %13 = sbr.rel (0) target = $region13
  $region12: #{vlmo_forward.11} parent=0 // pred_region
    _
  $region13: #{vlmo_forward.11} parent=0 // pred_fallthru
    _
  %v15 = vld [vmem:[%s0] sm:$0xff]
  %v16 = vld [vmem:[%s0 + $0x8] sm:$0xff]
  %v17 = vpack.c.bf16 %v15, %v15
  %v18 = vpack.c.bf16 %v16, %v16
  %v19 = vld [vmem:[%s1] sm:$0xf]
  %v20 = vld [vmem:[%s1 + $0x4] sm:$0xf]
  %v21 = vld [vmem:[%s1 + $0x8] sm:$0xf]
  %v22 = vld [vmem:[%s1 + $0xc] sm:$0xf]
  %v23 = vld [vmem:[%s1 + $0x10] sm:$0xf]
  %v24 = vld [vmem:[%s1 + $0x14] sm:$0xf]
  %v25 = vld [vmem:[%s1 + $0x18] sm:$0xf]
  %v26 = vld [vmem:[%s1 + $0x1c] sm:$0xf]
  %v27 = vld [vmem:[%s1 + $0x20] sm:$0xf]
  %v28 = vld [vmem:[%s1 + $0x24] sm:$0xf]
  %v29 = vld [vmem:[%s1 + $0x28] sm:$0xf]
  %v30 = vld [vmem:[%s1 + $0x2c] sm:$0xf]
  %v31 = vld [vmem:[%s1 + $0x30] sm:$0xf]
  %v32 = vld [vmem:[%s1 + $0x34] sm:$0xf]
  %v33 = vld [vmem:[%s1 + $0x38] sm:$0xf]
  %v34 = vld [vmem:[%s1 + $0x3c] sm:$0xf]
  %v35 = vld [vmem:[%s1 + $0x40] sm:$0xf]
  %v36 = vld [vmem:[%s1 + $0x44] sm:$0xf]
  %v37 = vld [vmem:[%s1 + $0x48] sm:$0xf]
  %v38 = vld [vmem:[%s1 + $0x4c] sm:$0xf]
  %v39 = vld [vmem:[%s1 + $0x50] sm:$0xf]
  %v40 = vld [vmem:[%s1 + $0x54] sm:$0xf]
  %v41 = vld [vmem:[%s1 + $0x58] sm:$0xf]
  %v42 = vld [vmem:[%s1 + $0x5c] sm:$0xf]
  %v43 = vld [vmem:[%s2] sm:$0x1]
  %v45 = vlaneseq
  %v46 = vshrl.u32 %v45, 7
  %v47 = vsub.s32 0, %v46
  %v48 = vrot.slane %v43, %v47
  %v74 = vunpack.c.l.b16 %v19
  %v75 = vunpack.c.l.b16 %v20
  %v76 = vunpack.c.l.b16 %v21
  %v77 = vunpack.c.l.b16 %v22
  %v78 = vunpack.c.l.b16 %v23
  %v79 = vunpack.c.l.b16 %v24
  %v80 = vunpack.c.l.b16 %v25
  %v81 = vunpack.c.l.b16 %v26
  %v82 = vunpack.c.l.b16 %v27
  %v83 = vunpack.c.l.b16 %v28
  %v84 = vunpack.c.l.b16 %v29
  %v85 = vunpack.c.l.b16 %v30
  %v86 = vunpack.c.l.b16 %v31
  %v87 = vunpack.c.l.b16 %v32
  %v88 = vunpack.c.l.b16 %v33
  %v89 = vunpack.c.l.b16 %v34
  %v90 = vunpack.c.l.b16 %v35
  %v91 = vunpack.c.l.b16 %v36
  %v92 = vunpack.c.l.b16 %v37
  %v93 = vunpack.c.l.b16 %v38
  %v94 = vunpack.c.l.b16 %v39
  %v95 = vunpack.c.l.b16 %v40
  %v96 = vunpack.c.l.b16 %v41
  %v97 = vunpack.c.l.b16 %v42
  %v98 = vpack.c.b16 %v75, %v74
  %v99 = vpack.c.b16 %v77, %v76
  %v100 = vpack.c.b16 %v79, %v78
  %v101 = vpack.c.b16 %v81, %v80
  %v102 = vpack.c.b16 %v83, %v82
  %v103 = vpack.c.b16 %v85, %v84
  %v104 = vpack.c.b16 %v87, %v86
  %v105 = vpack.c.b16 %v89, %v88
  %v106 = vpack.c.b16 %v91, %v90
  %v107 = vpack.c.b16 %v93, %v92
  %v108 = vpack.c.b16 %v95, %v94
  %v109 = vpack.c.b16 %v97, %v96
  %vm122 = vcmask 523264
  %v124 = vsel %vm122, %v18, 0
  %126 = vmatprep.subr.bf16.mxu0 0
  %127 = vmatpush1.bf16.msra.mxu0 %v98
  %128 = vmatprep.subr.bf16.mxu0 0
  %129 = vmatpush1.bf16.msra.mxu0 %v99
  %130 = vmatprep.subr.bf16.mxu0 0
  %131 = vmatpush1.bf16.msra.mxu0 %v100
  %132 = vmatprep.subr.bf16.mxu0 0
  %133 = vmatpush1.bf16.msra.mxu0 %v101
  %134 = vmatprep.subr.bf16.mxu0 0
  %135 = vmatpush1.bf16.msra.mxu0 %v102
  %136 = vmatprep.subr.bf16.mxu0 0
  %137 = vmatpush1.bf16.msra.mxu0 %v103
  %138 = vmatprep.subr.bf16.mxu0 0
  %139 = vmatpush1.bf16.msra.mxu0 %v104
  %140 = vmatprep.subr.bf16.mxu0 0
  %141 = vmatpush1.bf16.msra.mxu0 %v105
  %142 = vmatprep.subr.bf16.mxu0 0
  %143 = vmatpush1.bf16.msra.mxu0 %v106
  %144 = vmatprep.subr.bf16.mxu0 0
  %145 = vmatpush1.bf16.msra.mxu0 %v107
  %146 = vmatprep.subr.bf16.mxu0 0
  %147 = vmatpush1.bf16.msra.mxu0 %v108
  %148 = vmatprep.subr.bf16.mxu0 0
  %149 = vmatpush1.bf16.msra.mxu0 %v109
  %150 = vmatprep.subr.bf16.mxu0 0
  %151 = vmatpush1.bf16.msra.mxu0 0
  %152 = vmatprep.subr.bf16.mxu0 0
  %153 = vmatpush1.bf16.msra.mxu0 0
  %154 = vmatprep.subr.bf16.mxu0 0
  %155 = vmatpush1.bf16.msra.mxu0 0
  %156 = vmatprep.subr.bf16.mxu0 0
  %157 = vmatpush1.bf16.msra.mxu0 0
  %158 = vmatprep.mubr.bf16.mxu0 %v124
  %159 = vmatmul.mubr.bf16.gmra.mrb[0].mxu0 %v17
  %v160 = vpop.f32.mrb[0].mxu0
  %v161 = vadd.f32 %v48, %v160
  %v162 = vpop.f32.mrb[0].mxu0
  %v163 = vpop.f32.mrb[0].mxu0
  %v164 = vpop.f32.mrb[0].mxu0
  %165 = vdwg.mxu0
  %vm166 = vcmask 261120
  %167 = vst.msk [vmem:[%s3] sm:$0xff] %vm166, %v161
  // Predicated region
  $region14: #{vlmo_forward.11} parent=0 // pred_check
    _
  $region15: #{vlmo_forward.11} parent=0 // pred_check_branch
    %169 = sbr.rel (0) target = $region17
  $region16: #{vlmo_forward.11} parent=0 // pred_region
    _
  $region17: #{vlmo_forward.11} parent=0 // pred_fallthru
    _
  // Predicated region
  $region18: #{vlmo_forward.11} parent=0 // pred_check
    _
  $region19: #{vlmo_forward.11} parent=0 // pred_check_branch
    %171 = sbr.rel (0) target = $region21
  $region20: #{vlmo_forward.11} parent=0 // pred_region
    _
  $region21: #{vlmo_forward.11} parent=0 // pred_fallthru
    _

// kernel: vlmo_forward.12
$region0: #{vlmo_forward.12}
  #allocation0 [shape = 'u32[]', space=smem, size = 0x4, offset = 0x4, fixed_abs, tag = 'smem constant byte address 0x4 - core index']
  #allocation1 [shape = 'u32[144,128]{1,0:T(1,128)}', space=vmem, size = 0x12000, scoped, tag = 'internal scratch']
  %s0 = inlined_call_operand.vmem [shape: f32[16,32], index: 0, kind: input, shape index: {}]
  %s1 = inlined_call_operand.vmem [shape: f32[1,32], index: 1, kind: input, shape index: {}]
  %s2 = inlined_call_operand.vmem [shape: f32[1,32], index: 2, kind: input, shape index: {}]
  %s3 = inlined_call_operand.vmem [shape: f32[16,32], index: 3, kind: output, shape index: {}]
  %s4 = sld [smem:[#allocation0]]
  $region22: #{vlmo_forward.12} parent=0
    _
  %s6 = ssub.s32 1, %s4
  %s7 = scalar_select 0, %s6, %s4
  // Predicated region
  $region2: #{vlmo_forward.12} parent=0 // pred_check
    _
  $region3: #{vlmo_forward.12} parent=0 // pred_check_branch
    %9 = sbr.rel (0) target = $region5
  $region4: #{vlmo_forward.12} parent=0 // pred_region
    _
  $region5: #{vlmo_forward.12} parent=0 // pred_fallthru
    _
  // Predicated region
  $region6: #{vlmo_forward.12} parent=0 // pred_check
    _
  $region7: #{vlmo_forward.12} parent=0 // pred_check_branch
    %11 = sbr.rel (0) target = $region9
  $region8: #{vlmo_forward.12} parent=0 // pred_region
    _
  $region9: #{vlmo_forward.12} parent=0 // pred_fallthru
    _
  // Predicated region
  $region10: #{vlmo_forward.12} parent=0 // pred_check
    _
  $region11: #{vlmo_forward.12} parent=0 // pred_check_branch
    %13 = sbr.rel (0) target = $region13
  $region12: #{vlmo_forward.12} parent=0 // pred_region
    _
  $region13: #{vlmo_forward.12} parent=0 // pred_fallthru
    _
  %v14 = vld [vmem:[%s0] sm:$0xff]
  %v15 = vld [vmem:[%s0 + $0x8] sm:$0xff]
  %vm16 = vcmask 261120
  %v17 = vsel %vm16, %v14, 0.0
  %18 = vadd.xlane.f32.xlu0 %v17
  %v19 = vpop.xlane.xlu0 %18
  %v20 = vsel %vm16, %v15, 0.0
  %21 = vadd.xlane.f32.xlu0 %v20
  %v22 = vpop.xlane.xlu0 %21
  %v23 = vrcp.pop 32.0
  %v24 = vmul.f32 %v19, %v23
  %v25 = vmul.f32 %v22, %v23
  %v26 = vsub.f32 %v14, %v24
  %v27 = vsub.f32 %v15, %v25
  %v28 = vmul.f32 %v26, %v26
  %v29 = vmul.f32 %v27, %v27
  %v30 = vsel %vm16, %v28, 0.0
  %31 = vadd.xlane.f32.xlu0 %v30
  %v32 = vpop.xlane.xlu0 %31
  %v33 = vsel %vm16, %v29, 0.0
  %34 = vadd.xlane.f32.xlu0 %v33
  %v35 = vpop.xlane.xlu0 %34
  %v36 = vmul.f32 %v32, %v23
  %v37 = vmul.f32 %v35, %v23
  %v38 = vadd.f32 %v36, 1e-12
  %v39 = vadd.f32 %v37, 1e-12
  %v40 = vrsqrt.pop %v38
  %v41 = vrsqrt.pop %v39
  %v42 = vmul.f32 %v26, %v40
  %v43 = vmul.f32 %v27, %v41
  %v44 = vld [vmem:[%s1] sm:$0x1]
  %v46 = vlaneseq
  %v47 = vshrl.u32 %v46, 7
  %v48 = vsub.s32 0, %v47
  %v49 = vrot.slane %v44, %v48
  %v51 = vmul.f32 %v42, %v49
  %v52 = vmul.f32 %v43, %v49
  %v53 = vld [vmem:[%s2] sm:$0x1]
  %v55 = vlaneseq
  %v56 = vshrl.u32 %v55, 7
  %v57 = vsub.s32 0, %v56
  %v58 = vrot.slane %v53, %v57
  %v60 = vadd.f32 %v51, %v58
  %v61 = vadd.f32 %v52, %v58
  %62 = vst.msk [vmem:[%s3] sm:$0xff] %vm16, %v60
  %63 = vst.msk [vmem:[%s3 + $0x8] sm:$0xff] %vm16, %v61
  // Predicated region
  $region14: #{vlmo_forward.12} parent=0 // pred_check
    _
  $region15: #{vlmo_forward.12} parent=0 // pred_check_branch
    %65 = sbr.rel (0) target = $region17
  $region16: #{vlmo_forward.12} parent=0 // pred_region
    _
  $region17: #{vlmo_forward.12} parent=0 // pred_fallthru
    _
  // Predicated region
  $region18: #{vlmo_forward.12} parent=0 // pred_check
    _
  $region19: #{vlmo_forward.12} parent=0 // pred_check_branch
    %67 = sbr.rel (0) target = $region21
  $region20: #{vlmo_forward.12} parent=0 // pred_region
    _
  $region21: #{vlmo_forward.12} parent=0 // pred_fallthru
    _

// kernel: vlmo_forward.15
$region0: #{vlmo_forward.15}
  #allocation0 [shape = 'u32[]', space=smem, size = 0x4, offset = 0x4, fixed_abs, tag = 'smem constant byte address 0x4 - core index']
  #allocation1 [shape = 'u32[144,128]{1,0:T(1,128)}', space=vmem, size = 0x12000, scoped, tag = 'internal scratch']
  %s0 = inlined_call_operand.vmem [shape: bf16[10,32], index: 0, kind: input, shape index: {}]
  %s1 = inlined_call_operand.vmem [shape: f32[1,32], index: 1, kind: input, shape index: {}]
  %s2 = inlined_call_operand.vmem [shape: f32[1,32], index: 2, kind: input, shape index: {}]
  %s3 = inlined_call_operand.vmem [shape: bf16[32,128], index: 3, kind: input, shape index: {}]
  %s4 = inlined_call_operand.vmem [shape: f32[1,128], index: 4, kind: input, shape index: {}]
  %s5 = inlined_call_operand.vmem [shape: bf16[128,32], index: 5, kind: input, shape index: {}]
  %s6 = inlined_call_operand.vmem [shape: f32[1,32], index: 6, kind: input, shape index: {}]
  %s7 = inlined_call_operand.vmem [shape: f32[1,32], index: 7, kind: input, shape index: {}]
  %s8 = inlined_call_operand.vmem [shape: bf16[10,32], index: 8, kind: output, shape index: {}]
  %s9 = sld [smem:[#allocation0]]
  $region42: #{vlmo_forward.15} parent=0
    _
  %s11 = ssub.s32 1, %s9
  %s12 = scalar_select 0, %s11, %s9
  // Predicated region
  $region2: #{vlmo_forward.15} parent=0 // pred_check
    _
  $region3: #{vlmo_forward.15} parent=0 // pred_check_branch
    %14 = sbr.rel (0) target = $region5
  $region4: #{vlmo_forward.15} parent=0 // pred_region
    _
  $region5: #{vlmo_forward.15} parent=0 // pred_fallthru
    _
  // Predicated region
  $region6: #{vlmo_forward.15} parent=0 // pred_check
    _
  $region7: #{vlmo_forward.15} parent=0 // pred_check_branch
    %16 = sbr.rel (0) target = $region9
  $region8: #{vlmo_forward.15} parent=0 // pred_region
    _
  $region9: #{vlmo_forward.15} parent=0 // pred_fallthru
    _
  // Predicated region
  $region10: #{vlmo_forward.15} parent=0 // pred_check
    _
  $region11: #{vlmo_forward.15} parent=0 // pred_check_branch
    %18 = sbr.rel (0) target = $region13
  $region12: #{vlmo_forward.15} parent=0 // pred_region
    _
  $region13: #{vlmo_forward.15} parent=0 // pred_fallthru
    _
  // Predicated region
  $region14: #{vlmo_forward.15} parent=0 // pred_check
    _
  $region15: #{vlmo_forward.15} parent=0 // pred_check_branch
    %20 = sbr.rel (0) target = $region17
  $region16: #{vlmo_forward.15} parent=0 // pred_region
    _
  $region17: #{vlmo_forward.15} parent=0 // pred_fallthru
    _
  // Predicated region
  $region18: #{vlmo_forward.15} parent=0 // pred_check
    _
  $region19: #{vlmo_forward.15} parent=0 // pred_check_branch
    %22 = sbr.rel (0) target = $region21
  $region20: #{vlmo_forward.15} parent=0 // pred_region
    _
  $region21: #{vlmo_forward.15} parent=0 // pred_fallthru
    _
  // Predicated region
  $region22: #{vlmo_forward.15} parent=0 // pred_check
    _
  $region23: #{vlmo_forward.15} parent=0 // pred_check_branch
    %24 = sbr.rel (0) target = $region25
  $region24: #{vlmo_forward.15} parent=0 // pred_region
    _
  $region25: #{vlmo_forward.15} parent=0 // pred_fallthru
    _
  // Predicated region
  $region26: #{vlmo_forward.15} parent=0 // pred_check
    _
  $region27: #{vlmo_forward.15} parent=0 // pred_check_branch
    %26 = sbr.rel (0) target = $region29
  $region28: #{vlmo_forward.15} parent=0 // pred_region
    _
  $region29: #{vlmo_forward.15} parent=0 // pred_fallthru
    _
  // Predicated region
  $region30: #{vlmo_forward.15} parent=0 // pred_check
    _
  $region31: #{vlmo_forward.15} parent=0 // pred_check_branch
    %28 = sbr.rel (0) target = $region33
  $region32: #{vlmo_forward.15} parent=0 // pred_region
    _
  $region33: #{vlmo_forward.15} parent=0 // pred_fallthru
    _
  %v30 = vld [vmem:[%s0] sm:$0xf]
  %v31 = vld [vmem:[%s0 + $0x4] sm:$0x1]
  %v32 = vunpack.c.l.bf16 %v30
  %v33 = vunpack.c.l.bf16 %v31
  %vm34 = vcmask 261120
  %v35 = vsel %vm34, %v32, 0.0
  %36 = vadd.xlane.f32.xlu0 %v35
  %v37 = vpop.xlane.xlu0 %36
  %vm38 = vcmask 254976
  %v39 = vsel %vm38, %v33, 0.0
  %40 = vadd.xlane.f32.xlu0 %v39
  %v41 = vpop.xlane.xlu0 %40
  %v42 = vrcp.pop 32.0
  %v43 = vmul.f32 %v37, %v42
  %v44 = vmul.f32 %v41, %v42
  %v45 = vsub.f32 %v32, %v43
  %v46 = vsub.f32 %v33, %v44
  %v47 = vmul.f32 %v45, %v45
  %v48 = vmul.f32 %v46, %v46
  %v49 = vsel %vm34, %v47, 0.0
  %50 = vadd.xlane.f32.xlu0 %v49
  %v51 = vpop.xlane.xlu0 %50
  %v52 = vsel %vm38, %v48, 0.0
  %53 = vadd.xlane.f32.xlu0 %v52
  %v54 = vpop.xlane.xlu0 %53
  %v55 = vmul.f32 %v51, %v42
  %v56 = vmul.f32 %v54, %v42
  %v57 = vadd.f32 %v55, 1e-12
  %v58 = vadd.f32 %v56, 1e-12
  %v59 = vrsqrt.pop %v57
  %v60 = vrsqrt.pop %v58
  %v61 = vmul.f32 %v45, %v59
  %v62 = vmul.f32 %v46, %v60
  %v63 = vld [vmem:[%s1] sm:$0x1]
  %v65 = vlaneseq
  %v66 = vshrl.u32 %v65, 7
  %v67 = vsub.s32 0, %v66
  %v68 = vrot.slane %v63, %v67
  %v70 = vmul.f32 %v61, %v68
  %v71 = vmul.f32 %v62, %v68
  %v72 = vld [vmem:[%s2] sm:$0x1]
  %v74 = vlaneseq
  %v75 = vshrl.u32 %v74, 7
  %v76 = vsub.s32 0, %v75
  %v77 = vrot.slane %v72, %v76
  %v79 = vadd.f32 %v70, %v77
  %v80 = vadd.f32 %v71, %v77
  %v81 = vpack.c.bf16 %v80, %v79
  %v82 = vld [vmem:[%s3] sm:$0xf]
  %v83 = vld [vmem:[%s3 + $0x4] sm:$0xf]
  %v84 = vld [vmem:[%s3 + $0x8] sm:$0xf]
  %v85 = vld [vmem:[%s3 + $0xc] sm:$0xf]
  %v86 = vld [vmem:[%s4] sm:$0x1]
  %v88 = vlaneseq
  %v89 = vshrl.u32 %v88, 7
  %v90 = vsub.s32 0, %v89
  %v91 = vrot.slane %v86, %v90
  %v97 = vunpack.c.l.b16 %v82
  %v98 = vunpack.c.l.b16 %v83
  %v99 = vunpack.c.l.b16 %v84
  %v100 = vunpack.c.l.b16 %v85
  %v101 = vpack.c.b16 %v98, %v97
  %v102 = vpack.c.b16 %v100, %v99
  %v106 = vsel %vm34, %v81, 0
  %108 = vmatprep.subr.bf16.mxu0 0
  %109 = vmatpush1.bf16.msra.mxu0 %v101
  %110 = vmatprep.subr.bf16.mxu0 0
  %111 = vmatpush1.bf16.msra.mxu0 %v102
  %112 = vmatprep.subr.bf16.mxu0 0
  %113 = vmatpush1.bf16.msra.mxu0 0
  %114 = vmatprep.subr.bf16.mxu0 0
  %115 = vmatpush1.bf16.msra.mxu0 0
  %116 = vmatprep.subr.bf16.mxu0 0
  %117 = vmatpush1.bf16.msra.mxu0 0
  %118 = vmatprep.subr.bf16.mxu0 0
  %119 = vmatpush1.bf16.msra.mxu0 0
  %120 = vmatprep.subr.bf16.mxu0 0
  %121 = vmatpush1.bf16.msra.mxu0 0
  %122 = vmatprep.subr.bf16.mxu0 0
  %123 = vmatpush1.bf16.msra.mxu0 0
  %124 = vmatprep.subr.bf16.mxu0 0
  %125 = vmatpush1.bf16.msra.mxu0 0
  %126 = vmatprep.subr.bf16.mxu0 0
  %127 = vmatpush1.bf16.msra.mxu0 0
  %128 = vmatprep.subr.bf16.mxu0 0
  %129 = vmatpush1.bf16.msra.mxu0 0
  %130 = vmatprep.subr.bf16.mxu0 0
  %131 = vmatpush1.bf16.msra.mxu0 0
  %132 = vmatprep.subr.bf16.mxu0 0
  %133 = vmatpush1.bf16.msra.mxu0 0
  %134 = vmatprep.subr.bf16.mxu0 0
  %135 = vmatpush1.bf16.msra.mxu0 0
  %136 = vmatprep.subr.bf16.mxu0 0
  %137 = vmatpush1.bf16.msra.mxu0 0
  %138 = vmatprep.subr.bf16.mxu0 0
  %139 = vmatpush1.bf16.msra.mxu0 0
  %140 = vmatprep.mubr.bf16.mxu0 0
  %141 = vmatmul.mubr.bf16.gmra.mrb[0].mxu0 %v106
  %v142 = vpop.f32.mrb[0].mxu0
  %v143 = vadd.f32 %v91, %v142
  %v144 = vpop.f32.mrb[0].mxu0
  %v145 = vpop.f32.mrb[0].mxu0
  %v146 = vadd.f32 %v91, %v145
  %v147 = vpop.f32.mrb[0].mxu0
  %148 = vdwg.mxu0
  %v149 = vmul.f32 %v143, %v143
  %v150 = vmul.f32 %v146, %v146
  %v151 = vmul.f32 %v143, %v149
  %v152 = vmul.f32 %v146, %v150
  %v153 = vmul.f32 %v151, 0.044715
  %v154 = vmul.f32 %v152, 0.044715
  %v155 = vadd.f32 %v143, %v153
  %v156 = vadd.f32 %v146, %v154
  %v157 = vmul.f32 %v155, 0.7978846
  %v158 = vmul.f32 %v156, 0.7978846
  %v159 = vtanh.pop %v157
  %v160 = vtanh.pop %v158
  %v161 = vadd.f32 %v159, 1.0
  %v162 = vadd.f32 %v160, 1.0
  %v163 = vmul.f32 %v161, 0.5
  %v164 = vmul.f32 %v162, 0.5
  %v165 = vmul.f32 %v143, %v163
  %v166 = vmul.f32 %v146, %v164
  %v167 = vpack.c.bf16 %v166, %v165
  %v168 = vld [vmem:[%s5] sm:$0xf]
  %v169 = vld [vmem:[%s5 + $0x4] sm:$0xf]
  %v170 = vld [vmem:[%s5 + $0x8] sm:$0xf]
  %v171 = vld [vmem:[%s5 + $0xc] sm:$0xf]
  %v172 = vld [vmem:[%s5 + $0x10] sm:$0xf]
  %v173 = vld [vmem:[%s5 + $0x14] sm:$0xf]
  %v174 = vld [vmem:[%s5 + $0x18] sm:$0xf]
  %v175 = vld [vmem:[%s5 + $0x1c] sm:$0xf]
  %v176 = vld [vmem:[%s5 + $0x20] sm:$0xf]
  %v177 = vld [vmem:[%s5 + $0x24] sm:$0xf]
  %v178 = vld [vmem:[%s5 + $0x28] sm:$0xf]
  %v179 = vld [vmem:[%s5 + $0x2c] sm:$0xf]
  %v180 = vld [vmem:[%s5 + $0x30] sm:$0xf]
  %v181 = vld [vmem:[%s5 + $0x34] sm:$0xf]
  %v182 = vld [vmem:[%s5 + $0x38] sm:$0xf]
  %v183 = vld [vmem:[%s5 + $0x3c] sm:$0xf]
  %v184 = vld [vmem:[%s6] sm:$0x1]
  %v186 = vlaneseq
  %v187 = vshrl.u32 %v186, 7
  %v188 = vsub.s32 0, %v187
  %v189 = vrot.slane %v184, %v188
  %v207 = vunpack.c.l.b16 %v168
  %v208 = vunpack.c.l.b16 %v169
  %v209 = vunpack.c.l.b16 %v170
  %v210 = vunpack.c.l.b16 %v171
  %v211 = vunpack.c.l.b16 %v172
  %v212 = vunpack.c.l.b16 %v173
  %v213 = vunpack.c.l.b16 %v174
  %v214 = vunpack.c.l.b16 %v175
  %v215 = vunpack.c.l.b16 %v176
  %v216 = vunpack.c.l.b16 %v177
  %v217 = vunpack.c.l.b16 %v178
  %v218 = vunpack.c.l.b16 %v179
  %v219 = vunpack.c.l.b16 %v180
  %v220 = vunpack.c.l.b16 %v181
  %v221 = vunpack.c.l.b16 %v182
  %v222 = vunpack.c.l.b16 %v183
  %v223 = vpack.c.b16 %v208, %v207
  %v224 = vpack.c.b16 %v210, %v209
  %v225 = vpack.c.b16 %v212, %v211
  %v226 = vpack.c.b16 %v214, %v213
  %v227 = vpack.c.b16 %v216, %v215
  %v228 = vpack.c.b16 %v218, %v217
  %v229 = vpack.c.b16 %v220, %v219
  %v230 = vpack.c.b16 %v222, %v221
  %239 = vmatprep.subr.bf16.mxu0 0
  %240 = vmatpush1.bf16.msra.mxu0 %v223
  %241 = vmatprep.subr.bf16.mxu0 0
  %242 = vmatpush1.bf16.msra.mxu0 %v224
  %243 = vmatprep.subr.bf16.mxu0 0
  %244 = vmatpush1.bf16.msra.mxu0 %v225
  %245 = vmatprep.subr.bf16.mxu0 0
  %246 = vmatpush1.bf16.msra.mxu0 %v226
  %247 = vmatprep.subr.bf16.mxu0 0
  %248 = vmatpush1.bf16.msra.mxu0 %v227
  %249 = vmatprep.subr.bf16.mxu0 0
  %250 = vmatpush1.bf16.msra.mxu0 %v228
  %251 = vmatprep.subr.bf16.mxu0 0
  %252 = vmatpush1.bf16.msra.mxu0 %v229
  %253 = vmatprep.subr.bf16.mxu0 0
  %254 = vmatpush1.bf16.msra.mxu0 %v230
  %255 = vmatprep.subr.bf16.mxu0 0
  %256 = vmatpush1.bf16.msra.mxu0 0
  %257 = vmatprep.subr.bf16.mxu0 0
  %258 = vmatpush1.bf16.msra.mxu0 0
  %259 = vmatprep.subr.bf16.mxu0 0
  %260 = vmatpush1.bf16.msra.mxu0 0
  %261 = vmatprep.subr.bf16.mxu0 0
  %262 = vmatpush1.bf16.msra.mxu0 0
  %263 = vmatprep.subr.bf16.mxu0 0
  %264 = vmatpush1.bf16.msra.mxu0 0
  %265 = vmatprep.subr.bf16.mxu0 0
  %266 = vmatpush1.bf16.msra.mxu0 0
  %267 = vmatprep.subr.bf16.mxu0 0
  %268 = vmatpush1.bf16.msra.mxu0 0
  %269 = vmatprep.subr.bf16.mxu0 0
  %270 = vmatpush1.bf16.msra.mxu0 0
  %271 = vmatprep.mubr.bf16.mxu0 0
  %272 = vmatmul.mubr.bf16.gmra.mrb[0].mxu0 %v167
  %v273 = vpop.f32.mrb[0].mxu0
  %v274 = vadd.f32 %v189, %v273
  %v275 = vpop.f32.mrb[0].mxu0
  %v276 = vpop.f32.mrb[0].mxu0
  %v277 = vadd.f32 %v189, %v276
  %v278 = vpop.f32.mrb[0].mxu0
  %279 = vdwg.mxu0
  %v280 = vld [vmem:[%s7] sm:$0x1]
  %v282 = vlaneseq
  %v283 = vshrl.u32 %v282, 7
  %v284 = vsub.s32 0, %v283
  %v285 = vrot.slane %v280, %v284
  %v287 = vmul.f32 %v285, %v274
  %v288 = vmul.f32 %v285, %v277
  %v289 = vadd.f32 %v32, %v287
  %v290 = vadd.f32 %v33, %v288
  %v291 = vpack.c.bf16 %v290, %v289
  %v293 = vunpack.c.l.b16 %v291
  %v294 = vunpack.c.h.b16 %v291
  %v295 = vpack.c.b16 %v293, %v293
  %v296 = vpack.c.b16 %v294, %v294
  %vm299 = vcmask 257024
  %300 = vst.msk [vmem:[%s8] sm:$0xf] %vm299, %v295
  %vm301 = vcmask 253952
  %302 = vst.msk [vmem:[%s8 + $0x4] sm:$0x1] %vm301, %v296
  // Predicated region
  $region34: #{vlmo_forward.15} parent=0 // pred_check
    _
  $region35: #{vlmo_forward.15} parent=0 // pred_check_branch
    %304 = sbr.rel (0) target = $region37
  $region36: #{vlmo_forward.15} parent=0 // pred_region
    _
  $region37: #{vlmo_forward.15} parent=0 // pred_fallthru
    _
  // Predicated region
  $region38: #{vlmo_forward.15} parent=0 // pred_check
    _
  $region39: #{vlmo_forward.15} parent=0 // pred_check_branch
    %306 = sbr.rel (0) target = $region41
  $region40: #{vlmo_forward.15} parent=0 // pred_region
    _
  $region41: #{vlmo_forward.15} parent=0 // pred_fallthru
    _

// kernel: vlmo_forward.13
$region0: #{vlmo_forward.13}
  #allocation0 [shape = 'u32[]', space=smem, size = 0x4, offset = 0x4, fixed_abs, tag = 'smem constant byte address 0x4 - core index']
  #allocation1 [shape = 'u32[144,128]{1,0:T(1,128)}', space=vmem, size = 0x12000, scoped, tag = 'internal scratch']
  #allocation2 [shape = 'bf16[13,32]{1,0:T(8,128)(2,1)}', space=vmem, size = 0x1000, scoped, tag = 'scratch operand']
  %s0 = inlined_call_operand.vmem [shape: bf16[2,8,32], index: 0, kind: input, shape index: {}]
  %s1 = inlined_call_operand.vmem [shape: bf16[2,5,32], index: 1, kind: input, shape index: {}]
  %s2 = inlined_call_operand.vmem [shape: f32[2,1,13], index: 2, kind: input, shape index: {}]
  %s3 = inlined_call_operand.vmem [shape: f32[1,32], index: 3, kind: input, shape index: {}]
  %s4 = inlined_call_operand.vmem [shape: f32[1,32], index: 4, kind: input, shape index: {}]
  %s5 = inlined_call_operand.vmem [shape: bf16[32,96], index: 5, kind: input, shape index: {}]
  %s6 = inlined_call_operand.vmem [shape: f32[1,96], index: 6, kind: input, shape index: {}]
  %s7 = inlined_call_operand.vmem [shape: bf16[32,32], index: 7, kind: input, shape index: {}]
  %s8 = inlined_call_operand.vmem [shape: f32[1,32], index: 8, kind: input, shape index: {}]
  %s9 = inlined_call_operand.vmem [shape: f32[1,32], index: 9, kind: input, shape index: {}]
  %s10 = inlined_call_operand.vmem [shape: bf16[2,8,32], index: 10, kind: output, shape index: {0}]
  %s11 = inlined_call_operand.vmem [shape: bf16[2,5,32], index: 11, kind: output, shape index: {1}]
  %12 = xla_tuple %s10, %s11
  %s13 = sld [smem:[#allocation0]]
  $region81: #{vlmo_forward.13} parent=0
    _
  %s15 = ssub.s32 1, %s13
  %s16 = scalar_select 0, %s15, %s13
  loop: start=0, step=1, limit=4
  $region2: #{vlmo_forward.13} parent=0 // loop_pre_header
    _
  $region3: #{vlmo_forward.13} parent=0 // loop_header
    %s18 = sphi 0, %s22
    %p19 = scmp.ge.s32.totalorder %s18, 4
    %s28 = sphi 0, %s30
    %s31 = sphi 0, %s28
    %s32 = sphi 0, %s31
    %s48 = sphi 0, %s32
    %s54 = sphi 0, %s56
    %s57 = sphi 0, %s54
    %s58 = sphi 0, %s57
    %s74 = sphi 0, %s58
    %s80 = sphi 0, %s82
    %s83 = sphi 0, %s80
    %s84 = sphi 0, %s83
    %s100 = sphi 0, %s84
    %s104 = sphi 0, %s104
    %s106 = sphi 0, %s104
    %s107 = sphi 0, %s106
    %s121 = sphi 0, %s107
    %s125 = sphi 0, %s125
    %s127 = sphi 0, %s125
    %s128 = sphi 0, %s127
    %s142 = sphi 0, %s128
    %s146 = sphi 0, %s146
    %s148 = sphi 0, %s146
    %s149 = sphi 0, %s148
    %s163 = sphi 0, %s149
    %s167 = sphi 0, %s167
    %s169 = sphi 0, %s167
    %s170 = sphi 0, %s169
    %s184 = sphi 0, %s170
    %s188 = sphi 0, %s188
    %s190 = sphi 0, %s188
    %s191 = sphi 0, %s190
    %s205 = sphi 0, %s191
    %s209 = sphi 0, %s209
    %s211 = sphi 0, %s209
    %s212 = sphi 0, %s211
    %s226 = sphi 0, %s212
    %s230 = sphi 0, %s230
    %s232 = sphi 0, %s230
    %s233 = sphi 0, %s232
    %s247 = sphi 0, %s233
    %s253 = sphi 0, %s255
    %s256 = sphi 0, %s253
    %s257 = sphi 0, %s256
    %s273 = sphi 0, %s257
    %s279 = sphi 0, %s281
    %s282 = sphi 0, %s279
    %s283 = sphi 0, %s282
    %s299 = sphi 0, %s283
  $region4: #{vlmo_forward.13} parent=0 // loop_header_branch
    %21 = sbr.rel (%p19) target = $region8
  $region5: #{vlmo_forward.13} parent=0 // loop_body
    %s23 = ssub.s32 %s18, 1
    %s24 = ssub.s32 %s18, 2
    %s25 = sadd.s32 %s18, 1
    %s26 = ssub.s32 %s18, %s25
    %p27 = scmp.eq.s32.totalorder %s26, 0
    %s29 = sadd.s32 %s28, 1
    %s30 = scalar_select %p27, %s28, %s29
    %p33 = pneg %p27
    %p34 = scmp.eq.s32.totalorder %s18, 1
    %p35 = por %p33, %p34
    %p36 = scmp.ne.s32.totalorder %s28, %s31
    %p37 = scmp.eq.s32.totalorder %s18, 0
    %p38 = por %p36, %p37
    %p39 = scmp.ne.s32.totalorder %s28, %s31
    %p40 = scmp.eq.s32.totalorder %s23, 1
    %p41 = por %p39, %p40
    %p42 = scmp.ne.s32.totalorder %s31, %s32
    %p43 = scmp.eq.s32.totalorder %s23, 0
    %p44 = por %p42, %p43
    %p45 = scmp.ne.s32.totalorder %s31, %s32
    %p46 = scmp.eq.s32.totalorder %s24, 1
    %p47 = por %p45, %p46
    %p49 = scmp.ne.s32.totalorder %s32, %s48
    %p50 = scmp.eq.s32.totalorder %s24, 0
    %p51 = por %p49, %p50
    %s52 = ssub.s32 %s18, %s25
    %p53 = scmp.eq.s32.totalorder %s52, 0
    %s55 = sadd.s32 %s54, 1
    %s56 = scalar_select %p53, %s54, %s55
    %p59 = pneg %p53
    %p60 = scmp.eq.s32.totalorder %s18, 1
    %p61 = por %p59, %p60
    %p62 = scmp.ne.s32.totalorder %s54, %s57
    %p63 = scmp.eq.s32.totalorder %s18, 0
    %p64 = por %p62, %p63
    %p65 = scmp.ne.s32.totalorder %s54, %s57
    %p66 = scmp.eq.s32.totalorder %s23, 1
    %p67 = por %p65, %p66
    %p68 = scmp.ne.s32.totalorder %s57, %s58
    %p69 = scmp.eq.s32.totalorder %s23, 0
    %p70 = por %p68, %p69
    %p71 = scmp.ne.s32.totalorder %s57, %s58
    %p72 = scmp.eq.s32.totalorder %s24, 1
    %p73 = por %p71, %p72
    %p75 = scmp.ne.s32.totalorder %s58, %s74
    %p76 = scmp.eq.s32.totalorder %s24, 0
    %p77 = por %p75, %p76
    %s78 = ssub.s32 %s18, %s25
    %p79 = scmp.eq.s32.totalorder %s78, 0
    %s81 = sadd.s32 %s80, 1
    %s82 = scalar_select %p79, %s80, %s81
    %p85 = pneg %p79
    %p86 = scmp.eq.s32.totalorder %s18, 1
    %p87 = por %p85, %p86
    %p88 = scmp.ne.s32.totalorder %s80, %s83
    %p89 = scmp.eq.s32.totalorder %s18, 0
    %p90 = por %p88, %p89
    %p91 = scmp.ne.s32.totalorder %s80, %s83
    %p92 = scmp.eq.s32.totalorder %s23, 1
    %p93 = por %p91, %p92
    %p94 = scmp.ne.s32.totalorder %s83, %s84
    %p95 = scmp.eq.s32.totalorder %s23, 0
    %p96 = por %p94, %p95
    %p97 = scmp.ne.s32.totalorder %s83, %s84
    %p98 = scmp.eq.s32.totalorder %s24, 1
    %p99 = por %p97, %p98
    %p101 = scmp.ne.s32.totalorder %s84, %s100
    %p102 = scmp.eq.s32.totalorder %s24, 0
    %p103 = por %p101, %p102
    %s105 = sadd.s32 %s104, 1
    %p108 = scmp.eq.s32.totalorder %s18, 1
    %p109 = scmp.ne.s32.totalorder %s104, %s106
    %p110 = scmp.eq.s32.totalorder %s18, 0
    %p111 = por %p109, %p110
    %p112 = scmp.ne.s32.totalorder %s104, %s106
    %p113 = scmp.eq.s32.totalorder %s23, 1
    %p114 = por %p112, %p113
    %p115 = scmp.ne.s32.totalorder %s106, %s107
    %p116 = scmp.eq.s32.totalorder %s23, 0
    %p117 = por %p115, %p116
    %p118 = scmp.ne.s32.totalorder %s106, %s107
    %p119 = scmp.eq.s32.totalorder %s24, 1
    %p120 = por %p118, %p119
    %p122 = scmp.ne.s32.totalorder %s107, %s121
    %p123 = scmp.eq.s32.totalorder %s24, 0
    %p124 = por %p122, %p123
    %s126 = sadd.s32 %s125, 1
    %p129 = scmp.eq.s32.totalorder %s18, 1
    %p130 = scmp.ne.s32.totalorder %s125, %s127
    %p131 = scmp.eq.s32.totalorder %s18, 0
    %p132 = por %p130, %p131
    %p133 = scmp.ne.s32.totalorder %s125, %s127
    %p134 = scmp.eq.s32.totalorder %s23, 1
    %p135 = por %p133, %p134
    %p136 = scmp.ne.s32.totalorder %s127, %s128
    %p137 = scmp.eq.s32.totalorder %s23, 0
    %p138 = por %p136, %p137
    %p139 = scmp.ne.s32.totalorder %s127, %s128
    %p140 = scmp.eq.s32.totalorder %s24, 1
    %p141 = por %p139, %p140
    %p143 = scmp.ne.s32.totalorder %s128, %s142
    %p144 = scmp.eq.s32.totalorder %s24, 0
    %p145 = por %p143, %p144
    %s147 = sadd.s32 %s146, 1
    %p150 = scmp.eq.s32.totalorder %s18, 1
    %p151 = scmp.ne.s32.totalorder %s146, %s148
    %p152 = scmp.eq.s32.totalorder %s18, 0
    %p153 = por %p151, %p152
    %p154 = scmp.ne.s32.totalorder %s146, %s148
    %p155 = scmp.eq.s32.totalorder %s23, 1
    %p156 = por %p154, %p155
    %p157 = scmp.ne.s32.totalorder %s148, %s149
    %p158 = scmp.eq.s32.totalorder %s23, 0
    %p159 = por %p157, %p158
    %p160 = scmp.ne.s32.totalorder %s148, %s149
    %p161 = scmp.eq.s32.totalorder %s24, 1
    %p162 = por %p160, %p161
    %p164 = scmp.ne.s32.totalorder %s149, %s163
    %p165 = scmp.eq.s32.totalorder %s24, 0
    %p166 = por %p164, %p165
    %s168 = sadd.s32 %s167, 1
    %p171 = scmp.eq.s32.totalorder %s18, 1
    %p172 = scmp.ne.s32.totalorder %s167, %s169
    %p173 = scmp.eq.s32.totalorder %s18, 0
    %p174 = por %p172, %p173
    %p175 = scmp.ne.s32.totalorder %s167, %s169
    %p176 = scmp.eq.s32.totalorder %s23, 1
    %p177 = por %p175, %p176
    %p178 = scmp.ne.s32.totalorder %s169, %s170
    %p179 = scmp.eq.s32.totalorder %s23, 0
    %p180 = por %p178, %p179
    %p181 = scmp.ne.s32.totalorder %s169, %s170
    %p182 = scmp.eq.s32.totalorder %s24, 1
    %p183 = por %p181, %p182
    %p185 = scmp.ne.s32.totalorder %s170, %s184
    %p186 = scmp.eq.s32.totalorder %s24, 0
    %p187 = por %p185, %p186
    %s189 = sadd.s32 %s188, 1
    %p192 = scmp.eq.s32.totalorder %s18, 1
    %p193 = scmp.ne.s32.totalorder %s188, %s190
    %p194 = scmp.eq.s32.totalorder %s18, 0
    %p195 = por %p193, %p194
    %p196 = scmp.ne.s32.totalorder %s188, %s190
    %p197 = scmp.eq.s32.totalorder %s23, 1
    %p198 = por %p196, %p197
    %p199 = scmp.ne.s32.totalorder %s190, %s191
    %p200 = scmp.eq.s32.totalorder %s23, 0
    %p201 = por %p199, %p200
    %p202 = scmp.ne.s32.totalorder %s190, %s191
    %p203 = scmp.eq.s32.totalorder %s24, 1
    %p204 = por %p202, %p203
    %p206 = scmp.ne.s32.totalorder %s191, %s205
    %p207 = scmp.eq.s32.totalorder %s24, 0
    %p208 = por %p206, %p207
    %s210 = sadd.s32 %s209, 1
    %p213 = scmp.eq.s32.totalorder %s18, 1
    %p214 = scmp.ne.s32.totalorder %s209, %s211
    %p215 = scmp.eq.s32.totalorder %s18, 0
    %p216 = por %p214, %p215
    %p217 = scmp.ne.s32.totalorder %s209, %s211
    %p218 = scmp.eq.s32.totalorder %s23, 1
    %p219 = por %p217, %p218
    %p220 = scmp.ne.s32.totalorder %s211, %s212
    %p221 = scmp.eq.s32.totalorder %s23, 0
    %p222 = por %p220, %p221
    %p223 = scmp.ne.s32.totalorder %s211, %s212
    %p224 = scmp.eq.s32.totalorder %s24, 1
    %p225 = por %p223, %p224
    %p227 = scmp.ne.s32.totalorder %s212, %s226
    %p228 = scmp.eq.s32.totalorder %s24, 0
    %p229 = por %p227, %p228
    %s231 = sadd.s32 %s230, 1
    %p234 = scmp.eq.s32.totalorder %s18, 1
    %p235 = scmp.ne.s32.totalorder %s230, %s232
    %p236 = scmp.eq.s32.totalorder %s18, 0
    %p237 = por %p235, %p236
    %p238 = scmp.ne.s32.totalorder %s230, %s232
    %p239 = scmp.eq.s32.totalorder %s23, 1
    %p240 = por %p238, %p239
    %p241 = scmp.ne.s32.totalorder %s232, %s233
    %p242 = scmp.eq.s32.totalorder %s23, 0
    %p243 = por %p241, %p242
    %p244 = scmp.ne.s32.totalorder %s232, %s233
    %p245 = scmp.eq.s32.totalorder %s24, 1
    %p246 = por %p244, %p245
    %p248 = scmp.ne.s32.totalorder %s233, %s247
    %p249 = scmp.eq.s32.totalorder %s24, 0
    %p250 = por %p248, %p249
    %s251 = ssub.s32 %s18, %s25
    %p252 = scmp.eq.s32.totalorder %s251, 0
    %s254 = sadd.s32 %s253, 1
    %s255 = scalar_select %p252, %s253, %s254
    %p258 = pneg %p252
    %p259 = scmp.eq.s32.totalorder %s18, 1
    %p260 = por %p258, %p259
    %p261 = scmp.ne.s32.totalorder %s253, %s256
    %p262 = scmp.eq.s32.totalorder %s18, 0
    %p263 = por %p261, %p262
    %p264 = scmp.ne.s32.totalorder %s253, %s256
    %p265 = scmp.eq.s32.totalorder %s23, 1
    %p266 = por %p264, %p265
    %p267 = scmp.ne.s32.totalorder %s256, %s257
    %p268 = scmp.eq.s32.totalorder %s23, 0
    %p269 = por %p267, %p268
    %p270 = scmp.ne.s32.totalorder %s256, %s257
    %p271 = scmp.eq.s32.totalorder %s24, 1
    %p272 = por %p270, %p271
    %p274 = scmp.ne.s32.totalorder %s257, %s273
    %p275 = scmp.eq.s32.totalorder %s24, 0
    %p276 = por %p274, %p275
    %s277 = ssub.s32 %s18, %s25
    %p278 = scmp.eq.s32.totalorder %s277, 0
    %s280 = sadd.s32 %s279, 1
    %s281 = scalar_select %p278, %s279, %s280
    %p284 = pneg %p278
    %p285 = scmp.eq.s32.totalorder %s18, 1
    %p286 = por %p284, %p285
    %p287 = scmp.ne.s32.totalorder %s279, %s282
    %p288 = scmp.eq.s32.totalorder %s18, 0
    %p289 = por %p287, %p288
    %p290 = scmp.ne.s32.totalorder %s279, %s282
    %p291 = scmp.eq.s32.totalorder %s23, 1
    %p292 = por %p290, %p291
    %p293 = scmp.ne.s32.totalorder %s282, %s283
    %p294 = scmp.eq.s32.totalorder %s23, 0
    %p295 = por %p293, %p294
    %p296 = scmp.ne.s32.totalorder %s282, %s283
    %p297 = scmp.eq.s32.totalorder %s24, 1
    %p298 = por %p296, %p297
    %p300 = scmp.ne.s32.totalorder %s283, %s299
    %p301 = scmp.eq.s32.totalorder %s24, 0
    %p302 = por %p300, %p301
    %p303 = scmp.le.s32.totalorder 1, %s18
    %p304 = scmp.lt.s32.totalorder %s18, 3
    %p305 = pnand %p303, %p304
    %p306 = pneg %p305
    // Predicated region
    $region9: #{vlmo_forward.13} parent=5 // pred_check
      _
    $region10: #{vlmo_forward.13} parent=5 // pred_check_branch
      %308 = sbr.rel (%p305) target = $region12
    $region11: #{vlmo_forward.13} parent=5 // pred_region
      %s309 = ssub.s32 %s18, 1
      // Predicated region
      $region13: #{vlmo_forward.13} parent=11 // pred_check
        %p310 = pneg %p117
      $region14: #{vlmo_forward.13} parent=11 // pred_check_branch
        %312 = sbr.rel (%p310) target = $region16
      $region15: #{vlmo_forward.13} parent=11 // pred_region
        _
      $region16: #{vlmo_forward.13} parent=11 // pred_fallthru
        _
      // Predicated region
      $region17: #{vlmo_forward.13} parent=11 // pred_check
        %p313 = pneg %p138
      $region18: #{vlmo_forward.13} parent=11 // pred_check_branch
        %315 = sbr.rel (%p313) target = $region20
      $region19: #{vlmo_forward.13} parent=11 // pred_region
        _
      $region20: #{vlmo_forward.13} parent=11 // pred_fallthru
        _
      // Predicated region
      $region21: #{vlmo_forward.13} parent=11 // pred_check
        %p316 = pneg %p159
      $region22: #{vlmo_forward.13} parent=11 // pred_check_branch
        %318 = sbr.rel (%p316) target = $region24
      $region23: #{vlmo_forward.13} parent=11 // pred_region
        _
      $region24: #{vlmo_forward.13} parent=11 // pred_fallthru
        _
      // Predicated region
      $region25: #{vlmo_forward.13} parent=11 // pred_check
        %p319 = pneg %p180
      $region26: #{vlmo_forward.13} parent=11 // pred_check_branch
        %321 = sbr.rel (%p319) target = $region28
      $region27: #{vlmo_forward.13} parent=11 // pred_region
        _
      $region28: #{vlmo_forward.13} parent=11 // pred_fallthru
        _
      // Predicated region
      $region29: #{vlmo_forward.13} parent=11 // pred_check
        %p322 = pneg %p201
      $region30: #{vlmo_forward.13} parent=11 // pred_check_branch
        %324 = sbr.rel (%p322) target = $region32
      $region31: #{vlmo_forward.13} parent=11 // pred_region
        _
      $region32: #{vlmo_forward.13} parent=11 // pred_fallthru
        _
      // Predicated region
      $region33: #{vlmo_forward.13} parent=11 // pred_check
        %p325 = pneg %p222
      $region34: #{vlmo_forward.13} parent=11 // pred_check_branch
        %327 = sbr.rel (%p325) target = $region36
      $region35: #{vlmo_forward.13} parent=11 // pred_region
        _
      $region36: #{vlmo_forward.13} parent=11 // pred_fallthru
        _
      // Predicated region
      $region37: #{vlmo_forward.13} parent=11 // pred_check
        %p328 = pneg %p243
      $region38: #{vlmo_forward.13} parent=11 // pred_check_branch
        %330 = sbr.rel (%p328) target = $region40
      $region39: #{vlmo_forward.13} parent=11 // pred_region
        _
      $region40: #{vlmo_forward.13} parent=11 // pred_fallthru
        _
    $region12: #{vlmo_forward.13} parent=5 // pred_fallthru
      _
    %p331 = scmp.lt.s32.totalorder %s18, 2
    // Predicated region
    $region41: #{vlmo_forward.13} parent=5 // pred_check
      %p332 = pneg %p331
    $region42: #{vlmo_forward.13} parent=5 // pred_check_branch
      %334 = sbr.rel (%p332) target = $region44
    $region43: #{vlmo_forward.13} parent=5 // pred_region
      // Predicated region
      $region45: #{vlmo_forward.13} parent=43 // pred_check
        %p335 = pneg %p38
      $region46: #{vlmo_forward.13} parent=43 // pred_check_branch
        %337 = sbr.rel (%p335) target = $region48
      $region47: #{vlmo_forward.13} parent=43 // pred_region
        %p338 = scmp.lt.s32.totalorder %s18, 1
        %s339 = scalar_select %p338, %s18, 1
        %s340 = smul.addr %s339, 4
        %s341 = scalar_lea.vmem %s0, %s340
      $region48: #{vlmo_forward.13} parent=43 // pred_fallthru
        _
      // Predicated region
      $region49: #{vlmo_forward.13} parent=43 // pred_check
        %p342 = pneg %p64
      $region50: #{vlmo_forward.13} parent=43 // pred_check_branch
        %344 = sbr.rel (%p342) target = $region52
      $region51: #{vlmo_forward.13} parent=43 // pred_region
        %p345 = scmp.lt.s32.totalorder %s18, 1
        %s346 = scalar_select %p345, %s18, 1
        %s347 = smul.addr %s346, 4
        %s348 = scalar_lea.vmem %s1, %s347
      $region52: #{vlmo_forward.13} parent=43 // pred_fallthru
        _
      // Predicated region
      $region53: #{vlmo_forward.13} parent=43 // pred_check
        %p349 = pneg %p90
      $region54: #{vlmo_forward.13} parent=43 // pred_check_branch
        %351 = sbr.rel (%p349) target = $region56
      $region55: #{vlmo_forward.13} parent=43 // pred_region
        %p352 = scmp.lt.s32.totalorder %s18, 1
        %s353 = scalar_select %p352, %s18, 1
        %s354 = scalar_lea.vmem %s2, %s353
      $region56: #{vlmo_forward.13} parent=43 // pred_fallthru
        _
    $region44: #{vlmo_forward.13} parent=5 // pred_fallthru
      _
    %p355 = scmp.le.s32.totalorder 1, %s18
    %p356 = scmp.lt.s32.totalorder %s18, 3
    %p357 = pnand %p355, %p356
    %p358 = pneg %p357
    // Predicated region
    $region57: #{vlmo_forward.13} parent=5 // pred_check
      _
    $region58: #{vlmo_forward.13} parent=5 // pred_check_branch
      %360 = sbr.rel (%p357) target = $region60
    $region59: #{vlmo_forward.13} parent=5 // pred_region
      %s361 = ssub.s32 %s18, 1
      %p362 = scmp.lt.s32.totalorder %s23, 1
      %s363 = scalar_select %p362, %s23, 1
      %s364 = smul.addr %s363, 4
      %s365 = scalar_lea.vmem %s0, %s364
      %p366 = pneg %p44
      %p367 = pneg %p41
      %p368 = scmp.lt.s32.totalorder %s23, 1
      %s369 = scalar_select %p368, %s23, 1
      %s370 = smul.addr %s369, 4
      %s371 = scalar_lea.vmem %s1, %s370
      %p372 = pneg %p70
      %p373 = pneg %p67
      %p374 = scmp.lt.s32.totalorder %s23, 1
      %s375 = scalar_select %p374, %s23, 1
      %s376 = scalar_lea.vmem %s2, %s375
      %p377 = pneg %p96
      %p378 = pneg %p93
      %p379 = pneg %p117
      %p380 = pneg %p114
      %p381 = pneg %p138
      %p382 = pneg %p135
      %p383 = pneg %p159
      %p384 = pneg %p156
      %p385 = pneg %p180
      %p386 = pneg %p177
      %p387 = pneg %p201
      %p388 = pneg %p198
      %p389 = pneg %p222
      %p390 = pneg %p219
      %p391 = pneg %p243
      %p392 = pneg %p240
      %p393 = pneg %p269
      %p394 = pneg %p266
      %p395 = scmp.lt.s32.totalorder %s23, 1
      %s396 = scalar_select %p395, %s23, 1
      %s397 = smul.addr %s396, 4
      %s398 = scalar_lea.vmem %s10, %s397
      %p399 = pneg %p295
      %p400 = pneg %p292
      %p401 = scmp.lt.s32.totalorder %s23, 1
      %s402 = scalar_select %p401, %s23, 1
      %s403 = smul.addr %s402, 4
      %s404 = scalar_lea.vmem %s11, %s403
      %p405 = scmp.lt.s32.totalorder %s23, 1
      %s406 = scalar_select %p405, %s23, 1
      %s407 = smul.addr %s406, 4
      %s408 = scalar_lea.vmem %s0, %s407
      %p409 = scmp.lt.s32.totalorder %s23, 1
      %s410 = scalar_select %p409, %s23, 1
      %s411 = smul.addr %s410, 4
      %s412 = scalar_lea.vmem %s1, %s411
      %p413 = scmp.lt.s32.totalorder %s23, 1
      %s414 = scalar_select %p413, %s23, 1
      %s415 = scalar_lea.vmem %s2, %s414
      %p416 = scmp.lt.s32.totalorder %s23, 1
      %s417 = scalar_select %p416, %s23, 1
      %s418 = smul.addr %s417, 4
      %s419 = scalar_lea.vmem %s10, %s418
      %p420 = scmp.lt.s32.totalorder %s23, 1
      %s421 = scalar_select %p420, %s23, 1
      %s422 = smul.addr %s421, 4
      %s423 = scalar_lea.vmem %s11, %s422
      %v425 = vld [vmem:[%s408] sm:$0xf]
      %v426 = vunpack.c.l.bf16 %v425
      %v427 = vld [vmem:[%s412] sm:$0x7]
      %v428 = vunpack.c.l.bf16 %v427
      %vm429 = vcmask 261120
      %v430 = vsel %vm429, %v426, 0.0
      %431 = vadd.xlane.f32.xlu0 %v430
      %v432 = vpop.xlane.xlu0 %431
      %vm433 = vcmask 258048
      %v434 = vsel %vm433, %v428, 0.0
      %435 = vadd.xlane.f32.xlu0 %v434
      %v436 = vpop.xlane.xlu0 %435
      %v437 = vrcp.pop 32.0
      %v438 = vmul.f32 %v432, %v437
      %v439 = vmul.f32 %v436, %v437
      %v440 = vsub.f32 %v426, %v438
      %v441 = vsub.f32 %v428, %v439
      %v442 = vmul.f32 %v440, %v440
      %v443 = vmul.f32 %v441, %v441
      %v444 = vsel %vm429, %v442, 0.0
      %445 = vadd.xlane.f32.xlu0 %v444
      %v446 = vpop.xlane.xlu0 %445
      %v447 = vsel %vm433, %v443, 0.0
      %448 = vadd.xlane.f32.xlu0 %v447
      %v449 = vpop.xlane.xlu0 %448
      %v450 = vmul.f32 %v446, %v437
      %v451 = vmul.f32 %v449, %v437
      %v452 = vadd.f32 %v450, 1e-12
      %v453 = vadd.f32 %v451, 1e-12
      %v454 = vrsqrt.pop %v452
      %v455 = vrsqrt.pop %v453
      %v456 = vmul.f32 %v440, %v454
      %v457 = vmul.f32 %v441, %v455
      %v458 = vld [vmem:[%s3] sm:$0x1]
      %v460 = vlaneseq
      %v461 = vshrl.u32 %v460, 7
      %v462 = vsub.s32 0, %v461
      %v463 = vrot.slane %v458, %v462
      %v465 = vmul.f32 %v456, %v463
      %v466 = vmul.f32 %v457, %v463
      %v467 = vld [vmem:[%s4] sm:$0x1]
      %v469 = vlaneseq
      %v470 = vshrl.u32 %v469, 7
      %v471 = vsub.s32 0, %v470
      %v472 = vrot.slane %v467, %v471
      %v474 = vadd.f32 %v465, %v472
      %v475 = vadd.f32 %v466, %v472
      %v476 = vpack.c.bf16 %v475, %v474
      %v477 = vld [vmem:[%s5] sm:$0xf]
      %v478 = vld [vmem:[%s5 + $0x4] sm:$0xf]
      %v479 = vld [vmem:[%s5 + $0x8] sm:$0xf]
      %v480 = vld [vmem:[%s5 + $0xc] sm:$0xf]
      %v481 = vld [vmem:[%s6] sm:$0x1]
      %v483 = vlaneseq
      %v484 = vshrl.u32 %v483, 7
      %v485 = vsub.s32 0, %v484
      %v486 = vrot.slane %v481, %v485
      %v492 = vunpack.c.l.b16 %v477
      %v493 = vunpack.c.l.b16 %v478
      %v494 = vunpack.c.l.b16 %v479
      %v495 = vunpack.c.l.b16 %v480
      %v496 = vpack.c.b16 %v493, %v492
      %v497 = vpack.c.b16 %v495, %v494
      %v501 = vsel %vm429, %v476, 0
      %503 = vmatprep.subr.bf16.mxu0 0
      %504 = vmatpush1.bf16.msra.mxu0 %v496
      %505 = vmatprep.subr.bf16.mxu0 0
      %506 = vmatpush1.bf16.msra.mxu0 %v497
      %507 = vmatprep.subr.bf16.mxu0 0
      %508 = vmatpush1.bf16.msra.mxu0 0
      %509 = vmatprep.subr.bf16.mxu0 0
      %510 = vmatpush1.bf16.msra.mxu0 0
      %511 = vmatprep.subr.bf16.mxu0 0
      %512 = vmatpush1.bf16.msra.mxu0 0
      %513 = vmatprep.subr.bf16.mxu0 0
      %514 = vmatpush1.bf16.msra.mxu0 0
      %515 = vmatprep.subr.bf16.mxu0 0
      %516 = vmatpush1.bf16.msra.mxu0 0
      %517 = vmatprep.subr.bf16.mxu0 0
      %518 = vmatpush1.bf16.msra.mxu0 0
      %519 = vmatprep.subr.bf16.mxu0 0
      %520 = vmatpush1.bf16.msra.mxu0 0
      %521 = vmatprep.subr.bf16.mxu0 0
      %522 = vmatpush1.bf16.msra.mxu0 0
      %523 = vmatprep.subr.bf16.mxu0 0
      %524 = vmatpush1.bf16.msra.mxu0 0
      %525 = vmatprep.subr.bf16.mxu0 0
      %526 = vmatpush1.bf16.msra.mxu0 0
      %527 = vmatprep.subr.bf16.mxu0 0
      %528 = vmatpush1.bf16.msra.mxu0 0
      %529 = vmatprep.subr.bf16.mxu0 0
      %530 = vmatpush1.bf16.msra.mxu0 0
      %531 = vmatprep.subr.bf16.mxu0 0
      %532 = vmatpush1.bf16.msra.mxu0 0
      %533 = vmatprep.subr.bf16.mxu0 0
      %534 = vmatpush1.bf16.msra.mxu0 0
      %535 = vmatprep.mubr.bf16.mxu0 0
      %536 = vmatmul.mubr.bf16.gmra.mrb[0].mxu0 %v501
      %v537 = vpop.f32.mrb[0].mxu0
      %v538 = vadd.f32 %v486, %v537
      %v539 = vpop.f32.mrb[0].mxu0
      %v540 = vpop.f32.mrb[0].mxu0
      %v541 = vadd.f32 %v486, %v540
      %v542 = vpop.f32.mrb[0].mxu0
      %543 = vdwg.mxu0
      %v544 = vpack.c.bf16 %v541, %v538
      %v545 = vld [vmem:[%s415] sm:$0x1]
      %547 = vrot.lane.b32.xlu0 %v544, 96
      %v548 = vpop.permute.xlu0 %547
      %vm549 = vcmask 64512
      %v551 = vsel %vm549, %v544, 0
      %v554 = vsel %vm549, %v548, 0
      %556 = vmatprep.subr.bf16.mxu0 0
      %557 = vmatpush1.bf16.xpose.msra.mxu0 %v554
      %558 = vmatprep.subr.bf16.mxu0 0
      %559 = vmatpush1.bf16.xpose.msra.mxu0 0
      %560 = vmatprep.subr.bf16.mxu0 0
      %561 = vmatpush1.bf16.xpose.msra.mxu0 0
      %562 = vmatprep.subr.bf16.mxu0 0
      %563 = vmatpush1.bf16.xpose.msra.mxu0 0
      %564 = vmatprep.subr.bf16.mxu0 0
      %565 = vmatpush1.bf16.xpose.msra.mxu0 0
      %566 = vmatprep.subr.bf16.mxu0 0
      %567 = vmatpush1.bf16.xpose.msra.mxu0 0
      %568 = vmatprep.subr.bf16.mxu0 0
      %569 = vmatpush1.bf16.xpose.msra.mxu0 0
      %570 = vmatprep.subr.bf16.mxu0 0
      %571 = vmatpush1.bf16.xpose.msra.mxu0 0
      %572 = vmatprep.subr.bf16.mxu0 0
      %573 = vmatpush1.bf16.xpose.msra.mxu0 0
      %574 = vmatprep.subr.bf16.mxu0 0
      %575 = vmatpush1.bf16.xpose.msra.mxu0 0
      %576 = vmatprep.subr.bf16.mxu0 0
      %577 = vmatpush1.bf16.xpose.msra.mxu0 0
      %578 = vmatprep.subr.bf16.mxu0 0
      %579 = vmatpush1.bf16.xpose.msra.mxu0 0
      %580 = vmatprep.subr.bf16.mxu0 0
      %581 = vmatpush1.bf16.xpose.msra.mxu0 0
      %582 = vmatprep.subr.bf16.mxu0 0
      %583 = vmatpush1.bf16.xpose.msra.mxu0 0
      %584 = vmatprep.subr.bf16.mxu0 0
      %585 = vmatpush1.bf16.xpose.msra.mxu0 0
      %586 = vmatprep.subr.bf16.mxu0 0
      %587 = vmatpush1.bf16.xpose.msra.mxu0 0
      %588 = vmatprep.mubr.bf16.mxu0 0
      %589 = vmatmul.mubr.bf16.gmra.mrb[0].mxu0 %v551
      %v590 = vpop.f32.mrb[0].mxu0
      %v591 = vadd.f32 0.0, %v590
      %v592 = vpop.f32.mrb[0].mxu0
      %v593 = vpop.f32.mrb[0].mxu0
      %v594 = vadd.f32 0.0, %v593
      %v595 = vpop.f32.mrb[0].mxu0
      %596 = vdwg.mxu0
      %v597 = vmul.f32 %v591, 0.35355338
      %v598 = vmul.f32 %v594, 0.35355338
      %v600 = vlaneseq
      %v601 = vshrl.u32 %v600, 7
      %v602 = vsub.s32 0, %v601
      %v603 = vrot.slane %v545, %v602
      %v605 = vadd.f32 %v597, %v603
      %v606 = vadd.f32 %v598, %v603
      %vm607 = vcmask 105472
      %v608 = vsel %vm607, %v605, -inf
      %609 = vmax.xlane.f32.xlu0 %v608
      %v610 = vpop.xlane.xlu0 %609
      %vm611 = vcmask 102400
      %v612 = vsel %vm611, %v606, -inf
      %613 = vmax.xlane.f32.xlu0 %v612
      %v614 = vpop.xlane.xlu0 %613
      %v615 = vsub.f32 %v605, %v610
      %v616 = vsub.f32 %v606, %v614
      %v617 = vmul.f32 %v615, 1.442695
      %v618 = vpow.pop %v617
      %v619 = vmul.f32 %v616, 1.442695
      %v620 = vpow.pop %v619
      %v621 = vsel %vm607, %v618, 0.0
      %622 = vadd.xlane.f32.xlu0 %v621
      %v623 = vpop.xlane.xlu0 %622
      %v624 = vsel %vm611, %v620, 0.0
      %625 = vadd.xlane.f32.xlu0 %v624
      %v626 = vpop.xlane.xlu0 %625
      %v627 = vrcp.pop %v623
      %v628 = vrcp.pop %v626
      %v629 = vmul.f32 %v618, %v627
      %v630 = vmul.f32 %v620, %v628
      %v631 = vpack.c.bf16 %v630, %v629
      %632 = vrot.lane.b32.xlu0 %v544, 64
      %v633 = vpop.permute.xlu0 %632
      %v635 = vsel %vm607, %v631, 0
      %vm637 = vcmask 1045504
      %vm638 = vcmask 1046528
      %v639 = vsel %vm637, 4294967295, 65535
      %v640 = vsel %vm638, %v639, 0
      %v642 = vand.u32 %v633, %v640
      %644 = vmatprep.subr.bf16.mxu0 0
      %645 = vmatpush1.bf16.msra.mxu0 %v642
      %646 = vmatprep.subr.bf16.mxu0 0
      %647 = vmatpush1.bf16.msra.mxu0 0
      %648 = vmatprep.subr.bf16.mxu0 0
      %649 = vmatpush1.bf16.msra.mxu0 0
      %650 = vmatprep.subr.bf16.mxu0 0
      %651 = vmatpush1.bf16.msra.mxu0 0
      %652 = vmatprep.subr.bf16.mxu0 0
      %653 = vmatpush1.bf16.msra.mxu0 0
      %654 = vmatprep.subr.bf16.mxu0 0
      %655 = vmatpush1.bf16.msra.mxu0 0
      %656 = vmatprep.subr.bf16.mxu0 0
      %657 = vmatpush1.bf16.msra.mxu0 0
      %658 = vmatprep.subr.bf16.mxu0 0
      %659 = vmatpush1.bf16.msra.mxu0 0
      %660 = vmatprep.subr.bf16.mxu0 0
      %661 = vmatpush1.bf16.msra.mxu0 0
      %662 = vmatprep.subr.bf16.mxu0 0
      %663 = vmatpush1.bf16.msra.mxu0 0
      %664 = vmatprep.subr.bf16.mxu0 0
      %665 = vmatpush1.bf16.msra.mxu0 0
      %666 = vmatprep.subr.bf16.mxu0 0
      %667 = vmatpush1.bf16.msra.mxu0 0
      %668 = vmatprep.subr.bf16.mxu0 0
      %669 = vmatpush1.bf16.msra.mxu0 0
      %670 = vmatprep.subr.bf16.mxu0 0
      %671 = vmatpush1.bf16.msra.mxu0 0
      %672 = vmatprep.subr.bf16.mxu0 0
      %673 = vmatpush1.bf16.msra.mxu0 0
      %674 = vmatprep.subr.bf16.mxu0 0
      %675 = vmatpush1.bf16.msra.mxu0 0
      %676 = vmatprep.mubr.bf16.mxu0 0
      %677 = vmatmul.mubr.bf16.gmra.mrb[0].mxu0 %v635
      %v678 = vpop.f32.mrb[0].mxu0
      %v679 = vadd.f32 0.0, %v678
      %v680 = vpop.f32.mrb[0].mxu0
      %v681 = vpop.f32.mrb[0].mxu0
      %v682 = vadd.f32 0.0, %v681
      %v683 = vpop.f32.mrb[0].mxu0
      %684 = vdwg.mxu0
      %v685 = vpack.c.bf16 %v682, %v679
      %v687 = vunpack.c.l.b16 %v685
      %v688 = vunpack.c.h.b16 %v685
      %v689 = vpack.c.b16 %v687, %v687
      %v690 = vpack.c.b16 %v688, %v688
      %vm693 = vcmask 60416
      %694 = vst.msk [vmem:[#allocation2] sm:$0xf] %vm693, %v689
      %vm695 = vcmask 59392
      %vm696 = vsmask.f32 2304
      %vm697 = vmand %vm695, %vm696
      %v698 = vld [vmem:[#allocation2 + $0x4] sm:$0x7]
      %v699 = vsel %vm697, %v690, %v698
      %700 = vst [vmem:[#allocation2 + $0x4] sm:$0x7] %v699
      %701 = vrot.lane.b32.xlu0 %v544, 120
      %v702 = vpop.permute.xlu0 %701
      %703 = vrot.lane.b32.xlu0 %v544, 88
      %v704 = vpop.permute.xlu0 %703
      %v706 = vsel %vm549, %v702, 0
      %v709 = vsel %vm549, %v704, 0
      %711 = vmatprep.subr.bf16.mxu0 0
      %712 = vmatpush1.bf16.xpose.msra.mxu0 %v709
      %713 = vmatprep.subr.bf16.mxu0 0
      %714 = vmatpush1.bf16.xpose.msra.mxu0 0
      %715 = vmatprep.subr.bf16.mxu0 0
      %716 = vmatpush1.bf16.xpose.msra.mxu0 0
      %717 = vmatprep.subr.bf16.mxu0 0
      %718 = vmatpush1.bf16.xpose.msra.mxu0 0
      %719 = vmatprep.subr.bf16.mxu0 0
      %720 = vmatpush1.bf16.xpose.msra.mxu0 0
      %721 = vmatprep.subr.bf16.mxu0 0
      %722 = vmatpush1.bf16.xpose.msra.mxu0 0
      %723 = vmatprep.subr.bf16.mxu0 0
      %724 = vmatpush1.bf16.xpose.msra.mxu0 0
      %725 = vmatprep.subr.bf16.mxu0 0
      %726 = vmatpush1.bf16.xpose.msra.mxu0 0
      %727 = vmatprep.subr.bf16.mxu0 0
      %728 = vmatpush1.bf16.xpose.msra.mxu0 0
      %729 = vmatprep.subr.bf16.mxu0 0
      %730 = vmatpush1.bf16.xpose.msra.mxu0 0
      %731 = vmatprep.subr.bf16.mxu0 0
      %732 = vmatpush1.bf16.xpose.msra.mxu0 0
      %733 = vmatprep.subr.bf16.mxu0 0
      %734 = vmatpush1.bf16.xpose.msra.mxu0 0
      %735 = vmatprep.subr.bf16.mxu0 0
      %736 = vmatpush1.bf16.xpose.msra.mxu0 0
      %737 = vmatprep.subr.bf16.mxu0 0
      %738 = vmatpush1.bf16.xpose.msra.mxu0 0
      %739 = vmatprep.subr.bf16.mxu0 0
      %740 = vmatpush1.bf16.xpose.msra.mxu0 0
      %741 = vmatprep.subr.bf16.mxu0 0
      %742 = vmatpush1.bf16.xpose.msra.mxu0 0
      %743 = vmatprep.mubr.bf16.mxu0 0
      %744 = vmatmul.mubr.bf16.gmra.mrb[0].mxu0 %v706
      %v745 = vpop.f32.mrb[0].mxu0
      %v746 = vadd.f32 0.0, %v745
      %v747 = vpop.f32.mrb[0].mxu0
      %v748 = vpop.f32.mrb[0].mxu0
      %v749 = vadd.f32 0.0, %v748
      %v750 = vpop.f32.mrb[0].mxu0
      %751 = vdwg.mxu0
      %v752 = vmul.f32 %v746, 0.35355338
      %v753 = vmul.f32 %v749, 0.35355338
      %v754 = vadd.f32 %v752, %v603
      %v755 = vadd.f32 %v753, %v603
      %v756 = vsel %vm607, %v754, -inf
      %757 = vmax.xlane.f32.xlu0 %v756
      %v758 = vpop.xlane.xlu0 %757
      %v759 = vsel %vm611, %v755, -inf
      %760 = vmax.xlane.f32.xlu0 %v759
      %v761 = vpop.xlane.xlu0 %760
      %v762 = vsub.f32 %v754, %v758
      %v763 = vsub.f32 %v755, %v761
      %v764 = vmul.f32 %v762, 1.442695
      %v765 = vpow.pop %v764
      %v766 = vmul.f32 %v763, 1.442695
      %v767 = vpow.pop %v766
      %v768 = vsel %vm607, %v765, 0.0
      %769 = vadd.xlane.f32.xlu0 %v768
      %v770 = vpop.xlane.xlu0 %769
      %v771 = vsel %vm611, %v767, 0.0
      %772 = vadd.xlane.f32.xlu0 %v771
      %v773 = vpop.xlane.xlu0 %772
      %v774 = vrcp.pop %v770
      %v775 = vrcp.pop %v773
      %v776 = vmul.f32 %v765, %v774
      %v777 = vmul.f32 %v767, %v775
      %v778 = vpack.c.bf16 %v777, %v776
      %779 = vrot.lane.b32.xlu0 %v544, 56
      %v780 = vpop.permute.xlu0 %779
      %v782 = vsel %vm607, %v778, 0
      %v785 = vand.u32 %v780, %v640
      %787 = vmatprep.subr.bf16.mxu0 0
      %788 = vmatpush1.bf16.msra.mxu0 %v785
      %789 = vmatprep.subr.bf16.mxu0 0
      %790 = vmatpush1.bf16.msra.mxu0 0
      %791 = vmatprep.subr.bf16.mxu0 0
      %792 = vmatpush1.bf16.msra.mxu0 0
      %793 = vmatprep.subr.bf16.mxu0 0
      %794 = vmatpush1.bf16.msra.mxu0 0
      %795 = vmatprep.subr.bf16.mxu0 0
      %796 = vmatpush1.bf16.msra.mxu0 0
      %797 = vmatprep.subr.bf16.mxu0 0
      %798 = vmatpush1.bf16.msra.mxu0 0
      %799 = vmatprep.subr.bf16.mxu0 0
      %800 = vmatpush1.bf16.msra.mxu0 0
      %801 = vmatprep.subr.bf16.mxu0 0
      %802 = vmatpush1.bf16.msra.mxu0 0
      %803 = vmatprep.subr.bf16.mxu0 0
      %804 = vmatpush1.bf16.msra.mxu0 0
      %805 = vmatprep.subr.bf16.mxu0 0
      %806 = vmatpush1.bf16.msra.mxu0 0
      %807 = vmatprep.subr.bf16.mxu0 0
      %808 = vmatpush1.bf16.msra.mxu0 0
      %809 = vmatprep.subr.bf16.mxu0 0
      %810 = vmatpush1.bf16.msra.mxu0 0
      %811 = vmatprep.subr.bf16.mxu0 0
      %812 = vmatpush1.bf16.msra.mxu0 0
      %813 = vmatprep.subr.bf16.mxu0 0
      %814 = vmatpush1.bf16.msra.mxu0 0
      %815 = vmatprep.subr.bf16.mxu0 0
      %816 = vmatpush1.bf16.msra.mxu0 0
      %817 = vmatprep.subr.bf16.mxu0 0
      %818 = vmatpush1.bf16.msra.mxu0 0
      %819 = vmatprep.mubr.bf16.mxu0 0
      %820 = vmatmul.mubr.bf16.gmra.mrb[0].mxu0 %v782
      %v821 = vpop.f32.mrb[0].mxu0
      %v822 = vadd.f32 0.0, %v821
      %v823 = vpop.f32.mrb[0].mxu0
      %v824 = vpop.f32.mrb[0].mxu0
      %v825 = vadd.f32 0.0, %v824
      %v826 = vpop.f32.mrb[0].mxu0
      %827 = vdwg.mxu0
      %v828 = vpack.c.bf16 %v825, %v822
      %v830 = vunpack.c.l.b16 %v828
      %v831 = vunpack.c.h.b16 %v828
      %v832 = vpack.c.b16 %v830, %v830
      %v833 = vpack.c.b16 %v831, %v831
      %834 = vrot.lane.b32.xlu0 %v832, 8
      %v835 = vpop.permute.xlu0 %834
      %836 = vrot.lane.b32.xlu0 %v833, 8
      %v837 = vpop.permute.xlu0 %836
      %vm840 = vcmask 126016
      %841 = vst.msk [vmem:[#allocation2] sm:$0xf] %vm840, %v835
      %vm842 = vcmask 124992
      %vm843 = vmand %vm842, %vm696
      %v844 = vld [vmem:[#allocation2 + $0x4] sm:$0x7]
      %v845 = vsel %vm843, %v837, %v844
      %846 = vst [vmem:[#allocation2 + $0x4] sm:$0x7] %v845
      %847 = vrot.lane.b32.xlu0 %v544, 112
      %v848 = vpop.permute.xlu0 %847
      %849 = vrot.lane.b32.xlu0 %v544, 80
      %v850 = vpop.permute.xlu0 %849
      %v852 = vsel %vm549, %v848, 0
      %v855 = vsel %vm549, %v850, 0
      %857 = vmatprep.subr.bf16.mxu0 0
      %858 = vmatpush1.bf16.xpose.msra.mxu0 %v855
      %859 = vmatprep.subr.bf16.mxu0 0
      %860 = vmatpush1.bf16.xpose.msra.mxu0 0
      %861 = vmatprep.subr.bf16.mxu0 0
      %862 = vmatpush1.bf16.xpose.msra.mxu0 0
      %863 = vmatprep.subr.bf16.mxu0 0
      %864 = vmatpush1.bf16.xpose.msra.mxu0 0
      %865 = vmatprep.subr.bf16.mxu0 0
      %866 = vmatpush1.bf16.xpose.msra.mxu0 0
      %867 = vmatprep.subr.bf16.mxu0 0
      %868 = vmatpush1.bf16.xpose.msra.mxu0 0
      %869 = vmatprep.subr.bf16.mxu0 0
      %870 = vmatpush1.bf16.xpose.msra.mxu0 0
      %871 = vmatprep.subr.bf16.mxu0 0
      %872 = vmatpush1.bf16.xpose.msra.mxu0 0
      %873 = vmatprep.subr.bf16.mxu0 0
      %874 = vmatpush1.bf16.xpose.msra.mxu0 0
      %875 = vmatprep.subr.bf16.mxu0 0
      %876 = vmatpush1.bf16.xpose.msra.mxu0 0
      %877 = vmatprep.subr.bf16.mxu0 0
      %878 = vmatpush1.bf16.xpose.msra.mxu0 0
      %879 = vmatprep.subr.bf16.mxu0 0
      %880 = vmatpush1.bf16.xpose.msra.mxu0 0
      %881 = vmatprep.subr.bf16.mxu0 0
      %882 = vmatpush1.bf16.xpose.msra.mxu0 0
      %883 = vmatprep.subr.bf16.mxu0 0
      %884 = vmatpush1.bf16.xpose.msra.mxu0 0
      %885 = vmatprep.subr.bf16.mxu0 0
      %886 = vmatpush1.bf16.xpose.msra.mxu0 0
      %887 = vmatprep.subr.bf16.mxu0 0
      %888 = vmatpush1.bf16.xpose.msra.mxu0 0
      %889 = vmatprep.mubr.bf16.mxu0 0
      %890 = vmatmul.mubr.bf16.gmra.mrb[0].mxu0 %v852
      %v891 = vpop.f32.mrb[0].mxu0
      %v892 = vadd.f32 0.0, %v891
      %v893 = vpop.f32.mrb[0].mxu0
      %v894 = vpop.f32.mrb[0].mxu0
      %v895 = vadd.f32 0.0, %v894
      %v896 = vpop.f32.mrb[0].mxu0
      %897 = vdwg.mxu0
      %v898 = vmul.f32 %v892, 0.35355338
      %v899 = vmul.f32 %v895, 0.35355338
      %v900 = vadd.f32 %v898, %v603
      %v901 = vadd.f32 %v899, %v603
      %v902 = vsel %vm607, %v900, -inf
      %903 = vmax.xlane.f32.xlu0 %v902
      %v904 = vpop.xlane.xlu0 %903
      %v905 = vsel %vm611, %v901, -inf
      %906 = vmax.xlane.f32.xlu0 %v905
      %v907 = vpop.xlane.xlu0 %906
      %v908 = vsub.f32 %v900, %v904
      %v909 = vsub.f32 %v901, %v907
      %v910 = vmul.f32 %v908, 1.442695
      %v911 = vpow.pop %v910
      %v912 = vmul.f32 %v909, 1.442695
      %v913 = vpow.pop %v912
      %v914 = vsel %vm607, %v911, 0.0
      %915 = vadd.xlane.f32.xlu0 %v914
      %v916 = vpop.xlane.xlu0 %915
      %v917 = vsel %vm611, %v913, 0.0
      %918 = vadd.xlane.f32.xlu0 %v917
      %v919 = vpop.xlane.xlu0 %918
      %v920 = vrcp.pop %v916
      %v921 = vrcp.pop %v919
      %v922 = vmul.f32 %v911, %v920
      %v923 = vmul.f32 %v913, %v921
      %v924 = vpack.c.bf16 %v923, %v922
      %925 = vrot.lane.b32.xlu0 %v544, 48
      %v926 = vpop.permute.xlu0 %925
      %v928 = vsel %vm607, %v924, 0
      %v931 = vand.u32 %v926, %v640
      %933 = vmatprep.subr.bf16.mxu0 0
      %934 = vmatpush1.bf16.msra.mxu0 %v931
      %935 = vmatprep.subr.bf16.mxu0 0
      %936 = vmatpush1.bf16.msra.mxu0 0
      %937 = vmatprep.subr.bf16.mxu0 0
      %938 = vmatpush1.bf16.msra.mxu0 0
      %939 = vmatprep.subr.bf16.mxu0 0
      %940 = vmatpush1.bf16.msra.mxu0 0
      %941 = vmatprep.subr.bf16.mxu0 0
      %942 = vmatpush1.bf16.msra.mxu0 0
      %943 = vmatprep.subr.bf16.mxu0 0
      %944 = vmatpush1.bf16.msra.mxu0 0
      %945 = vmatprep.subr.bf16.mxu0 0
      %946 = vmatpush1.bf16.msra.mxu0 0
      %947 = vmatprep.subr.bf16.mxu0 0
      %948 = vmatpush1.bf16.msra.mxu0 0
      %949 = vmatprep.subr.bf16.mxu0 0
      %950 = vmatpush1.bf16.msra.mxu0 0
      %951 = vmatprep.subr.bf16.mxu0 0
      %952 = vmatpush1.bf16.msra.mxu0 0
      %953 = vmatprep.subr.bf16.mxu0 0
      %954 = vmatpush1.bf16.msra.mxu0 0
      %955 = vmatprep.subr.bf16.mxu0 0
      %956 = vmatpush1.bf16.msra.mxu0 0
      %957 = vmatprep.subr.bf16.mxu0 0
      %958 = vmatpush1.bf16.msra.mxu0 0
      %959 = vmatprep.subr.bf16.mxu0 0
      %960 = vmatpush1.bf16.msra.mxu0 0
      %961 = vmatprep.subr.bf16.mxu0 0
      %962 = vmatpush1.bf16.msra.mxu0 0
      %963 = vmatprep.subr.bf16.mxu0 0
      %964 = vmatpush1.bf16.msra.mxu0 0
      %965 = vmatprep.mubr.bf16.mxu0 0
      %966 = vmatmul.mubr.bf16.gmra.mrb[0].mxu0 %v928
      %v967 = vpop.f32.mrb[0].mxu0
      %v968 = vadd.f32 0.0, %v967
      %v969 = vpop.f32.mrb[0].mxu0
      %v970 = vpop.f32.mrb[0].mxu0
      %v971 = vadd.f32 0.0, %v970
      %v972 = vpop.f32.mrb[0].mxu0
      %973 = vdwg.mxu0
      %v974 = vpack.c.bf16 %v971, %v968
      %v976 = vunpack.c.l.b16 %v974
      %v977 = vunpack.c.h.b16 %v974
      %v978 = vpack.c.b16 %v976, %v976
      %v979 = vpack.c.b16 %v977, %v977
      %980 = vrot.lane.b32.xlu0 %v978, 16
      %v981 = vpop.permute.xlu0 %980
      %982 = vrot.lane.b32.xlu0 %v979, 16
      %v983 = vpop.permute.xlu0 %982
      %vm986 = vcmask 191616
      %987 = vst.msk [vmem:[#allocation2] sm:$0xf] %vm986, %v981
      %vm988 = vcmask 190592
      %vm989 = vmand %vm988, %vm696
      %v990 = vld [vmem:[#allocation2 + $0x4] sm:$0x7]
      %v991 = vsel %vm989, %v983, %v990
      %992 = vst [vmem:[#allocation2 + $0x4] sm:$0x7] %v991
      %993 = vrot.lane.b32.xlu0 %v544, 104
      %v994 = vpop.permute.xlu0 %993
      %995 = vrot.lane.b32.xlu0 %v544, 72
      %v996 = vpop.permute.xlu0 %995
      %v998 = vsel %vm549, %v994, 0
      %v1001 = vsel %vm549, %v996, 0
      %1003 = vmatprep.subr.bf16.mxu0 0
      %1004 = vmatpush1.bf16.xpose.msra.mxu0 %v1001
      %1005 = vmatprep.subr.bf16.mxu0 0
      %1006 = vmatpush1.bf16.xpose.msra.mxu0 0
      %1007 = vmatprep.subr.bf16.mxu0 0
      %1008 = vmatpush1.bf16.xpose.msra.mxu0 0
      %1009 = vmatprep.subr.bf16.mxu0 0
      %1010 = vmatpush1.bf16.xpose.msra.mxu0 0
      %1011 = vmatprep.subr.bf16.mxu0 0
      %1012 = vmatpush1.bf16.xpose.msra.mxu0 0
      %1013 = vmatprep.subr.bf16.mxu0 0
      %1014 = vmatpush1.bf16.xpose.msra.mxu0 0
      %1015 = vmatprep.subr.bf16.mxu0 0
      %1016 = vmatpush1.bf16.xpose.msra.mxu0 0
      %1017 = vmatprep.subr.bf16.mxu0 0
      %1018 = vmatpush1.bf16.xpose.msra.mxu0 0
      %1019 = vmatprep.subr.bf16.mxu0 0
      %1020 = vmatpush1.bf16.xpose.msra.mxu0 0
      %1021 = vmatprep.subr.bf16.mxu0 0
      %1022 = vmatpush1.bf16.xpose.msra.mxu0 0
      %1023 = vmatprep.subr.bf16.mxu0 0
      %1024 = vmatpush1.bf16.xpose.msra.mxu0 0
      %1025 = vmatprep.subr.bf16.mxu0 0
      %1026 = vmatpush1.bf16.xpose.msra.mxu0 0
      %1027 = vmatprep.subr.bf16.mxu0 0
      %1028 = vmatpush1.bf16.xpose.msra.mxu0 0
      %1029 = vmatprep.subr.bf16.mxu0 0
      %1030 = vmatpush1.bf16.xpose.msra.mxu0 0
      %1031 = vmatprep.subr.bf16.mxu0 0
      %1032 = vmatpush1.bf16.xpose.msra.mxu0 0
      %1033 = vmatprep.subr.bf16.mxu0 0
      %1034 = vmatpush1.bf16.xpose.msra.mxu0 0
      %1035 = vmatprep.mubr.bf16.mxu0 0
      %1036 = vmatmul.mubr.bf16.gmra.mrb[0].mxu0 %v998
      %v1037 = vpop.f32.mrb[0].mxu0
      %v1038 = vadd.f32 0.0, %v1037
      %v1039 = vpop.f32.mrb[0].mxu0
      %v1040 = vpop.f32.mrb[0].mxu0
      %v1041 = vadd.f32 0.0, %v1040
      %v1042 = vpop.f32.mrb[0].mxu0
      %1043 = vdwg.mxu0
      %v1044 = vmul.f32 %v1038, 0.35355338
      %v1045 = vmul.f32 %v1041, 0.35355338
      %v1046 = vadd.f32 %v1044, %v603
      %v1047 = vadd.f32 %v1045, %v603
      %v1048 = vsel %vm607, %v1046, -inf
      %1049 = vmax.xlane.f32.xlu0 %v1048
      %v1050 = vpop.xlane.xlu0 %1049
      %v1051 = vsel %vm611, %v1047, -inf
      %1052 = vmax.xlane.f32.xlu0 %v1051
      %v1053 = vpop.xlane.xlu0 %1052
      %v1054 = vsub.f32 %v1046, %v1050
      %v1055 = vsub.f32 %v1047, %v1053
      %v1056 = vmul.f32 %v1054, 1.442695
      %v1057 = vpow.pop %v1056
      %v1058 = vmul.f32 %v1055, 1.442695
      %v1059 = vpow.pop %v1058
      %v1060 = vsel %vm607, %v1057, 0.0
      %1061 = vadd.xlane.f32.xlu0 %v1060
      %v1062 = vpop.xlane.xlu0 %1061
      %v1063 = vsel %vm611, %v1059, 0.0
      %1064 = vadd.xlane.f32.xlu0 %v1063
      %v1065 = vpop.xlane.xlu0 %1064
      %v1066 = vrcp.pop %v1062
      %v1067 = vrcp.pop %v1065
      %v1068 = vmul.f32 %v1057, %v1066
      %v1069 = vmul.f32 %v1059, %v1067
      %v1070 = vpack.c.bf16 %v1069, %v1068
      %1071 = vrot.lane.b32.xlu0 %v544, 40
      %v1072 = vpop.permute.xlu0 %1071
      %v1074 = vsel %vm607, %v1070, 0
      %v1077 = vand.u32 %v1072, %v640
      %1079 = vmatprep.subr.bf16.mxu0 0
      %1080 = vmatpush1.bf16.msra.mxu0 %v1077
      %1081 = vmatprep.subr.bf16.mxu0 0
      %1082 = vmatpush1.bf16.msra.mxu0 0
      %1083 = vmatprep.subr.bf16.mxu0 0
      %1084 = vmatpush1.bf16.msra.mxu0 0
      %1085 = vmatprep.subr.bf16.mxu0 0
      %1086 = vmatpush1.bf16.msra.mxu0 0
      %1087 = vmatprep.subr.bf16.mxu0 0
      %1088 = vmatpush1.bf16.msra.mxu0 0
      %1089 = vmatprep.subr.bf16.mxu0 0
      %1090 = vmatpush1.bf16.msra.mxu0 0
      %1091 = vmatprep.subr.bf16.mxu0 0
      %1092 = vmatpush1.bf16.msra.mxu0 0
      %1093 = vmatprep.subr.bf16.mxu0 0
      %1094 = vmatpush1.bf16.msra.mxu0 0
      %1095 = vmatprep.subr.bf16.mxu0 0
      %1096 = vmatpush1.bf16.msra.mxu0 0
      %1097 = vmatprep.subr.bf16.mxu0 0
      %1098 = vmatpush1.bf16.msra.mxu0 0
      %1099 = vmatprep.subr.bf16.mxu0 0
      %1100 = vmatpush1.bf16.msra.mxu0 0
      %1101 = vmatprep.subr.bf16.mxu0 0
      %1102 = vmatpush1.bf16.msra.mxu0 0
      %1103 = vmatprep.subr.bf16.mxu0 0
      %1104 = vmatpush1.bf16.msra.mxu0 0
      %1105 = vmatprep.subr.bf16.mxu0 0
      %1106 = vmatpush1.bf16.msra.mxu0 0
      %1107 = vmatprep.subr.bf16.mxu0 0
      %1108 = vmatpush1.bf16.msra.mxu0 0
      %1109 = vmatprep.subr.bf16.mxu0 0
      %1110 = vmatpush1.bf16.msra.mxu0 0
      %1111 = vmatprep.mubr.bf16.mxu0 0
      %1112 = vmatmul.mubr.bf16.gmra.mrb[0].mxu0 %v1074
      %v1113 = vpop.f32.mrb[0].mxu0
      %v1114 = vadd.f32 0.0, %v1113
      %v1115 = vpop.f32.mrb[0].mxu0
      %v1116 = vpop.f32.mrb[0].mxu0
      %v1117 = vadd.f32 0.0, %v1116
      %v1118 = vpop.f32.mrb[0].mxu0
      %1119 = vdwg.mxu0
      %v1120 = vpack.c.bf16 %v1117, %v1114
      %v1122 = vunpack.c.l.b16 %v1120
      %v1123 = vunpack.c.h.b16 %v1120
      %v1124 = vpack.c.b16 %v1122, %v1122
      %v1125 = vpack.c.b16 %v1123, %v1123
      %1126 = vrot.lane.b32.xlu0 %v1124, 24
      %v1127 = vpop.permute.xlu0 %1126
      %1128 = vrot.lane.b32.xlu0 %v1125, 24
      %v1129 = vpop.permute.xlu0 %1128
      %vm1132 = vcmask 257216
      %1133 = vst.msk [vmem:[#allocation2] sm:$0xf] %vm1132, %v1127
      %vm1134 = vcmask 256192
      %vm1135 = vmand %vm1134, %vm696
      %v1136 = vld [vmem:[#allocation2 + $0x4] sm:$0x7]
      %v1137 = vsel %vm1135, %v1129, %v1136
      %1138 = vst [vmem:[#allocation2 + $0x4] sm:$0x7] %v1137
      %v1139 = vld [vmem:[#allocation2] sm:$0xf]
      %v1140 = vld [vmem:[#allocation2 + $0x4] sm:$0x7]
      %v1141 = vld [vmem:[%s7] sm:$0xf]
      %v1142 = vld [vmem:[%s7 + $0x4] sm:$0xf]
      %v1143 = vld [vmem:[%s7 + $0x8] sm:$0xf]
      %v1144 = vld [vmem:[%s7 + $0xc] sm:$0xf]
      %v1145 = vld [vmem:[%s8] sm:$0x1]
      %v1147 = vlaneseq
      %v1148 = vshrl.u32 %v1147, 7
      %v1149 = vsub.s32 0, %v1148
      %v1150 = vrot.slane %v1145, %v1149
      %v1154 = vunpack.c.l.b16 %v1139
      %v1155 = vunpack.c.l.b16 %v1140
      %v1156 = vpack.c.b16 %v1155, %v1154
      %v1161 = vunpack.c.l.b16 %v1141
      %v1162 = vunpack.c.l.b16 %v1142
      %v1163 = vunpack.c.l.b16 %v1143
      %v1164 = vunpack.c.l.b16 %v1144
      %v1165 = vpack.c.b16 %v1162, %v1161
      %v1166 = vpack.c.b16 %v1164, %v1163
      %v1170 = vsel %vm429, %v1156, 0
      %1172 = vmatprep.subr.bf16.mxu0 0
      %1173 = vmatpush1.bf16.msra.mxu0 %v1165
      %1174 = vmatprep.subr.bf16.mxu0 0
      %1175 = vmatpush1.bf16.msra.mxu0 %v1166
      %1176 = vmatprep.subr.bf16.mxu0 0
      %1177 = vmatpush1.bf16.msra.mxu0 0
      %1178 = vmatprep.subr.bf16.mxu0 0
      %1179 = vmatpush1.bf16.msra.mxu0 0
      %1180 = vmatprep.subr.bf16.mxu0 0
      %1181 = vmatpush1.bf16.msra.mxu0 0
      %1182 = vmatprep.subr.bf16.mxu0 0
      %1183 = vmatpush1.bf16.msra.mxu0 0
      %1184 = vmatprep.subr.bf16.mxu0 0
      %1185 = vmatpush1.bf16.msra.mxu0 0
      %1186 = vmatprep.subr.bf16.mxu0 0
      %1187 = vmatpush1.bf16.msra.mxu0 0
      %1188 = vmatprep.subr.bf16.mxu0 0
      %1189 = vmatpush1.bf16.msra.mxu0 0
      %1190 = vmatprep.subr.bf16.mxu0 0
      %1191 = vmatpush1.bf16.msra.mxu0 0
      %1192 = vmatprep.subr.bf16.mxu0 0
      %1193 = vmatpush1.bf16.msra.mxu0 0
      %1194 = vmatprep.subr.bf16.mxu0 0
      %1195 = vmatpush1.bf16.msra.mxu0 0
      %1196 = vmatprep.subr.bf16.mxu0 0
      %1197 = vmatpush1.bf16.msra.mxu0 0
      %1198 = vmatprep.subr.bf16.mxu0 0
      %1199 = vmatpush1.bf16.msra.mxu0 0
      %1200 = vmatprep.subr.bf16.mxu0 0
      %1201 = vmatpush1.bf16.msra.mxu0 0
      %1202 = vmatprep.subr.bf16.mxu0 0
      %1203 = vmatpush1.bf16.msra.mxu0 0
      %1204 = vmatprep.mubr.bf16.mxu0 0
      %1205 = vmatmul.mubr.bf16.gmra.mrb[0].mxu0 %v1170
      %v1206 = vpop.f32.mrb[0].mxu0
      %v1207 = vadd.f32 %v1150, %v1206
      %v1208 = vpop.f32.mrb[0].mxu0
      %v1209 = vpop.f32.mrb[0].mxu0
      %v1210 = vadd.f32 %v1150, %v1209
      %v1211 = vpop.f32.mrb[0].mxu0
      %1212 = vdwg.mxu0
      %v1213 = vld [vmem:[%s9] sm:$0x1]
      %v1215 = vlaneseq
      %v1216 = vshrl.u32 %v1215, 7
      %v1217 = vsub.s32 0, %v1216
      %v1218 = vrot.slane %v1213, %v1217
      %v1220 = vmul.f32 %v1218, %v1207
      %v1221 = vmul.f32 %v1218, %v1210
      %v1222 = vadd.f32 %v426, %v1220
      %v1223 = vadd.f32 %v428, %v1221
      %v1224 = vpack.c.bf16 %v1222, %v1222
      %vm1225 = vcmask 257024
      %1226 = vst.msk [vmem:[%s419] sm:$0xf] %vm1225, %v1224
      %v1227 = vpack.c.bf16 %v1223, %v1223
      %vm1228 = vcmask 256000
      %vm1229 = vmand %vm1228, %vm696
      %v1230 = vld [vmem:[%s423] sm:$0x7]
      %v1231 = vsel %vm1229, %v1227, %v1230
      %1232 = vst [vmem:[%s423] sm:$0x7] %v1231
      %p1233 = scmp.lt.s32.totalorder %s23, 1
      %s1234 = scalar_select %p1233, %s23, 1
      %s1235 = smul.addr %s1234, 4
      %s1236 = scalar_lea.vmem %s10, %s1235
      %p1237 = scmp.lt.s32.totalorder %s23, 1
      %s1238 = scalar_select %p1237, %s23, 1
      %s1239 = smul.addr %s1238, 4
      %s1240 = scalar_lea.vmem %s11, %s1239
      // Predicated region
      $region61: #{vlmo_forward.13} parent=59 // pred_check
        %p1241 = pneg %p266
      $region62: #{vlmo_forward.13} parent=59 // pred_check_branch
        %1243 = sbr.rel (%p1241) target = $region64
      $region63: #{vlmo_forward.13} parent=59 // pred_region
        _
      $region64: #{vlmo_forward.13} parent=59 // pred_fallthru
        _
      // Predicated region
      $region65: #{vlmo_forward.13} parent=59 // pred_check
        %p1244 = pneg %p292
      $region66: #{vlmo_forward.13} parent=59 // pred_check_branch
        %1246 = sbr.rel (%p1244) target = $region68
      $region67: #{vlmo_forward.13} parent=59 // pred_region
        _
      $region68: #{vlmo_forward.13} parent=59 // pred_fallthru
        _
    $region60: #{vlmo_forward.13} parent=5 // pred_fallthru
      _
    %p1247 = scmp.le.s32.totalorder 2, %s18
    // Predicated region
    $region69: #{vlmo_forward.13} parent=5 // pred_check
      %p1248 = pneg %p1247
    $region70: #{vlmo_forward.13} parent=5 // pred_check_branch
      %1250 = sbr.rel (%p1248) target = $region72
    $region71: #{vlmo_forward.13} parent=5 // pred_region
      %s1251 = ssub.s32 %s18, 2
      // Predicated region
      $region73: #{vlmo_forward.13} parent=71 // pred_check
        %p1252 = pneg %p272
      $region74: #{vlmo_forward.13} parent=71 // pred_check_branch
        %1254 = sbr.rel (%p1252) target = $region76
      $region75: #{vlmo_forward.13} parent=71 // pred_region
        %p1255 = scmp.lt.s32.totalorder %s24, 1
        %s1256 = scalar_select %p1255, %s24, 1
        %s1257 = smul.addr %s1256, 4
        %s1258 = scalar_lea.vmem %s10, %s1257
      $region76: #{vlmo_forward.13} parent=71 // pred_fallthru
        _
      // Predicated region
      $region77: #{vlmo_forward.13} parent=71 // pred_check
        %p1259 = pneg %p298
      $region78: #{vlmo_forward.13} parent=71 // pred_check_branch
        %1261 = sbr.rel (%p1259) target = $region80
      $region79: #{vlmo_forward.13} parent=71 // pred_region
        %p1262 = scmp.lt.s32.totalorder %s24, 1
        %s1263 = scalar_select %p1262, %s24, 1
        %s1264 = smul.addr %s1263, 4
        %s1265 = scalar_lea.vmem %s11, %s1264
      $region80: #{vlmo_forward.13} parent=71 // pred_fallthru
        _
    $region72: #{vlmo_forward.13} parent=5 // pred_fallthru
      _
  $region6: #{vlmo_forward.13} parent=0 // loop_footer
    %s22 = sadd.s32 1, %s18
  $region7: #{vlmo_forward.13} parent=0 // loop_footer_branch
    %17 = sbr.rel target = $region3
  $region8: #{vlmo_forward.13} parent=0 // loop_exit
    _

// kernel: vlmo_forward.14
$region0: #{vlmo_forward.14}
  #allocation0 [shape = 'u32[]', space=smem, size = 0x4, offset = 0x4, fixed_abs, tag = 'smem constant byte address 0x4 - core index']
  #allocation1 [shape = 'u32[144,128]{1,0:T(1,128)}', space=vmem, size = 0x12000, scoped, tag = 'internal scratch']
  %s0 = inlined_call_operand.vmem [shape: bf16[16,32], index: 0, kind: input, shape index: {}]
  %s1 = inlined_call_operand.vmem [shape: f32[1,32], index: 1, kind: input, shape index: {}]
  %s2 = inlined_call_operand.vmem [shape: f32[1,32], index: 2, kind: input, shape index: {}]
  %s3 = inlined_call_operand.vmem [shape: bf16[32,128], index: 3, kind: input, shape index: {}]
  %s4 = inlined_call_operand.vmem [shape: f32[1,128], index: 4, kind: input, shape index: {}]
  %s5 = inlined_call_operand.vmem [shape: bf16[128,32], index: 5, kind: input, shape index: {}]
  %s6 = inlined_call_operand.vmem [shape: f32[1,32], index: 6, kind: input, shape index: {}]
  %s7 = inlined_call_operand.vmem [shape: f32[1,32], index: 7, kind: input, shape index: {}]
  %s8 = inlined_call_operand.vmem [shape: bf16[16,32], index: 8, kind: output, shape index: {}]
  %s9 = sld [smem:[#allocation0]]
  $region42: #{vlmo_forward.14} parent=0
    _
  %s11 = ssub.s32 1, %s9
  %s12 = scalar_select 0, %s11, %s9
  // Predicated region
  $region2: #{vlmo_forward.14} parent=0 // pred_check
    _
  $region3: #{vlmo_forward.14} parent=0 // pred_check_branch
    %14 = sbr.rel (0) target = $region5
  $region4: #{vlmo_forward.14} parent=0 // pred_region
    _
  $region5: #{vlmo_forward.14} parent=0 // pred_fallthru
    _
  // Predicated region
  $region6: #{vlmo_forward.14} parent=0 // pred_check
    _
  $region7: #{vlmo_forward.14} parent=0 // pred_check_branch
    %16 = sbr.rel (0) target = $region9
  $region8: #{vlmo_forward.14} parent=0 // pred_region
    _
  $region9: #{vlmo_forward.14} parent=0 // pred_fallthru
    _
  // Predicated region
  $region10: #{vlmo_forward.14} parent=0 // pred_check
    _
  $region11: #{vlmo_forward.14} parent=0 // pred_check_branch
    %18 = sbr.rel (0) target = $region13
  $region12: #{vlmo_forward.14} parent=0 // pred_region
    _
  $region13: #{vlmo_forward.14} parent=0 // pred_fallthru
    _
  // Predicated region
  $region14: #{vlmo_forward.14} parent=0 // pred_check
    _
  $region15: #{vlmo_forward.14} parent=0 // pred_check_branch
    %20 = sbr.rel (0) target = $region17
  $region16: #{vlmo_forward.14} parent=0 // pred_region
    _
  $region17: #{vlmo_forward.14} parent=0 // pred_fallthru
    _
  // Predicated region
  $region18: #{vlmo_forward.14} parent=0 // pred_check
    _
  $region19: #{vlmo_forward.14} parent=0 // pred_check_branch
    %22 = sbr.rel (0) target = $region21
  $region20: #{vlmo_forward.14} parent=0 // pred_region
    _
  $region21: #{vlmo_forward.14} parent=0 // pred_fallthru
    _
  // Predicated region
  $region22: #{vlmo_forward.14} parent=0 // pred_check
    _
  $region23: #{vlmo_forward.14} parent=0 // pred_check_branch
    %24 = sbr.rel (0) target = $region25
  $region24: #{vlmo_forward.14} parent=0 // pred_region
    _
  $region25: #{vlmo_forward.14} parent=0 // pred_fallthru
    _
  // Predicated region
  $region26: #{vlmo_forward.14} parent=0 // pred_check
    _
  $region27: #{vlmo_forward.14} parent=0 // pred_check_branch
    %26 = sbr.rel (0) target = $region29
  $region28: #{vlmo_forward.14} parent=0 // pred_region
    _
  $region29: #{vlmo_forward.14} parent=0 // pred_fallthru
    _
  // Predicated region
  $region30: #{vlmo_forward.14} parent=0 // pred_check
    _
  $region31: #{vlmo_forward.14} parent=0 // pred_check_branch
    %28 = sbr.rel (0) target = $region33
  $region32: #{vlmo_forward.14} parent=0 // pred_region
    _
  $region33: #{vlmo_forward.14} parent=0 // pred_fallthru
    _
  %v30 = vld [vmem:[%s0] sm:$0xf]
  %v31 = vld [vmem:[%s0 + $0x4] sm:$0xf]
  %v32 = vunpack.c.l.bf16 %v30
  %v33 = vunpack.c.l.bf16 %v31
  %vm34 = vcmask 261120
  %v35 = vsel %vm34, %v32, 0.0
  %36 = vadd.xlane.f32.xlu0 %v35
  %v37 = vpop.xlane.xlu0 %36
  %v38 = vsel %vm34, %v33, 0.0
  %39 = vadd.xlane.f32.xlu0 %v38
  %v40 = vpop.xlane.xlu0 %39
  %v41 = vrcp.pop 32.0
  %v42 = vmul.f32 %v37, %v41
  %v43 = vmul.f32 %v40, %v41
  %v44 = vsub.f32 %v32, %v42
  %v45 = vsub.f32 %v33, %v43
  %v46 = vmul.f32 %v44, %v44
  %v47 = vmul.f32 %v45, %v45
  %v48 = vsel %vm34, %v46, 0.0
  %49 = vadd.xlane.f32.xlu0 %v48
  %v50 = vpop.xlane.xlu0 %49
  %v51 = vsel %vm34, %v47, 0.0
  %52 = vadd.xlane.f32.xlu0 %v51
  %v53 = vpop.xlane.xlu0 %52
  %v54 = vmul.f32 %v50, %v41
  %v55 = vmul.f32 %v53, %v41
  %v56 = vadd.f32 %v54, 1e-12
  %v57 = vadd.f32 %v55, 1e-12
  %v58 = vrsqrt.pop %v56
  %v59 = vrsqrt.pop %v57
  %v60 = vmul.f32 %v44, %v58
  %v61 = vmul.f32 %v45, %v59
  %v62 = vld [vmem:[%s1] sm:$0x1]
  %v64 = vlaneseq
  %v65 = vshrl.u32 %v64, 7
  %v66 = vsub.s32 0, %v65
  %v67 = vrot.slane %v62, %v66
  %v69 = vmul.f32 %v60, %v67
  %v70 = vmul.f32 %v61, %v67
  %v71 = vld [vmem:[%s2] sm:$0x1]
  %v73 = vlaneseq
  %v74 = vshrl.u32 %v73, 7
  %v75 = vsub.s32 0, %v74
  %v76 = vrot.slane %v71, %v75
  %v78 = vadd.f32 %v69, %v76
  %v79 = vadd.f32 %v70, %v76
  %v80 = vpack.c.bf16 %v79, %v78
  %v81 = vld [vmem:[%s3] sm:$0xf]
  %v82 = vld [vmem:[%s3 + $0x4] sm:$0xf]
  %v83 = vld [vmem:[%s3 + $0x8] sm:$0xf]
  %v84 = vld [vmem:[%s3 + $0xc] sm:$0xf]
  %v85 = vld [vmem:[%s4] sm:$0x1]
  %v87 = vlaneseq
  %v88 = vshrl.u32 %v87, 7
  %v89 = vsub.s32 0, %v88
  %v90 = vrot.slane %v85, %v89
  %v96 = vunpack.c.l.b16 %v81
  %v97 = vunpack.c.l.b16 %v82
  %v98 = vunpack.c.l.b16 %v83
  %v99 = vunpack.c.l.b16 %v84
  %v100 = vpack.c.b16 %v97, %v96
  %v101 = vpack.c.b16 %v99, %v98
  %v105 = vsel %vm34, %v80, 0
  %107 = vmatprep.subr.bf16.mxu0 0
  %108 = vmatpush1.bf16.msra.mxu0 %v100
  %109 = vmatprep.subr.bf16.mxu0 0
  %110 = vmatpush1.bf16.msra.mxu0 %v101
  %111 = vmatprep.subr.bf16.mxu0 0
  %112 = vmatpush1.bf16.msra.mxu0 0
  %113 = vmatprep.subr.bf16.mxu0 0
  %114 = vmatpush1.bf16.msra.mxu0 0
  %115 = vmatprep.subr.bf16.mxu0 0
  %116 = vmatpush1.bf16.msra.mxu0 0
  %117 = vmatprep.subr.bf16.mxu0 0
  %118 = vmatpush1.bf16.msra.mxu0 0
  %119 = vmatprep.subr.bf16.mxu0 0
  %120 = vmatpush1.bf16.msra.mxu0 0
  %121 = vmatprep.subr.bf16.mxu0 0
  %122 = vmatpush1.bf16.msra.mxu0 0
  %123 = vmatprep.subr.bf16.mxu0 0
  %124 = vmatpush1.bf16.msra.mxu0 0
  %125 = vmatprep.subr.bf16.mxu0 0
  %126 = vmatpush1.bf16.msra.mxu0 0
  %127 = vmatprep.subr.bf16.mxu0 0
  %128 = vmatpush1.bf16.msra.mxu0 0
  %129 = vmatprep.subr.bf16.mxu0 0
  %130 = vmatpush1.bf16.msra.mxu0 0
  %131 = vmatprep.subr.bf16.mxu0 0
  %132 = vmatpush1.bf16.msra.mxu0 0
  %133 = vmatprep.subr.bf16.mxu0 0
  %134 = vmatpush1.bf16.msra.mxu0 0
  %135 = vmatprep.subr.bf16.mxu0 0
  %136 = vmatpush1.bf16.msra.mxu0 0
  %137 = vmatprep.subr.bf16.mxu0 0
  %138 = vmatpush1.bf16.msra.mxu0 0
  %139 = vmatprep.mubr.bf16.mxu0 0
  %140 = vmatmul.mubr.bf16.gmra.mrb[0].mxu0 %v105
  %v141 = vpop.f32.mrb[0].mxu0
  %v142 = vadd.f32 %v90, %v141
  %v143 = vpop.f32.mrb[0].mxu0
  %v144 = vpop.f32.mrb[0].mxu0
  %v145 = vadd.f32 %v90, %v144
  %v146 = vpop.f32.mrb[0].mxu0
  %147 = vdwg.mxu0
  %v148 = vmul.f32 %v142, %v142
  %v149 = vmul.f32 %v145, %v145
  %v150 = vmul.f32 %v142, %v148
  %v151 = vmul.f32 %v145, %v149
  %v152 = vmul.f32 %v150, 0.044715
  %v153 = vmul.f32 %v151, 0.044715
  %v154 = vadd.f32 %v142, %v152
  %v155 = vadd.f32 %v145, %v153
  %v156 = vmul.f32 %v154, 0.7978846
  %v157 = vmul.f32 %v155, 0.7978846
  %v158 = vtanh.pop %v156
  %v159 = vtanh.pop %v157
  %v160 = vadd.f32 %v158, 1.0
  %v161 = vadd.f32 %v159, 1.0
  %v162 = vmul.f32 %v160, 0.5
  %v163 = vmul.f32 %v161, 0.5
  %v164 = vmul.f32 %v142, %v162
  %v165 = vmul.f32 %v145, %v163
  %v166 = vpack.c.bf16 %v165, %v164
  %v167 = vld [vmem:[%s5] sm:$0xf]
  %v168 = vld [vmem:[%s5 + $0x4] sm:$0xf]
  %v169 = vld [vmem:[%s5 + $0x8] sm:$0xf]
  %v170 = vld [vmem:[%s5 + $0xc] sm:$0xf]
  %v171 = vld [vmem:[%s5 + $0x10] sm:$0xf]
  %v172 = vld [vmem:[%s5 + $0x14] sm:$0xf]
  %v173 = vld [vmem:[%s5 + $0x18] sm:$0xf]
  %v174 = vld [vmem:[%s5 + $0x1c] sm:$0xf]
  %v175 = vld [vmem:[%s5 + $0x20] sm:$0xf]
  %v176 = vld [vmem:[%s5 + $0x24] sm:$0xf]
  %v177 = vld [vmem:[%s5 + $0x28] sm:$0xf]
  %v178 = vld [vmem:[%s5 + $0x2c] sm:$0xf]
  %v179 = vld [vmem:[%s5 + $0x30] sm:$0xf]
  %v180 = vld [vmem:[%s5 + $0x34] sm:$0xf]
  %v181 = vld [vmem:[%s5 + $0x38] sm:$0xf]
  %v182 = vld [vmem:[%s5 + $0x3c] sm:$0xf]
  %v183 = vld [vmem:[%s6] sm:$0x1]
  %v185 = vlaneseq
  %v186 = vshrl.u32 %v185, 7
  %v187 = vsub.s32 0, %v186
  %v188 = vrot.slane %v183, %v187
  %v206 = vunpack.c.l.b16 %v167
  %v207 = vunpack.c.l.b16 %v168
  %v208 = vunpack.c.l.b16 %v169
  %v209 = vunpack.c.l.b16 %v170
  %v210 = vunpack.c.l.b16 %v171
  %v211 = vunpack.c.l.b16 %v172
  %v212 = vunpack.c.l.b16 %v173
  %v213 = vunpack.c.l.b16 %v174
  %v214 = vunpack.c.l.b16 %v175
  %v215 = vunpack.c.l.b16 %v176
  %v216 = vunpack.c.l.b16 %v177
  %v217 = vunpack.c.l.b16 %v178
  %v218 = vunpack.c.l.b16 %v179
  %v219 = vunpack.c.l.b16 %v180
  %v220 = vunpack.c.l.b16 %v181
  %v221 = vunpack.c.l.b16 %v182
  %v222 = vpack.c.b16 %v207, %v206
  %v223 = vpack.c.b16 %v209, %v208
  %v224 = vpack.c.b16 %v211, %v210
  %v225 = vpack.c.b16 %v213, %v212
  %v226 = vpack.c.b16 %v215, %v214
  %v227 = vpack.c.b16 %v217, %v216
  %v228 = vpack.c.b16 %v219, %v218
  %v229 = vpack.c.b16 %v221, %v220
  %238 = vmatprep.subr.bf16.mxu0 0
  %239 = vmatpush1.bf16.msra.mxu0 %v222
  %240 = vmatprep.subr.bf16.mxu0 0
  %241 = vmatpush1.bf16.msra.mxu0 %v223
  %242 = vmatprep.subr.bf16.mxu0 0
  %243 = vmatpush1.bf16.msra.mxu0 %v224
  %244 = vmatprep.subr.bf16.mxu0 0
  %245 = vmatpush1.bf16.msra.mxu0 %v225
  %246 = vmatprep.subr.bf16.mxu0 0
  %247 = vmatpush1.bf16.msra.mxu0 %v226
  %248 = vmatprep.subr.bf16.mxu0 0
  %249 = vmatpush1.bf16.msra.mxu0 %v227
  %250 = vmatprep.subr.bf16.mxu0 0
  %251 = vmatpush1.bf16.msra.mxu0 %v228
  %252 = vmatprep.subr.bf16.mxu0 0
  %253 = vmatpush1.bf16.msra.mxu0 %v229
  %254 = vmatprep.subr.bf16.mxu0 0
  %255 = vmatpush1.bf16.msra.mxu0 0
  %256 = vmatprep.subr.bf16.mxu0 0
  %257 = vmatpush1.bf16.msra.mxu0 0
  %258 = vmatprep.subr.bf16.mxu0 0
  %259 = vmatpush1.bf16.msra.mxu0 0
  %260 = vmatprep.subr.bf16.mxu0 0
  %261 = vmatpush1.bf16.msra.mxu0 0
  %262 = vmatprep.subr.bf16.mxu0 0
  %263 = vmatpush1.bf16.msra.mxu0 0
  %264 = vmatprep.subr.bf16.mxu0 0
  %265 = vmatpush1.bf16.msra.mxu0 0
  %266 = vmatprep.subr.bf16.mxu0 0
  %267 = vmatpush1.bf16.msra.mxu0 0
  %268 = vmatprep.subr.bf16.mxu0 0
  %269 = vmatpush1.bf16.msra.mxu0 0
  %270 = vmatprep.mubr.bf16.mxu0 0
  %271 = vmatmul.mubr.bf16.gmra.mrb[0].mxu0 %v166
  %v272 = vpop.f32.mrb[0].mxu0
  %v273 = vadd.f32 %v188, %v272
  %v274 = vpop.f32.mrb[0].mxu0
  %v275 = vpop.f32.mrb[0].mxu0
  %v276 = vadd.f32 %v188, %v275
  %v277 = vpop.f32.mrb[0].mxu0
  %278 = vdwg.mxu0
  %v279 = vld [vmem:[%s7] sm:$0x1]
  %v281 = vlaneseq
  %v282 = vshrl.u32 %v281, 7
  %v283 = vsub.s32 0, %v282
  %v284 = vrot.slane %v279, %v283
  %v286 = vmul.f32 %v284, %v273
  %v287 = vmul.f32 %v284, %v276
  %v288 = vadd.f32 %v32, %v286
  %v289 = vadd.f32 %v33, %v287
  %v290 = vpack.c.bf16 %v289, %v288
  %v292 = vunpack.c.l.b16 %v290
  %v293 = vunpack.c.h.b16 %v290
  %v294 = vpack.c.b16 %v292, %v292
  %v295 = vpack.c.b16 %v293, %v293
  %vm298 = vcmask 257024
  %299 = vst.msk [vmem:[%s8] sm:$0xf] %vm298, %v294
  %300 = vst.msk [vmem:[%s8 + $0x4] sm:$0xf] %vm298, %v295
  // Predicated region
  $region34: #{vlmo_forward.14} parent=0 // pred_check
    _
  $region35: #{vlmo_forward.14} parent=0 // pred_check_branch
    %302 = sbr.rel (0) target = $region37
  $region36: #{vlmo_forward.14} parent=0 // pred_region
    _
  $region37: #{vlmo_forward.14} parent=0 // pred_fallthru
    _
  // Predicated region
  $region38: #{vlmo_forward.14} parent=0 // pred_check
    _
  $region39: #{vlmo_forward.14} parent=0 // pred_check_branch
    %304 = sbr.rel (0) target = $region41
  $region40: #{vlmo_forward.14} parent=0 // pred_region
    _
  $region41: #{vlmo_forward.14} parent=0 // pred_fallthru
    _

// kernel: vlmo_forward.19
$region0: #{vlmo_forward.19}
  #allocation0 [shape = 'u32[]', space=smem, size = 0x4, offset = 0x4, fixed_abs, tag = 'smem constant byte address 0x4 - core index']
  #allocation1 [shape = 'u32[144,128]{1,0:T(1,128)}', space=vmem, size = 0x12000, scoped, tag = 'internal scratch']
  %s0 = inlined_call_operand.vmem [shape: bf16[16,32], index: 0, kind: input, shape index: {}]
  %s1 = inlined_call_operand.vmem [shape: f32[1,32], index: 1, kind: input, shape index: {}]
  %s2 = inlined_call_operand.vmem [shape: f32[1,32], index: 2, kind: input, shape index: {}]
  %s3 = inlined_call_operand.vmem [shape: f32[16,32], index: 3, kind: output, shape index: {}]
  %s4 = sld [smem:[#allocation0]]
  $region22: #{vlmo_forward.19} parent=0
    _
  %s6 = ssub.s32 1, %s4
  %s7 = scalar_select 0, %s6, %s4
  // Predicated region
  $region2: #{vlmo_forward.19} parent=0 // pred_check
    _
  $region3: #{vlmo_forward.19} parent=0 // pred_check_branch
    %9 = sbr.rel (0) target = $region5
  $region4: #{vlmo_forward.19} parent=0 // pred_region
    _
  $region5: #{vlmo_forward.19} parent=0 // pred_fallthru
    _
  // Predicated region
  $region6: #{vlmo_forward.19} parent=0 // pred_check
    _
  $region7: #{vlmo_forward.19} parent=0 // pred_check_branch
    %11 = sbr.rel (0) target = $region9
  $region8: #{vlmo_forward.19} parent=0 // pred_region
    _
  $region9: #{vlmo_forward.19} parent=0 // pred_fallthru
    _
  // Predicated region
  $region10: #{vlmo_forward.19} parent=0 // pred_check
    _
  $region11: #{vlmo_forward.19} parent=0 // pred_check_branch
    %13 = sbr.rel (0) target = $region13
  $region12: #{vlmo_forward.19} parent=0 // pred_region
    _
  $region13: #{vlmo_forward.19} parent=0 // pred_fallthru
    _
  %v14 = vld [vmem:[%s0] sm:$0xf]
  %v15 = vld [vmem:[%s0 + $0x4] sm:$0xf]
  %v16 = vunpack.c.l.bf16 %v14
  %v17 = vunpack.c.l.bf16 %v15
  %vm18 = vcmask 261120
  %v19 = vsel %vm18, %v16, 0.0
  %20 = vadd.xlane.f32.xlu0 %v19
  %v21 = vpop.xlane.xlu0 %20
  %v22 = vsel %vm18, %v17, 0.0
  %23 = vadd.xlane.f32.xlu0 %v22
  %v24 = vpop.xlane.xlu0 %23
  %v25 = vrcp.pop 32.0
  %v26 = vmul.f32 %v21, %v25
  %v27 = vmul.f32 %v24, %v25
  %v28 = vsub.f32 %v16, %v26
  %v29 = vsub.f32 %v17, %v27
  %v30 = vmul.f32 %v28, %v28
  %v31 = vmul.f32 %v29, %v29
  %v32 = vsel %vm18, %v30, 0.0
  %33 = vadd.xlane.f32.xlu0 %v32
  %v34 = vpop.xlane.xlu0 %33
  %v35 = vsel %vm18, %v31, 0.0
  %36 = vadd.xlane.f32.xlu0 %v35
  %v37 = vpop.xlane.xlu0 %36
  %v38 = vmul.f32 %v34, %v25
  %v39 = vmul.f32 %v37, %v25
  %v40 = vadd.f32 %v38, 1e-12
  %v41 = vadd.f32 %v39, 1e-12
  %v42 = vrsqrt.pop %v40
  %v43 = vrsqrt.pop %v41
  %v44 = vmul.f32 %v28, %v42
  %v45 = vmul.f32 %v29, %v43
  %v46 = vld [vmem:[%s1] sm:$0x1]
  %v48 = vlaneseq
  %v49 = vshrl.u32 %v48, 7
  %v50 = vsub.s32 0, %v49
  %v51 = vrot.slane %v46, %v50
  %v53 = vmul.f32 %v44, %v51
  %v54 = vmul.f32 %v45, %v51
  %v55 = vld [vmem:[%s2] sm:$0x1]
  %v57 = vlaneseq
  %v58 = vshrl.u32 %v57, 7
  %v59 = vsub.s32 0, %v58
  %v60 = vrot.slane %v55, %v59
  %v62 = vadd.f32 %v53, %v60
  %v63 = vadd.f32 %v54, %v60
  %64 = vst.msk [vmem:[%s3] sm:$0xff] %vm18, %v62
  %65 = vst.msk [vmem:[%s3 + $0x8] sm:$0xff] %vm18, %v63
  // Predicated region
  $region14: #{vlmo_forward.19} parent=0 // pred_check
    _
  $region15: #{vlmo_forward.19} parent=0 // pred_check_branch
    %67 = sbr.rel (0) target = $region17
  $region16: #{vlmo_forward.19} parent=0 // pred_region
    _
  $region17: #{vlmo_forward.19} parent=0 // pred_fallthru
    _
  // Predicated region
  $region18: #{vlmo_forward.19} parent=0 // pred_check
    _
  $region19: #{vlmo_forward.19} parent=0 // pred_check_branch
    %69 = sbr.rel (0) target = $region21
  $region20: #{vlmo_forward.19} parent=0 // pred_region
    _
  $region21: #{vlmo_forward.19} parent=0 // pred_fallthru
    _

// kernel: vlmo_forward.20
$region0: #{vlmo_forward.20}
  #allocation0 [shape = 'u32[]', space=smem, size = 0x4, offset = 0x4, fixed_abs, tag = 'smem constant byte address 0x4 - core index']
  #allocation1 [shape = 'u32[144,128]{1,0:T(1,128)}', space=vmem, size = 0x12000, scoped, tag = 'internal scratch']
  %s0 = inlined_call_operand.vmem [shape: bf16[10,32], index: 0, kind: input, shape index: {}]
  %s1 = inlined_call_operand.vmem [shape: f32[1,32], index: 1, kind: input, shape index: {}]
  %s2 = inlined_call_operand.vmem [shape: f32[1,32], index: 2, kind: input, shape index: {}]
  %s3 = inlined_call_operand.vmem [shape: f32[10,32], index: 3, kind: output, shape index: {}]
  %s4 = sld [smem:[#allocation0]]
  $region22: #{vlmo_forward.20} parent=0
    _
  %s6 = ssub.s32 1, %s4
  %s7 = scalar_select 0, %s6, %s4
  // Predicated region
  $region2: #{vlmo_forward.20} parent=0 // pred_check
    _
  $region3: #{vlmo_forward.20} parent=0 // pred_check_branch
    %9 = sbr.rel (0) target = $region5
  $region4: #{vlmo_forward.20} parent=0 // pred_region
    _
  $region5: #{vlmo_forward.20} parent=0 // pred_fallthru
    _
  // Predicated region
  $region6: #{vlmo_forward.20} parent=0 // pred_check
    _
  $region7: #{vlmo_forward.20} parent=0 // pred_check_branch
    %11 = sbr.rel (0) target = $region9
  $region8: #{vlmo_forward.20} parent=0 // pred_region
    _
  $region9: #{vlmo_forward.20} parent=0 // pred_fallthru
    _
  // Predicated region
  $region10: #{vlmo_forward.20} parent=0 // pred_check
    _
  $region11: #{vlmo_forward.20} parent=0 // pred_check_branch
    %13 = sbr.rel (0) target = $region13
  $region12: #{vlmo_forward.20} parent=0 // pred_region
    _
  $region13: #{vlmo_forward.20} parent=0 // pred_fallthru
    _
  %v14 = vld [vmem:[%s0] sm:$0xf]
  %v15 = vld [vmem:[%s0 + $0x4] sm:$0x1]
  %v16 = vunpack.c.l.bf16 %v14
  %v17 = vunpack.c.l.bf16 %v15
  %vm18 = vcmask 261120
  %v19 = vsel %vm18, %v16, 0.0
  %20 = vadd.xlane.f32.xlu0 %v19
  %v21 = vpop.xlane.xlu0 %20
  %vm22 = vcmask 254976
  %v23 = vsel %vm22, %v17, 0.0
  %24 = vadd.xlane.f32.xlu0 %v23
  %v25 = vpop.xlane.xlu0 %24
  %v26 = vrcp.pop 32.0
  %v27 = vmul.f32 %v21, %v26
  %v28 = vmul.f32 %v25, %v26
  %v29 = vsub.f32 %v16, %v27
  %v30 = vsub.f32 %v17, %v28
  %v31 = vmul.f32 %v29, %v29
  %v32 = vmul.f32 %v30, %v30
  %v33 = vsel %vm18, %v31, 0.0
  %34 = vadd.xlane.f32.xlu0 %v33
  %v35 = vpop.xlane.xlu0 %34
  %v36 = vsel %vm22, %v32, 0.0
  %37 = vadd.xlane.f32.xlu0 %v36
  %v38 = vpop.xlane.xlu0 %37
  %v39 = vmul.f32 %v35, %v26
  %v40 = vmul.f32 %v38, %v26
  %v41 = vadd.f32 %v39, 1e-12
  %v42 = vadd.f32 %v40, 1e-12
  %v43 = vrsqrt.pop %v41
  %v44 = vrsqrt.pop %v42
  %v45 = vmul.f32 %v29, %v43
  %v46 = vmul.f32 %v30, %v44
  %v47 = vld [vmem:[%s1] sm:$0x1]
  %v49 = vlaneseq
  %v50 = vshrl.u32 %v49, 7
  %v51 = vsub.s32 0, %v50
  %v52 = vrot.slane %v47, %v51
  %v54 = vmul.f32 %v45, %v52
  %v55 = vmul.f32 %v46, %v52
  %v56 = vld [vmem:[%s2] sm:$0x1]
  %v58 = vlaneseq
  %v59 = vshrl.u32 %v58, 7
  %v60 = vsub.s32 0, %v59
  %v61 = vrot.slane %v56, %v60
  %v63 = vadd.f32 %v54, %v61
  %v64 = vadd.f32 %v55, %v61
  %65 = vst.msk [vmem:[%s3] sm:$0xff] %vm18, %v63
  %66 = vst.msk [vmem:[%s3 + $0x8] sm:$0x3] %vm22, %v64
  // Predicated region
  $region14: #{vlmo_forward.20} parent=0 // pred_check
    _
  $region15: #{vlmo_forward.20} parent=0 // pred_check_branch
    %68 = sbr.rel (0) target = $region17
  $region16: #{vlmo_forward.20} parent=0 // pred_region
    _
  $region17: #{vlmo_forward.20} parent=0 // pred_fallthru
    _
  // Predicated region
  $region18: #{vlmo_forward.20} parent=0 // pred_check
    _
  $region19: #{vlmo_forward.20} parent=0 // pred_check_branch
    %70 = sbr.rel (0) target = $region21
  $region20: #{vlmo_forward.20} parent=0 // pred_region
    _
  $region21: #{vlmo_forward.20} parent=0 // pred_fallthru
    _

// kernel: vlmo_forward.21
$region0: #{vlmo_forward.21}
  #allocation0 [shape = 'u32[]', space=smem, size = 0x4, offset = 0x4, fixed_abs, tag = 'smem constant byte address 0x4 - core index']
  #allocation1 [shape = 'u32[144,128]{1,0:T(1,128)}', space=vmem, size = 0x12000, scoped, tag = 'internal scratch']
  %s0 = inlined_call_operand.vmem [shape: bf16[2,32], index: 0, kind: input, shape index: {}]
  %s1 = inlined_call_operand.vmem [shape: f32[1,32], index: 1, kind: input, shape index: {}]
  %s2 = inlined_call_operand.vmem [shape: f32[1,32], index: 2, kind: input, shape index: {}]
  %s3 = inlined_call_operand.vmem [shape: bf16[32,32], index: 3, kind: input, shape index: {}]
  %s4 = inlined_call_operand.vmem [shape: f32[1,32], index: 4, kind: input, shape index: {}]
  %s5 = inlined_call_operand.hbm [shape: f32[2,32], index: 5, kind: output, shape index: {}]
  %s6 = sld [smem:[#allocation0]]
  $region30: #{vlmo_forward.21} parent=0
    _
  %s8 = ssub.s32 1, %s6
  %s9 = scalar_select 0, %s8, %s6
  $region1: #{vlmo_forward.21} parent=0
    #allocation2 [shape = 'u8[1024]{0}', space=vmem, size = 0x400, scoped, tag = 'output window, operand 0, single buffered']
    #allocation3 [shape = 's32[1]{0}', space=sflag, size = 0x4, scoped, tag = 'scoped memory for vlmo_forward.21']
    %10 = vsyncpa [#allocation3], 0
    // Predicated region
    $region2: #{vlmo_forward.21} parent=1 // pred_check
      _
    $region3: #{vlmo_forward.21} parent=1 // pred_check_branch
      %12 = sbr.rel (0) target = $region5
    $region4: #{vlmo_forward.21} parent=1 // pred_region
      _
    $region5: #{vlmo_forward.21} parent=1 // pred_fallthru
      _
    // Predicated region
    $region6: #{vlmo_forward.21} parent=1 // pred_check
      _
    $region7: #{vlmo_forward.21} parent=1 // pred_check_branch
      %14 = sbr.rel (0) target = $region9
    $region8: #{vlmo_forward.21} parent=1 // pred_region
      _
    $region9: #{vlmo_forward.21} parent=1 // pred_fallthru
      _
    // Predicated region
    $region10: #{vlmo_forward.21} parent=1 // pred_check
      _
    $region11: #{vlmo_forward.21} parent=1 // pred_check_branch
      %16 = sbr.rel (0) target = $region13
    $region12: #{vlmo_forward.21} parent=1 // pred_region
      _
    $region13: #{vlmo_forward.21} parent=1 // pred_fallthru
      _
    // Predicated region
    $region14: #{vlmo_forward.21} parent=1 // pred_check
      _
    $region15: #{vlmo_forward.21} parent=1 // pred_check_branch
      %18 = sbr.rel (0) target = $region17
    $region16: #{vlmo_forward.21} parent=1 // pred_region
      _
    $region17: #{vlmo_forward.21} parent=1 // pred_fallthru
      _
    // Predicated region
    $region18: #{vlmo_forward.21} parent=1 // pred_check
      _
    $region19: #{vlmo_forward.21} parent=1 // pred_check_branch
      %20 = sbr.rel (0) target = $region21
    $region20: #{vlmo_forward.21} parent=1 // pred_region
      _
    $region21: #{vlmo_forward.21} parent=1 // pred_fallthru
      _
    %v22 = vld [vmem:[%s0] sm:$0x1]
    %v23 = vunpack.c.l.bf16 %v22
    %vm24 = vcmask 254976
    %v25 = vsel %vm24, %v23, 0.0
    %26 = vadd.xlane.f32.xlu0 %v25
    %v27 = vpop.xlane.xlu0 %26
    %v28 = vrcp.pop 32.0
    %v29 = vmul.f32 %v27, %v28
    %v30 = vsub.f32 %v23, %v29
    %v31 = vmul.f32 %v30, %v30
    %v32 = vsel %vm24, %v31, 0.0
    %33 = vadd.xlane.f32.xlu0 %v32
    %v34 = vpop.xlane.xlu0 %33
    %v35 = vmul.f32 %v34, %v28
    %v36 = vadd.f32 %v35, 1e-12
    %v37 = vrsqrt.pop %v36
    %v38 = vmul.f32 %v30, %v37
    %v39 = vld [vmem:[%s1] sm:$0x1]
    %v41 = vlaneseq
    %v42 = vshrl.u32 %v41, 7
    %v43 = vsub.s32 0, %v42
    %v44 = vrot.slane %v39, %v43
    %v46 = vmul.f32 %v38, %v44
    %v47 = vld [vmem:[%s2] sm:$0x1]
    %v49 = vlaneseq
    %v50 = vshrl.u32 %v49, 7
    %v51 = vsub.s32 0, %v50
    %v52 = vrot.slane %v47, %v51
    %v54 = vadd.f32 %v46, %v52
    %v55 = vpack.c.bf16 %v54, %v54
    %v56 = vld [vmem:[%s3] sm:$0xf]
    %v57 = vld [vmem:[%s3 + $0x4] sm:$0xf]
    %v58 = vld [vmem:[%s3 + $0x8] sm:$0xf]
    %v59 = vld [vmem:[%s3 + $0xc] sm:$0xf]
    %v60 = vld [vmem:[%s4] sm:$0x1]
    %v62 = vlaneseq
    %v63 = vshrl.u32 %v62, 7
    %v64 = vsub.s32 0, %v63
    %v65 = vrot.slane %v60, %v64
    %v71 = vunpack.c.l.b16 %v56
    %v72 = vunpack.c.l.b16 %v57
    %v73 = vunpack.c.l.b16 %v58
    %v74 = vunpack.c.l.b16 %v59
    %v75 = vpack.c.b16 %v72, %v71
    %v76 = vpack.c.b16 %v74, %v73
    %vm79 = vcmask 261120
    %v81 = vsel %vm79, %v55, 0
    %83 = vmatprep.subr.bf16.mxu0 0
    %84 = vmatpush1.bf16.msra.mxu0 %v75
    %85 = vmatprep.subr.bf16.mxu0 0
    %86 = vmatpush1.bf16.msra.mxu0 %v76
    %87 = vmatprep.subr.bf16.mxu0 0
    %88 = vmatpush1.bf16.msra.mxu0 0
    %89 = vmatprep.subr.bf16.mxu0 0
    %90 = vmatpush1.bf16.msra.mxu0 0
    %91 = vmatprep.subr.bf16.mxu0 0
    %92 = vmatpush1.bf16.msra.mxu0 0
    %93 = vmatprep.subr.bf16.mxu0 0
    %94 = vmatpush1.bf16.msra.mxu0 0
    %95 = vmatprep.subr.bf16.mxu0 0
    %96 = vmatpush1.bf16.msra.mxu0 0
    %97 = vmatprep.subr.bf16.mxu0 0
    %98 = vmatpush1.bf16.msra.mxu0 0
    %99 = vmatprep.subr.bf16.mxu0 0
    %100 = vmatpush1.bf16.msra.mxu0 0
    %101 = vmatprep.subr.bf16.mxu0 0
    %102 = vmatpush1.bf16.msra.mxu0 0
    %103 = vmatprep.subr.bf16.mxu0 0
    %104 = vmatpush1.bf16.msra.mxu0 0
    %105 = vmatprep.subr.bf16.mxu0 0
    %106 = vmatpush1.bf16.msra.mxu0 0
    %107 = vmatprep.subr.bf16.mxu0 0
    %108 = vmatpush1.bf16.msra.mxu0 0
    %109 = vmatprep.subr.bf16.mxu0 0
    %110 = vmatpush1.bf16.msra.mxu0 0
    %111 = vmatprep.subr.bf16.mxu0 0
    %112 = vmatpush1.bf16.msra.mxu0 0
    %113 = vmatprep.subr.bf16.mxu0 0
    %114 = vmatpush1.bf16.msra.mxu0 0
    %115 = vmatprep.mubr.bf16.mxu0 0
    %116 = vmatmul.mubr.bf16.gmra.mrb[0].mxu0 %v81
    %v117 = vpop.f32.mrb[0].mxu0
    %v118 = vadd.f32 %v65, %v117
    %v119 = vpop.f32.mrb[0].mxu0
    %v120 = vpop.f32.mrb[0].mxu0
    %v121 = vpop.f32.mrb[0].mxu0
    %122 = vdwg.mxu0
    %v123 = vtanh.pop %v118
    %124 = vst.msk [vmem:[#allocation2] sm:$0x3] %vm24, %v123
    // Predicated region
    $region22: #{vlmo_forward.21} parent=1 // pred_check
      _
    $region23: #{vlmo_forward.21} parent=1 // pred_check_branch
      %126 = sbr.rel (0) target = $region25
    $region24: #{vlmo_forward.21} parent=1 // pred_region
      %s128 = ssub.s32 32, 32
      %129 = vsyncadd [#allocation3], %s128
      %s131 = sshll.u32 [#allocation2], 4
      %s132 = int_to_ptr.vmem [resolvable:$true] %s131
      %134 = dma.vmem_to_hbm [thread:$0]  %s132, 32, %s5, [#allocation3]
    $region25: #{vlmo_forward.21} parent=1 // pred_fallthru
      _
    // Predicated region
    $region26: #{vlmo_forward.21} parent=1 // pred_check
      _
    $region27: #{vlmo_forward.21} parent=1 // pred_check_branch
      %136 = sbr.rel (0) target = $region29
    $region28: #{vlmo_forward.21} parent=1 // pred_region
      %137 = dma.done [#allocation3], 32
    $region29: #{vlmo_forward.21} parent=1 // pred_fallthru
      _
    %138 = vsyncpa [#allocation3], 1

</llo_original>
